<compile_context>
chip_gen: v6e
topology: v6e:2x2x1
jax: 0.10.0
libtpu: 0.0.40
codegen_flags: <defaults>
</compile_context>

<pallas_src>
import functools

import jax
import jax.numpy as jnp
from jax.experimental import pallas as pl
from jax.experimental.pallas import tpu as pltpu


def _round_up(x, m):
    return (x + m - 1) // m * m


def _head_kernel(x_ref, p_ref, o_ref, *, d_cat, d_pad):
    """Fused JK-MLP + post-MP MLP for one tile of nodes.

    p_ref layout (rows):
      [0 , d_cat)            W_jk1   [d_cat, d_pad]   (cols >= d_inner are zero)
      [d_cat, d_cat+d_pad)   W_jk2   [d_pad, d_pad]   (zero-padded)
      [.. , .. + d_pad)      W_pm1   [d_pad, d_pad]   (zero-padded)
      [.. , .. + d_pad)      W_pm2   [d_pad, d_pad]   (zero-padded, cols >= d_out zero)
      last 8 rows            biases  b_jk1/b_jk2/b_pm1/b_pm2 in rows 0..3 (lane-padded)
    """
    x = x_ref[...]                                   # [tile, d_cat], input dtype
    op_dtype = x.dtype

    r1 = d_cat
    r2 = r1 + d_pad
    r3 = r2 + d_pad
    rb = r3 + d_pad

    w1 = p_ref[0:d_cat, :]
    w2 = p_ref[r1:r2, :]
    w3 = p_ref[r2:r3, :]
    w4 = p_ref[r3:rb, :]
    b = p_ref[rb:rb + 8, :]                          # [8, d_pad]
    b1, b2, b3, b4 = b[0:1, :], b[1:2, :], b[2:3, :], b[3:4, :]

    f32 = jnp.float32

    # jk_mlp: Linear -> SiLU -> Linear   (MXU in input dtype, f32 accumulate,
    # activations/bias in f32; zero-padded lanes stay exactly zero).
    h = jnp.dot(x, w1, preferred_element_type=f32) + b1.astype(f32)
    h = h * jax.nn.sigmoid(h)                        # SiLU (EUP)
    h = jnp.dot(h.astype(op_dtype), w2, preferred_element_type=f32) + b2.astype(f32)

    # layer_post_mp: Linear -> ReLU -> Linear (has_act=False on final layer).
    h = jnp.dot(h.astype(op_dtype), w3, preferred_element_type=f32) + b3.astype(f32)
    h = jnp.maximum(h, 0.0)                          # ReLU
    h = jnp.dot(h.astype(op_dtype), w4, preferred_element_type=f32) + b4.astype(f32)

    o_ref[...] = h.astype(o_ref.dtype)               # lane-dense (tile, d_pad) store


def _pack_params(params, d_cat, d_pad):
    """Coalesce all weights/biases into one lane-padded [P, d_pad] slab."""
    w_jk1, b_jk1, w_jk2, b_jk2, w_pm1, b_pm1, w_pm2, b_pm2 = params

    def pad_to(a, rows, cols):
        return jnp.pad(a, ((0, rows - a.shape[0]), (0, cols - a.shape[1])))

    w1 = pad_to(w_jk1, d_cat, d_pad)
    w2 = pad_to(w_jk2, d_pad, d_pad)
    w3 = pad_to(w_pm1, d_pad, d_pad)
    w4 = pad_to(w_pm2, d_pad, d_pad)
    bias = jnp.concatenate(
        [pad_to(b, 1, d_pad) for b in (b_jk1, b_jk2, b_pm1, b_pm2)], axis=0)
    bias = pad_to(bias, 8, d_pad)                    # pad bias block to 8 sublanes
    return jnp.concatenate([w1, w2, w3, w4, bias], axis=0)


@functools.partial(jax.jit, static_argnames=("tile_n",))
def gnn_inductive_node_head(x_cat, y, params, *, tile_n=2048):
    """x_cat: [N, dim_inner * gt.layers] concatenated all_x. Returns (pred, label)."""
    N, d_cat = x_cat.shape
    d_in = params[0].shape[1]                        # dim_inner
    d_out = params[6].shape[1]
    d_pad = max(128, _round_up(max(d_in, d_out), 128))
    assert d_cat % 8 == 0, "concatenated feature dim must be a multiple of 8"
    assert d_in <= d_pad

    p_slab = _pack_params(params, d_cat, d_pad).astype(x_cat.dtype)
    p_rows = p_slab.shape[0]                         # d_cat + 3*d_pad + 8

    # Large node tiles; pad N up to a tile multiple (padded rows are zero and
    # sliced away — no masking needed inside the kernel).
    tile = min(tile_n, _round_up(N, 8))
    n_pad = _round_up(N, tile)
    x_p = x_cat if n_pad == N else jnp.pad(x_cat, ((0, n_pad - N), (0, 0)))

    kernel = functools.partial(_head_kernel, d_cat=d_cat, d_pad=d_pad)
    pred_pad = pl.pallas_call(
        kernel,
        out_shape=jax.ShapeDtypeStruct((n_pad, d_pad), x_cat.dtype),
        grid_spec=pl.GridSpec(
            grid=(n_pad // tile,),
            in_specs=[
                pl.BlockSpec((tile, d_cat), lambda i: (i, 0)),     # node tile
                pl.BlockSpec((p_rows, d_pad), lambda i: (0, 0)),   # param slab (resident)
            ],
            out_specs=pl.BlockSpec((tile, d_pad), lambda i: (i, 0)),
        ),
        compiler_params=pltpu.CompilerParams(
            dimension_semantics=("parallel",)),                    # megacore on v7x
    )(x_p, p_slab)

    pred = pred_pad[:N, :d_out]                      # drop node padding + lane padding
    label = y                                        # _apply_index: label unchanged
    return pred, label


def init_params(key, dim_inner, gt_layers, dim_out, dtype=jnp.float32):
    """Deterministic synthetic parameters; weights stored pre-transposed as [in, out]."""
    ks = jax.random.split(key, 8)
    d_cat = dim_inner * gt_layers

    def lin(kw, kb, d_i, d_o):
        scale = 1.0 / jnp.sqrt(jnp.asarray(d_i, dtype))
        w = jax.random.uniform(kw, (d_i, d_o), dtype, -scale, scale)
        b = jax.random.uniform(kb, (1, d_o), dtype, -scale, scale)
        return w, b

    w_jk1, b_jk1 = lin(ks[0], ks[1], d_cat, dim_inner)
    w_jk2, b_jk2 = lin(ks[2], ks[3], dim_inner, dim_inner)
    w_pm1, b_pm1 = lin(ks[4], ks[5], dim_inner, dim_inner)
    w_pm2, b_pm2 = lin(ks[6], ks[7], dim_inner, dim_out)
    return (w_jk1, b_jk1, w_jk2, b_jk2, w_pm1, b_pm1, w_pm2, b_pm2)


def _reference(x_cat, params):
    w_jk1, b_jk1, w_jk2, b_jk2, w_pm1, b_pm1, w_pm2, b_pm2 = params
    h = x_cat @ w_jk1 + b_jk1
    h = h * jax.nn.sigmoid(h)
    h = h @ w_jk2 + b_jk2
    h = h @ w_pm1 + b_pm1
    h = jnp.maximum(h, 0.0)
    h = h @ w_pm2 + b_pm2
    return h


if __name__ == "__main__":
    N = 2048             # number of nodes (2 grid steps at tile_n=1024 -> both TCs busy)
    DIM_INNER = 32       # cfg.gnn.dim_inner == dim_in
    GT_LAYERS = 2        # cfg.gt.layers
    DIM_OUT = 4

    key = jax.random.PRNGKey(0)
    k_x, k_y, k_p = jax.random.split(key, 3)

    # batch.all_x: GT_LAYERS feature blocks of [N, DIM_INNER]; concatenated in glue JAX.
    all_x = [jax.random.normal(jax.random.fold_in(k_x, i), (N, DIM_INNER), jnp.float32)
             for i in range(GT_LAYERS)]
    x_cat = jnp.concatenate(all_x, axis=-1)                      # [N, DIM_INNER*GT_LAYERS]
    y = jax.random.randint(k_y, (N,), 0, DIM_OUT, jnp.int32)     # batch.y (node labels)

    params = init_params(k_p, DIM_INNER, GT_LAYERS, DIM_OUT)

    pred, label = gnn_inductive_node_head(x_cat, y, params, tile_n=1024)
    jax.block_until_ready((pred, label))

    ref = _reference(x_cat, params)
    assert pred.shape == (N, DIM_OUT) and label.shape == (N,)
    assert jnp.allclose(pred, ref, atol=3e-4, rtol=3e-4), "mismatch vs JAX reference"
    print("KERNEL_OK")
</pallas_src>

<mosaic_0001>
module attributes {stable_mosaic.version = 11 : i64} {
  func.func @_head_kernel(%arg0: i32, %arg1: memref<1024x64xf32, #tpu.memory_space<vmem>>, %arg2: memref<456x128xf32, #tpu.memory_space<vmem>>, %arg3: memref<1024x128xf32, #tpu.memory_space<vmem>>) attributes {dimension_semantics = [#tpu.dimension_semantics<parallel>], iteration_bounds = array<i64: 2>, scalar_prefetch = 0 : i64, scratch_operands = 0 : i64, tpu.core_type = #tpu.core_type<tc>, window_params = [{transform_indices = @transform_0, window_bounds = array<i64: 1024, 64>}, {pipeline_mode = #tpu.pipeline_mode<synchronous>, transform_indices = @transform_1, window_bounds = array<i64: 456, 128>}, {transform_indices = @transform_2, window_bounds = array<i64: 1024, 128>}]} {
    %c0 = arith.constant 0 : index
    %c0_0 = arith.constant 0 : index
    %0 = vector.load %arg1[%c0, %c0_0] : memref<1024x64xf32, #tpu.memory_space<vmem>>, vector<1024x64xf32>
    %c0_1 = arith.constant 0 : index
    %c0_2 = arith.constant 0 : index
    %1 = vector.load %arg2[%c0_1, %c0_2] : memref<456x128xf32, #tpu.memory_space<vmem>>, vector<64x128xf32>
    %c64 = arith.constant 64 : index
    %c0_3 = arith.constant 0 : index
    %2 = vector.load %arg2[%c64, %c0_3] : memref<456x128xf32, #tpu.memory_space<vmem>>, vector<128x128xf32>
    %c192 = arith.constant 192 : index
    %c0_4 = arith.constant 0 : index
    %3 = vector.load %arg2[%c192, %c0_4] : memref<456x128xf32, #tpu.memory_space<vmem>>, vector<128x128xf32>
    %c320 = arith.constant 320 : index
    %c0_5 = arith.constant 0 : index
    %4 = vector.load %arg2[%c320, %c0_5] : memref<456x128xf32, #tpu.memory_space<vmem>>, vector<128x128xf32>
    %c448 = arith.constant 448 : index
    %c0_6 = arith.constant 0 : index
    %5 = vector.load %arg2[%c448, %c0_6] : memref<456x128xf32, #tpu.memory_space<vmem>>, vector<8x128xf32>
    %6 = vector.extract_strided_slice %5 {offsets = [0, 0], sizes = [1, 128], strides = [1, 1]} : vector<8x128xf32> to vector<1x128xf32>
    %7 = vector.extract_strided_slice %5 {offsets = [1, 0], sizes = [1, 128], strides = [1, 1]} : vector<8x128xf32> to vector<1x128xf32>
    %8 = vector.extract_strided_slice %5 {offsets = [2, 0], sizes = [1, 128], strides = [1, 1]} : vector<8x128xf32> to vector<1x128xf32>
    %9 = vector.extract_strided_slice %5 {offsets = [3, 0], sizes = [1, 128], strides = [1, 1]} : vector<8x128xf32> to vector<1x128xf32>
    %cst = arith.constant dense<0.000000e+00> : vector<1024x128xf32>
    %10 = tpu.matmul %0, %1, %cst {dimension_numbers = #tpu.dot_dimension_numbers<[1], [0], [0], [1], [0, 0, 1, 1], [], []>} : vector<1024x64xf32>, vector<64x128xf32>, vector<1024x128xf32> -> vector<1024x128xf32>
    %11 = vector.broadcast %6 : vector<1x128xf32> to vector<1024x128xf32>
    %12 = arith.addf %10, %11 : vector<1024x128xf32>
    %13 = arith.negf %12 : vector<1024x128xf32>
    %14 = math.exp %13 : vector<1024x128xf32>
    %cst_7 = arith.constant 1.000000e+00 : f32
    %15 = vector.broadcast %cst_7 : f32 to vector<1024x128xf32>
    %16 = arith.addf %15, %14 : vector<1024x128xf32>
    %17 = arith.divf %15, %16 : vector<1024x128xf32>
    %18 = arith.mulf %12, %17 : vector<1024x128xf32>
    %cst_8 = arith.constant dense<0.000000e+00> : vector<1024x128xf32>
    %19 = tpu.matmul %18, %2, %cst_8 {dimension_numbers = #tpu.dot_dimension_numbers<[1], [0], [0], [1], [0, 0, 1, 1], [], []>} : vector<1024x128xf32>, vector<128x128xf32>, vector<1024x128xf32> -> vector<1024x128xf32>
    %20 = vector.broadcast %7 : vector<1x128xf32> to vector<1024x128xf32>
    %21 = arith.addf %19, %20 : vector<1024x128xf32>
    %cst_9 = arith.constant dense<0.000000e+00> : vector<1024x128xf32>
    %22 = tpu.matmul %21, %3, %cst_9 {dimension_numbers = #tpu.dot_dimension_numbers<[1], [0], [0], [1], [0, 0, 1, 1], [], []>} : vector<1024x128xf32>, vector<128x128xf32>, vector<1024x128xf32> -> vector<1024x128xf32>
    %23 = vector.broadcast %8 : vector<1x128xf32> to vector<1024x128xf32>
    %24 = arith.addf %22, %23 : vector<1024x128xf32>
    %cst_10 = arith.constant 0.000000e+00 : f32
    %25 = vector.broadcast %cst_10 : f32 to vector<1024x128xf32>
    %26 = arith.maximumf %24, %25 : vector<1024x128xf32>
    %cst_11 = arith.constant dense<0.000000e+00> : vector<1024x128xf32>
    %27 = tpu.matmul %26, %4, %cst_11 {dimension_numbers = #tpu.dot_dimension_numbers<[1], [0], [0], [1], [0, 0, 1, 1], [], []>} : vector<1024x128xf32>, vector<128x128xf32>, vector<1024x128xf32> -> vector<1024x128xf32>
    %28 = vector.broadcast %9 : vector<1x128xf32> to vector<1024x128xf32>
    %29 = arith.addf %27, %28 : vector<1024x128xf32>
    %c0_12 = arith.constant 0 : index
    %c0_13 = arith.constant 0 : index
    %30 = vector.load %arg3[%c0_12, %c0_13] : memref<1024x128xf32, #tpu.memory_space<vmem>>, vector<1024x128xf32>
    tpu.vector_store %arg3[%c0_12, %c0_13], %29 {strides = array<i32>} : memref<1024x128xf32, #tpu.memory_space<vmem>>, vector<1024x128xf32>,
    return
  }
  func.func @transform_0(%arg0: i32) -> (i32, i32) {
    %c0_i32 = arith.constant 0 : i32
    %c0_i32_0 = arith.constant 0 : i32
    return %arg0, %c0_i32 : i32, i32
  }
  func.func @transform_1(%arg0: i32) -> (i32, i32) {
    %c0_i32 = arith.constant 0 : i32
    %c0_i32_0 = arith.constant 0 : i32
    %c0_i32_1 = arith.constant 0 : i32
    return %c0_i32, %c0_i32_0 : i32, i32
  }
  func.func @transform_2(%arg0: i32) -> (i32, i32) {
    %c0_i32 = arith.constant 0 : i32
    %c0_i32_0 = arith.constant 0 : i32
    return %arg0, %c0_i32 : i32, i32
  }
}

</mosaic_0001>

<llo_original>
// kernel: gnn_inductive_node_head.1
$region0: #{gnn_inductive_node_head.1}
  #allocation0 [shape = 'u32[]', space=smem, size = 0x4, offset = 0x4, fixed_abs, tag = 'smem constant byte address 0x4 - core index']
  #allocation1 [shape = 'u32[144,128]{1,0:T(1,128)}', space=vmem, size = 0x12000, scoped, tag = 'internal scratch']
  %s0 = inlined_call_operand.vmem [shape: f32[2048,64], index: 0, kind: input, shape index: {}]
  %s1 = inlined_call_operand.vmem [shape: f32[456,128], index: 1, kind: input, shape index: {}]
  %s2 = inlined_call_operand.vmem [shape: f32[2048,128], index: 2, kind: output, shape index: {}]
  %s3 = sld [smem:[#allocation0]]
  $region41: #{gnn_inductive_node_head.1} parent=0
    _
  %s5 = ssub.s32 1, %s3
  %s6 = scalar_select 0, %s5, %s3
  loop: start=0, step=1, limit=4
  $region2: #{gnn_inductive_node_head.1} parent=0 // loop_pre_header
    _
  $region3: #{gnn_inductive_node_head.1} parent=0 // loop_header
    %s8 = sphi 0, %s12
    %p9 = scmp.ge.s32.totalorder %s8, 4
    %s18 = sphi 0, %s20
    %s21 = sphi 0, %s18
    %s22 = sphi 0, %s21
    %s38 = sphi 0, %s22
    %s42 = sphi 0, %s42
    %s44 = sphi 0, %s42
    %s45 = sphi 0, %s44
    %s59 = sphi 0, %s45
    %s65 = sphi 0, %s67
    %s68 = sphi 0, %s65
    %s69 = sphi 0, %s68
    %s85 = sphi 0, %s69
  $region4: #{gnn_inductive_node_head.1} parent=0 // loop_header_branch
    %11 = sbr.rel (%p9) target = $region8
  $region5: #{gnn_inductive_node_head.1} parent=0 // loop_body
    %s13 = ssub.s32 %s8, 1
    %s14 = ssub.s32 %s8, 2
    %s15 = sadd.s32 %s8, 1
    %s16 = ssub.s32 %s8, %s15
    %p17 = scmp.eq.s32.totalorder %s16, 0
    %s19 = sadd.s32 %s18, 1
    %s20 = scalar_select %p17, %s18, %s19
    %p23 = pneg %p17
    %p24 = scmp.eq.s32.totalorder %s8, 1
    %p25 = por %p23, %p24
    %p26 = scmp.ne.s32.totalorder %s18, %s21
    %p27 = scmp.eq.s32.totalorder %s8, 0
    %p28 = por %p26, %p27
    %p29 = scmp.ne.s32.totalorder %s18, %s21
    %p30 = scmp.eq.s32.totalorder %s13, 1
    %p31 = por %p29, %p30
    %p32 = scmp.ne.s32.totalorder %s21, %s22
    %p33 = scmp.eq.s32.totalorder %s13, 0
    %p34 = por %p32, %p33
    %p35 = scmp.ne.s32.totalorder %s21, %s22
    %p36 = scmp.eq.s32.totalorder %s14, 1
    %p37 = por %p35, %p36
    %p39 = scmp.ne.s32.totalorder %s22, %s38
    %p40 = scmp.eq.s32.totalorder %s14, 0
    %p41 = por %p39, %p40
    %s43 = sadd.s32 %s42, 1
    %p46 = scmp.eq.s32.totalorder %s8, 1
    %p47 = scmp.ne.s32.totalorder %s42, %s44
    %p48 = scmp.eq.s32.totalorder %s8, 0
    %p49 = por %p47, %p48
    %p50 = scmp.ne.s32.totalorder %s42, %s44
    %p51 = scmp.eq.s32.totalorder %s13, 1
    %p52 = por %p50, %p51
    %p53 = scmp.ne.s32.totalorder %s44, %s45
    %p54 = scmp.eq.s32.totalorder %s13, 0
    %p55 = por %p53, %p54
    %p56 = scmp.ne.s32.totalorder %s44, %s45
    %p57 = scmp.eq.s32.totalorder %s14, 1
    %p58 = por %p56, %p57
    %p60 = scmp.ne.s32.totalorder %s45, %s59
    %p61 = scmp.eq.s32.totalorder %s14, 0
    %p62 = por %p60, %p61
    %s63 = ssub.s32 %s8, %s15
    %p64 = scmp.eq.s32.totalorder %s63, 0
    %s66 = sadd.s32 %s65, 1
    %s67 = scalar_select %p64, %s65, %s66
    %p70 = pneg %p64
    %p71 = scmp.eq.s32.totalorder %s8, 1
    %p72 = por %p70, %p71
    %p73 = scmp.ne.s32.totalorder %s65, %s68
    %p74 = scmp.eq.s32.totalorder %s8, 0
    %p75 = por %p73, %p74
    %p76 = scmp.ne.s32.totalorder %s65, %s68
    %p77 = scmp.eq.s32.totalorder %s13, 1
    %p78 = por %p76, %p77
    %p79 = scmp.ne.s32.totalorder %s68, %s69
    %p80 = scmp.eq.s32.totalorder %s13, 0
    %p81 = por %p79, %p80
    %p82 = scmp.ne.s32.totalorder %s68, %s69
    %p83 = scmp.eq.s32.totalorder %s14, 1
    %p84 = por %p82, %p83
    %p86 = scmp.ne.s32.totalorder %s69, %s85
    %p87 = scmp.eq.s32.totalorder %s14, 0
    %p88 = por %p86, %p87
    %p89 = scmp.le.s32.totalorder 1, %s8
    %p90 = scmp.lt.s32.totalorder %s8, 3
    %p91 = pnand %p89, %p90
    %p92 = pneg %p91
    // Predicated region
    $region9: #{gnn_inductive_node_head.1} parent=5 // pred_check
      _
    $region10: #{gnn_inductive_node_head.1} parent=5 // pred_check_branch
      %94 = sbr.rel (%p91) target = $region12
    $region11: #{gnn_inductive_node_head.1} parent=5 // pred_region
      %s95 = ssub.s32 %s8, 1
      // Predicated region
      $region13: #{gnn_inductive_node_head.1} parent=11 // pred_check
        %p96 = pneg %p55
      $region14: #{gnn_inductive_node_head.1} parent=11 // pred_check_branch
        %98 = sbr.rel (%p96) target = $region16
      $region15: #{gnn_inductive_node_head.1} parent=11 // pred_region
        _
      $region16: #{gnn_inductive_node_head.1} parent=11 // pred_fallthru
        _
    $region12: #{gnn_inductive_node_head.1} parent=5 // pred_fallthru
      _
    %p99 = scmp.lt.s32.totalorder %s8, 2
    // Predicated region
    $region17: #{gnn_inductive_node_head.1} parent=5 // pred_check
      %p100 = pneg %p99
    $region18: #{gnn_inductive_node_head.1} parent=5 // pred_check_branch
      %102 = sbr.rel (%p100) target = $region20
    $region19: #{gnn_inductive_node_head.1} parent=5 // pred_region
      // Predicated region
      $region21: #{gnn_inductive_node_head.1} parent=19 // pred_check
        %p103 = pneg %p28
      $region22: #{gnn_inductive_node_head.1} parent=19 // pred_check_branch
        %105 = sbr.rel (%p103) target = $region24
      $region23: #{gnn_inductive_node_head.1} parent=19 // pred_region
        %s106 = smul.u32 128, %s8
        %p107 = scmp.lt.s32.totalorder %s106, 255
        %s108 = scalar_select %p107, %s106, 255
        %s109 = smul.addr %s108, 8
        %s110 = scalar_lea.vmem %s0, %s109
        %s111 = smul.u32 128, %s8
      $region24: #{gnn_inductive_node_head.1} parent=19 // pred_fallthru
        _
    $region20: #{gnn_inductive_node_head.1} parent=5 // pred_fallthru
      _
    %p112 = scmp.le.s32.totalorder 1, %s8
    %p113 = scmp.lt.s32.totalorder %s8, 3
    %p114 = pnand %p112, %p113
    %p115 = pneg %p114
    // Predicated region
    $region25: #{gnn_inductive_node_head.1} parent=5 // pred_check
      _
    $region26: #{gnn_inductive_node_head.1} parent=5 // pred_check_branch
      %117 = sbr.rel (%p114) target = $region28
    $region27: #{gnn_inductive_node_head.1} parent=5 // pred_region
      %s118 = ssub.s32 %s8, 1
      %s119 = smul.u32 128, %s13
      %p120 = scmp.lt.s32.totalorder %s119, 255
      %s121 = scalar_select %p120, %s119, 255
      %s122 = smul.addr %s121, 8
      %s123 = scalar_lea.vmem %s0, %s122
      %p124 = pneg %p34
      %p125 = pneg %p31
      %p126 = pneg %p55
      %p127 = pneg %p52
      %p128 = pneg %p81
      %p129 = pneg %p78
      %s130 = smul.u32 128, %s13
      %p131 = scmp.lt.s32.totalorder %s130, 255
      %s132 = scalar_select %p131, %s130, 255
      %s133 = smul.addr %s132, 8
      %s134 = scalar_lea.vmem %s2, %s133
      %s135 = smul.u32 128, %s13
      %p136 = scmp.lt.s32.totalorder %s135, 255
      %s137 = scalar_select %p136, %s135, 255
      %s138 = smul.addr %s137, 8
      %s139 = scalar_lea.vmem %s0, %s138
      %s140 = smul.u32 128, %s13
      %s141 = smul.u32 128, %s13
      %p142 = scmp.lt.s32.totalorder %s141, 255
      %s143 = scalar_select %p142, %s141, 255
      %s144 = smul.addr %s143, 8
      %s145 = scalar_lea.vmem %s2, %s144
      %s146 = smul.u32 128, %s13
      %v147 = vld [vmem:[%s139] sm:$0xff]
      %v148 = vld [vmem:[%s139 + $0x8] sm:$0xff]
      %v149 = vld [vmem:[%s139 + $0x10] sm:$0xff]
      %v150 = vld [vmem:[%s139 + $0x18] sm:$0xff]
      %v151 = vld [vmem:[%s139 + $0x20] sm:$0xff]
      %v152 = vld [vmem:[%s139 + $0x28] sm:$0xff]
      %v153 = vld [vmem:[%s139 + $0x30] sm:$0xff]
      %v154 = vld [vmem:[%s139 + $0x38] sm:$0xff]
      %v155 = vld [vmem:[%s139 + $0x40] sm:$0xff]
      %v156 = vld [vmem:[%s139 + $0x48] sm:$0xff]
      %v157 = vld [vmem:[%s139 + $0x50] sm:$0xff]
      %v158 = vld [vmem:[%s139 + $0x58] sm:$0xff]
      %v159 = vld [vmem:[%s139 + $0x60] sm:$0xff]
      %v160 = vld [vmem:[%s139 + $0x68] sm:$0xff]
      %v161 = vld [vmem:[%s139 + $0x70] sm:$0xff]
      %v162 = vld [vmem:[%s139 + $0x78] sm:$0xff]
      %v163 = vld [vmem:[%s139 + $0x80] sm:$0xff]
      %v164 = vld [vmem:[%s139 + $0x88] sm:$0xff]
      %v165 = vld [vmem:[%s139 + $0x90] sm:$0xff]
      %v166 = vld [vmem:[%s139 + $0x98] sm:$0xff]
      %v167 = vld [vmem:[%s139 + $0xa0] sm:$0xff]
      %v168 = vld [vmem:[%s139 + $0xa8] sm:$0xff]
      %v169 = vld [vmem:[%s139 + $0xb0] sm:$0xff]
      %v170 = vld [vmem:[%s139 + $0xb8] sm:$0xff]
      %v171 = vld [vmem:[%s139 + $0xc0] sm:$0xff]
      %v172 = vld [vmem:[%s139 + $0xc8] sm:$0xff]
      %v173 = vld [vmem:[%s139 + $0xd0] sm:$0xff]
      %v174 = vld [vmem:[%s139 + $0xd8] sm:$0xff]
      %v175 = vld [vmem:[%s139 + $0xe0] sm:$0xff]
      %v176 = vld [vmem:[%s139 + $0xe8] sm:$0xff]
      %v177 = vld [vmem:[%s139 + $0xf0] sm:$0xff]
      %v178 = vld [vmem:[%s139 + $0xf8] sm:$0xff]
      %v179 = vld [vmem:[%s139 + $0x100] sm:$0xff]
      %v180 = vld [vmem:[%s139 + $0x108] sm:$0xff]
      %v181 = vld [vmem:[%s139 + $0x110] sm:$0xff]
      %v182 = vld [vmem:[%s139 + $0x118] sm:$0xff]
      %v183 = vld [vmem:[%s139 + $0x120] sm:$0xff]
      %v184 = vld [vmem:[%s139 + $0x128] sm:$0xff]
      %v185 = vld [vmem:[%s139 + $0x130] sm:$0xff]
      %v186 = vld [vmem:[%s139 + $0x138] sm:$0xff]
      %v187 = vld [vmem:[%s139 + $0x140] sm:$0xff]
      %v188 = vld [vmem:[%s139 + $0x148] sm:$0xff]
      %v189 = vld [vmem:[%s139 + $0x150] sm:$0xff]
      %v190 = vld [vmem:[%s139 + $0x158] sm:$0xff]
      %v191 = vld [vmem:[%s139 + $0x160] sm:$0xff]
      %v192 = vld [vmem:[%s139 + $0x168] sm:$0xff]
      %v193 = vld [vmem:[%s139 + $0x170] sm:$0xff]
      %v194 = vld [vmem:[%s139 + $0x178] sm:$0xff]
      %v195 = vld [vmem:[%s139 + $0x180] sm:$0xff]
      %v196 = vld [vmem:[%s139 + $0x188] sm:$0xff]
      %v197 = vld [vmem:[%s139 + $0x190] sm:$0xff]
      %v198 = vld [vmem:[%s139 + $0x198] sm:$0xff]
      %v199 = vld [vmem:[%s139 + $0x1a0] sm:$0xff]
      %v200 = vld [vmem:[%s139 + $0x1a8] sm:$0xff]
      %v201 = vld [vmem:[%s139 + $0x1b0] sm:$0xff]
      %v202 = vld [vmem:[%s139 + $0x1b8] sm:$0xff]
      %v203 = vld [vmem:[%s139 + $0x1c0] sm:$0xff]
      %v204 = vld [vmem:[%s139 + $0x1c8] sm:$0xff]
      %v205 = vld [vmem:[%s139 + $0x1d0] sm:$0xff]
      %v206 = vld [vmem:[%s139 + $0x1d8] sm:$0xff]
      %v207 = vld [vmem:[%s139 + $0x1e0] sm:$0xff]
      %v208 = vld [vmem:[%s139 + $0x1e8] sm:$0xff]
      %v209 = vld [vmem:[%s139 + $0x1f0] sm:$0xff]
      %v210 = vld [vmem:[%s139 + $0x1f8] sm:$0xff]
      %v211 = vld [vmem:[%s139 + $0x200] sm:$0xff]
      %v212 = vld [vmem:[%s139 + $0x208] sm:$0xff]
      %v213 = vld [vmem:[%s139 + $0x210] sm:$0xff]
      %v214 = vld [vmem:[%s139 + $0x218] sm:$0xff]
      %v215 = vld [vmem:[%s139 + $0x220] sm:$0xff]
      %v216 = vld [vmem:[%s139 + $0x228] sm:$0xff]
      %v217 = vld [vmem:[%s139 + $0x230] sm:$0xff]
      %v218 = vld [vmem:[%s139 + $0x238] sm:$0xff]
      %v219 = vld [vmem:[%s139 + $0x240] sm:$0xff]
      %v220 = vld [vmem:[%s139 + $0x248] sm:$0xff]
      %v221 = vld [vmem:[%s139 + $0x250] sm:$0xff]
      %v222 = vld [vmem:[%s139 + $0x258] sm:$0xff]
      %v223 = vld [vmem:[%s139 + $0x260] sm:$0xff]
      %v224 = vld [vmem:[%s139 + $0x268] sm:$0xff]
      %v225 = vld [vmem:[%s139 + $0x270] sm:$0xff]
      %v226 = vld [vmem:[%s139 + $0x278] sm:$0xff]
      %v227 = vld [vmem:[%s139 + $0x280] sm:$0xff]
      %v228 = vld [vmem:[%s139 + $0x288] sm:$0xff]
      %v229 = vld [vmem:[%s139 + $0x290] sm:$0xff]
      %v230 = vld [vmem:[%s139 + $0x298] sm:$0xff]
      %v231 = vld [vmem:[%s139 + $0x2a0] sm:$0xff]
      %v232 = vld [vmem:[%s139 + $0x2a8] sm:$0xff]
      %v233 = vld [vmem:[%s139 + $0x2b0] sm:$0xff]
      %v234 = vld [vmem:[%s139 + $0x2b8] sm:$0xff]
      %v235 = vld [vmem:[%s139 + $0x2c0] sm:$0xff]
      %v236 = vld [vmem:[%s139 + $0x2c8] sm:$0xff]
      %v237 = vld [vmem:[%s139 + $0x2d0] sm:$0xff]
      %v238 = vld [vmem:[%s139 + $0x2d8] sm:$0xff]
      %v239 = vld [vmem:[%s139 + $0x2e0] sm:$0xff]
      %v240 = vld [vmem:[%s139 + $0x2e8] sm:$0xff]
      %v241 = vld [vmem:[%s139 + $0x2f0] sm:$0xff]
      %v242 = vld [vmem:[%s139 + $0x2f8] sm:$0xff]
      %v243 = vld [vmem:[%s139 + $0x300] sm:$0xff]
      %v244 = vld [vmem:[%s139 + $0x308] sm:$0xff]
      %v245 = vld [vmem:[%s139 + $0x310] sm:$0xff]
      %v246 = vld [vmem:[%s139 + $0x318] sm:$0xff]
      %v247 = vld [vmem:[%s139 + $0x320] sm:$0xff]
      %v248 = vld [vmem:[%s139 + $0x328] sm:$0xff]
      %v249 = vld [vmem:[%s139 + $0x330] sm:$0xff]
      %v250 = vld [vmem:[%s139 + $0x338] sm:$0xff]
      %v251 = vld [vmem:[%s139 + $0x340] sm:$0xff]
      %v252 = vld [vmem:[%s139 + $0x348] sm:$0xff]
      %v253 = vld [vmem:[%s139 + $0x350] sm:$0xff]
      %v254 = vld [vmem:[%s139 + $0x358] sm:$0xff]
      %v255 = vld [vmem:[%s139 + $0x360] sm:$0xff]
      %v256 = vld [vmem:[%s139 + $0x368] sm:$0xff]
      %v257 = vld [vmem:[%s139 + $0x370] sm:$0xff]
      %v258 = vld [vmem:[%s139 + $0x378] sm:$0xff]
      %v259 = vld [vmem:[%s139 + $0x380] sm:$0xff]
      %v260 = vld [vmem:[%s139 + $0x388] sm:$0xff]
      %v261 = vld [vmem:[%s139 + $0x390] sm:$0xff]
      %v262 = vld [vmem:[%s139 + $0x398] sm:$0xff]
      %v263 = vld [vmem:[%s139 + $0x3a0] sm:$0xff]
      %v264 = vld [vmem:[%s139 + $0x3a8] sm:$0xff]
      %v265 = vld [vmem:[%s139 + $0x3b0] sm:$0xff]
      %v266 = vld [vmem:[%s139 + $0x3b8] sm:$0xff]
      %v267 = vld [vmem:[%s139 + $0x3c0] sm:$0xff]
      %v268 = vld [vmem:[%s139 + $0x3c8] sm:$0xff]
      %v269 = vld [vmem:[%s139 + $0x3d0] sm:$0xff]
      %v270 = vld [vmem:[%s139 + $0x3d8] sm:$0xff]
      %v271 = vld [vmem:[%s139 + $0x3e0] sm:$0xff]
      %v272 = vld [vmem:[%s139 + $0x3e8] sm:$0xff]
      %v273 = vld [vmem:[%s139 + $0x3f0] sm:$0xff]
      %v274 = vld [vmem:[%s139 + $0x3f8] sm:$0xff]
      %v275 = vld [vmem:[%s1] sm:$0xff]
      %v276 = vld [vmem:[%s1 + $0x8] sm:$0xff]
      %v277 = vld [vmem:[%s1 + $0x10] sm:$0xff]
      %v278 = vld [vmem:[%s1 + $0x18] sm:$0xff]
      %v279 = vld [vmem:[%s1 + $0x20] sm:$0xff]
      %v280 = vld [vmem:[%s1 + $0x28] sm:$0xff]
      %v281 = vld [vmem:[%s1 + $0x30] sm:$0xff]
      %v282 = vld [vmem:[%s1 + $0x38] sm:$0xff]
      %v283 = vld [vmem:[%s1 + $0x40] sm:$0xff]
      %v284 = vld [vmem:[%s1 + $0x48] sm:$0xff]
      %v285 = vld [vmem:[%s1 + $0x50] sm:$0xff]
      %v286 = vld [vmem:[%s1 + $0x58] sm:$0xff]
      %v287 = vld [vmem:[%s1 + $0x60] sm:$0xff]
      %v288 = vld [vmem:[%s1 + $0x68] sm:$0xff]
      %v289 = vld [vmem:[%s1 + $0x70] sm:$0xff]
      %v290 = vld [vmem:[%s1 + $0x78] sm:$0xff]
      %v291 = vld [vmem:[%s1 + $0x80] sm:$0xff]
      %v292 = vld [vmem:[%s1 + $0x88] sm:$0xff]
      %v293 = vld [vmem:[%s1 + $0x90] sm:$0xff]
      %v294 = vld [vmem:[%s1 + $0x98] sm:$0xff]
      %v295 = vld [vmem:[%s1 + $0xa0] sm:$0xff]
      %v296 = vld [vmem:[%s1 + $0xa8] sm:$0xff]
      %v297 = vld [vmem:[%s1 + $0xb0] sm:$0xff]
      %v298 = vld [vmem:[%s1 + $0xb8] sm:$0xff]
      %v299 = vld [vmem:[%s1 + $0xc0] sm:$0xff]
      %v300 = vld [vmem:[%s1 + $0xc8] sm:$0xff]
      %v301 = vld [vmem:[%s1 + $0xd0] sm:$0xff]
      %v302 = vld [vmem:[%s1 + $0xd8] sm:$0xff]
      %v303 = vld [vmem:[%s1 + $0xe0] sm:$0xff]
      %v304 = vld [vmem:[%s1 + $0xe8] sm:$0xff]
      %v305 = vld [vmem:[%s1 + $0xf0] sm:$0xff]
      %v306 = vld [vmem:[%s1 + $0xf8] sm:$0xff]
      %v307 = vld [vmem:[%s1 + $0x100] sm:$0xff]
      %v308 = vld [vmem:[%s1 + $0x108] sm:$0xff]
      %v309 = vld [vmem:[%s1 + $0x110] sm:$0xff]
      %v310 = vld [vmem:[%s1 + $0x118] sm:$0xff]
      %v311 = vld [vmem:[%s1 + $0x120] sm:$0xff]
      %v312 = vld [vmem:[%s1 + $0x128] sm:$0xff]
      %v313 = vld [vmem:[%s1 + $0x130] sm:$0xff]
      %v314 = vld [vmem:[%s1 + $0x138] sm:$0xff]
      %v315 = vld [vmem:[%s1 + $0x140] sm:$0xff]
      %v316 = vld [vmem:[%s1 + $0x148] sm:$0xff]
      %v317 = vld [vmem:[%s1 + $0x150] sm:$0xff]
      %v318 = vld [vmem:[%s1 + $0x158] sm:$0xff]
      %v319 = vld [vmem:[%s1 + $0x160] sm:$0xff]
      %v320 = vld [vmem:[%s1 + $0x168] sm:$0xff]
      %v321 = vld [vmem:[%s1 + $0x170] sm:$0xff]
      %v322 = vld [vmem:[%s1 + $0x178] sm:$0xff]
      %v323 = vld [vmem:[%s1 + $0x180] sm:$0xff]
      %v324 = vld [vmem:[%s1 + $0x188] sm:$0xff]
      %v325 = vld [vmem:[%s1 + $0x190] sm:$0xff]
      %v326 = vld [vmem:[%s1 + $0x198] sm:$0xff]
      %v327 = vld [vmem:[%s1 + $0x1a0] sm:$0xff]
      %v328 = vld [vmem:[%s1 + $0x1a8] sm:$0xff]
      %v329 = vld [vmem:[%s1 + $0x1b0] sm:$0xff]
      %v330 = vld [vmem:[%s1 + $0x1b8] sm:$0xff]
      %v331 = vld [vmem:[%s1 + $0x1c0] sm:$0xff]
      %v332 = vlaneseq
      %v333 = vshrl.u32 %v332, 7
      %v334 = vsub.s32 0, %v333
      %v335 = vrot.slane %v331, %v334
      %vm336 = vcmask 523264
      %v338 = vsel %vm336, %v147, 0
      %v341 = vsel %vm336, %v148, 0
      %v344 = vsel %vm336, %v149, 0
      %v347 = vsel %vm336, %v150, 0
      %v350 = vsel %vm336, %v151, 0
      %v353 = vsel %vm336, %v152, 0
      %v356 = vsel %vm336, %v153, 0
      %v359 = vsel %vm336, %v154, 0
      %v362 = vsel %vm336, %v155, 0
      %v365 = vsel %vm336, %v156, 0
      %v368 = vsel %vm336, %v157, 0
      %v371 = vsel %vm336, %v158, 0
      %v374 = vsel %vm336, %v159, 0
      %v377 = vsel %vm336, %v160, 0
      %v380 = vsel %vm336, %v161, 0
      %v383 = vsel %vm336, %v162, 0
      %v386 = vsel %vm336, %v163, 0
      %v389 = vsel %vm336, %v164, 0
      %v392 = vsel %vm336, %v165, 0
      %v395 = vsel %vm336, %v166, 0
      %v398 = vsel %vm336, %v167, 0
      %v401 = vsel %vm336, %v168, 0
      %v404 = vsel %vm336, %v169, 0
      %v407 = vsel %vm336, %v170, 0
      %v410 = vsel %vm336, %v171, 0
      %v413 = vsel %vm336, %v172, 0
      %v416 = vsel %vm336, %v173, 0
      %v419 = vsel %vm336, %v174, 0
      %v422 = vsel %vm336, %v175, 0
      %v425 = vsel %vm336, %v176, 0
      %v428 = vsel %vm336, %v177, 0
      %v431 = vsel %vm336, %v178, 0
      %v434 = vsel %vm336, %v179, 0
      %v437 = vsel %vm336, %v180, 0
      %v440 = vsel %vm336, %v181, 0
      %v443 = vsel %vm336, %v182, 0
      %v446 = vsel %vm336, %v183, 0
      %v449 = vsel %vm336, %v184, 0
      %v452 = vsel %vm336, %v185, 0
      %v455 = vsel %vm336, %v186, 0
      %v458 = vsel %vm336, %v187, 0
      %v461 = vsel %vm336, %v188, 0
      %v464 = vsel %vm336, %v189, 0
      %v467 = vsel %vm336, %v190, 0
      %v470 = vsel %vm336, %v191, 0
      %v473 = vsel %vm336, %v192, 0
      %v476 = vsel %vm336, %v193, 0
      %v479 = vsel %vm336, %v194, 0
      %v482 = vsel %vm336, %v195, 0
      %v485 = vsel %vm336, %v196, 0
      %v488 = vsel %vm336, %v197, 0
      %v491 = vsel %vm336, %v198, 0
      %v494 = vsel %vm336, %v199, 0
      %v497 = vsel %vm336, %v200, 0
      %v500 = vsel %vm336, %v201, 0
      %v503 = vsel %vm336, %v202, 0
      %v506 = vsel %vm336, %v203, 0
      %v509 = vsel %vm336, %v204, 0
      %v512 = vsel %vm336, %v205, 0
      %v515 = vsel %vm336, %v206, 0
      %v518 = vsel %vm336, %v207, 0
      %v521 = vsel %vm336, %v208, 0
      %v524 = vsel %vm336, %v209, 0
      %v527 = vsel %vm336, %v210, 0
      %v530 = vsel %vm336, %v211, 0
      %v533 = vsel %vm336, %v212, 0
      %v536 = vsel %vm336, %v213, 0
      %v539 = vsel %vm336, %v214, 0
      %v542 = vsel %vm336, %v215, 0
      %v545 = vsel %vm336, %v216, 0
      %v548 = vsel %vm336, %v217, 0
      %v551 = vsel %vm336, %v218, 0
      %v554 = vsel %vm336, %v219, 0
      %v557 = vsel %vm336, %v220, 0
      %v560 = vsel %vm336, %v221, 0
      %v563 = vsel %vm336, %v222, 0
      %v566 = vsel %vm336, %v223, 0
      %v569 = vsel %vm336, %v224, 0
      %v572 = vsel %vm336, %v225, 0
      %v575 = vsel %vm336, %v226, 0
      %v578 = vsel %vm336, %v227, 0
      %v581 = vsel %vm336, %v228, 0
      %v584 = vsel %vm336, %v229, 0
      %v587 = vsel %vm336, %v230, 0
      %v590 = vsel %vm336, %v231, 0
      %v593 = vsel %vm336, %v232, 0
      %v596 = vsel %vm336, %v233, 0
      %v599 = vsel %vm336, %v234, 0
      %v602 = vsel %vm336, %v235, 0
      %v605 = vsel %vm336, %v236, 0
      %v608 = vsel %vm336, %v237, 0
      %v611 = vsel %vm336, %v238, 0
      %v614 = vsel %vm336, %v239, 0
      %v617 = vsel %vm336, %v240, 0
      %v620 = vsel %vm336, %v241, 0
      %v623 = vsel %vm336, %v242, 0
      %v626 = vsel %vm336, %v243, 0
      %v629 = vsel %vm336, %v244, 0
      %v632 = vsel %vm336, %v245, 0
      %v635 = vsel %vm336, %v246, 0
      %v638 = vsel %vm336, %v247, 0
      %v641 = vsel %vm336, %v248, 0
      %v644 = vsel %vm336, %v249, 0
      %v647 = vsel %vm336, %v250, 0
      %v650 = vsel %vm336, %v251, 0
      %v653 = vsel %vm336, %v252, 0
      %v656 = vsel %vm336, %v253, 0
      %v659 = vsel %vm336, %v254, 0
      %v662 = vsel %vm336, %v255, 0
      %v665 = vsel %vm336, %v256, 0
      %v668 = vsel %vm336, %v257, 0
      %v671 = vsel %vm336, %v258, 0
      %v674 = vsel %vm336, %v259, 0
      %v677 = vsel %vm336, %v260, 0
      %v680 = vsel %vm336, %v261, 0
      %v683 = vsel %vm336, %v262, 0
      %v686 = vsel %vm336, %v263, 0
      %v689 = vsel %vm336, %v264, 0
      %v692 = vsel %vm336, %v265, 0
      %v695 = vsel %vm336, %v266, 0
      %v698 = vsel %vm336, %v267, 0
      %v701 = vsel %vm336, %v268, 0
      %v704 = vsel %vm336, %v269, 0
      %v707 = vsel %vm336, %v270, 0
      %v710 = vsel %vm336, %v271, 0
      %v713 = vsel %vm336, %v272, 0
      %v716 = vsel %vm336, %v273, 0
      %v719 = vsel %vm336, %v274, 0
      %721 = vmatprep.subr.mxu0 0.0
      %722 = vmatpush1.msra.mxu0 0.0
      %723 = vmatprep.subr.mxu0 0.0
      %724 = vmatpush1.msra.mxu0 0.0
      %725 = vmatprep.subr.mxu0 0.0
      %726 = vmatpush1.msra.mxu0 0.0
      %727 = vmatprep.subr.mxu0 0.0
      %728 = vmatpush1.msra.mxu0 0.0
      %729 = vmatprep.subr.mxu0 0.0
      %730 = vmatpush1.msra.mxu0 0.0
      %731 = vmatprep.subr.mxu0 0.0
      %732 = vmatpush1.msra.mxu0 0.0
      %733 = vmatprep.subr.mxu0 0.0
      %734 = vmatpush1.msra.mxu0 0.0
      %735 = vmatprep.subr.mxu0 0.0
      %736 = vmatpush1.msra.mxu0 0.0
      %737 = vmatprep.subr.mxu0 0.0
      %738 = vmatpush1.msra.mxu0 %v282
      %739 = vmatprep.subr.mxu0 0.0
      %740 = vmatpush1.msra.mxu0 %v281
      %741 = vmatprep.subr.mxu0 0.0
      %742 = vmatpush1.msra.mxu0 %v280
      %743 = vmatprep.subr.mxu0 0.0
      %744 = vmatpush1.msra.mxu0 %v279
      %745 = vmatprep.subr.mxu0 0.0
      %746 = vmatpush1.msra.mxu0 %v278
      %747 = vmatprep.subr.mxu0 0.0
      %748 = vmatpush1.msra.mxu0 %v277
      %749 = vmatprep.subr.mxu0 0.0
      %750 = vmatpush1.msra.mxu0 %v276
      %751 = vmatprep.subr.mxu0 0.0
      %752 = vmatpush1.msra.mxu0 %v275
      %753 = vmatprep.subr.mxu0 0.0
      %754 = vmatpush2.msra.mxu0 0.0
      %755 = vmatprep.subr.mxu0 0.0
      %756 = vmatpush2.msra.mxu0 0.0
      %757 = vmatprep.subr.mxu0 0.0
      %758 = vmatpush2.msra.mxu0 0.0
      %759 = vmatprep.subr.mxu0 0.0
      %760 = vmatpush2.msra.mxu0 0.0
      %761 = vmatprep.subr.mxu0 0.0
      %762 = vmatpush2.msra.mxu0 0.0
      %763 = vmatprep.subr.mxu0 0.0
      %764 = vmatpush2.msra.mxu0 0.0
      %765 = vmatprep.subr.mxu0 0.0
      %766 = vmatpush2.msra.mxu0 0.0
      %767 = vmatprep.subr.mxu0 0.0
      %768 = vmatpush2.msra.mxu0 0.0
      %769 = vmatprep.subr.mxu0 0.0
      %770 = vmatpush2.msra.mxu0 0.0
      %771 = vmatprep.subr.mxu0 0.0
      %772 = vmatpush2.msra.mxu0 0.0
      %773 = vmatprep.subr.mxu0 0.0
      %774 = vmatpush2.msra.mxu0 0.0
      %775 = vmatprep.subr.mxu0 0.0
      %776 = vmatpush2.msra.mxu0 0.0
      %777 = vmatprep.subr.mxu0 0.0
      %778 = vmatpush2.msra.mxu0 0.0
      %779 = vmatprep.subr.mxu0 0.0
      %780 = vmatpush2.msra.mxu0 0.0
      %781 = vmatprep.subr.mxu0 0.0
      %782 = vmatpush2.msra.mxu0 0.0
      %783 = vmatprep.subr.mxu0 0.0
      %784 = vmatpush2.msra.mxu0 0.0
      %785 = vmatprep.mubr.f32.mxu0 0.0
      %786 = vmatmul.mubr.f32.gmra.mxu0 %v338
      %v787 = vpop.f32.mrf.mxu0
      %v788 = vadd.f32 %v335, %v787
      %v789 = vpop.f32.mrf.mxu0
      %790 = vmatprep.mubr.f32.mxu0 0.0
      %791 = vmatmul.mubr.f32.gmra.mxu0 %v341
      %v792 = vpop.f32.mrf.mxu0
      %v793 = vadd.f32 %v335, %v792
      %v794 = vpop.f32.mrf.mxu0
      %795 = vmatprep.mubr.f32.mxu0 0.0
      %796 = vmatmul.mubr.f32.gmra.mxu0 %v344
      %v797 = vpop.f32.mrf.mxu0
      %v798 = vadd.f32 %v335, %v797
      %v799 = vpop.f32.mrf.mxu0
      %800 = vmatprep.mubr.f32.mxu0 0.0
      %801 = vmatmul.mubr.f32.gmra.mxu0 %v347
      %v802 = vpop.f32.mrf.mxu0
      %v803 = vadd.f32 %v335, %v802
      %v804 = vpop.f32.mrf.mxu0
      %805 = vmatprep.mubr.f32.mxu0 0.0
      %806 = vmatmul.mubr.f32.gmra.mxu0 %v350
      %v807 = vpop.f32.mrf.mxu0
      %v808 = vadd.f32 %v335, %v807
      %v809 = vpop.f32.mrf.mxu0
      %810 = vmatprep.mubr.f32.mxu0 0.0
      %811 = vmatmul.mubr.f32.gmra.mxu0 %v353
      %v812 = vpop.f32.mrf.mxu0
      %v813 = vadd.f32 %v335, %v812
      %v814 = vpop.f32.mrf.mxu0
      %815 = vmatprep.mubr.f32.mxu0 0.0
      %816 = vmatmul.mubr.f32.gmra.mxu0 %v356
      %v817 = vpop.f32.mrf.mxu0
      %v818 = vadd.f32 %v335, %v817
      %v819 = vpop.f32.mrf.mxu0
      %820 = vmatprep.mubr.f32.mxu0 0.0
      %821 = vmatmul.mubr.f32.gmra.mxu0 %v359
      %v822 = vpop.f32.mrf.mxu0
      %v823 = vadd.f32 %v335, %v822
      %v824 = vpop.f32.mrf.mxu0
      %825 = vmatprep.mubr.f32.mxu0 0.0
      %826 = vmatmul.mubr.f32.gmra.mxu0 %v362
      %v827 = vpop.f32.mrf.mxu0
      %v828 = vadd.f32 %v335, %v827
      %v829 = vpop.f32.mrf.mxu0
      %830 = vmatprep.mubr.f32.mxu0 0.0
      %831 = vmatmul.mubr.f32.gmra.mxu0 %v365
      %v832 = vpop.f32.mrf.mxu0
      %v833 = vadd.f32 %v335, %v832
      %v834 = vpop.f32.mrf.mxu0
      %835 = vmatprep.mubr.f32.mxu0 0.0
      %836 = vmatmul.mubr.f32.gmra.mxu0 %v368
      %v837 = vpop.f32.mrf.mxu0
      %v838 = vadd.f32 %v335, %v837
      %v839 = vpop.f32.mrf.mxu0
      %840 = vmatprep.mubr.f32.mxu0 0.0
      %841 = vmatmul.mubr.f32.gmra.mxu0 %v371
      %v842 = vpop.f32.mrf.mxu0
      %v843 = vadd.f32 %v335, %v842
      %v844 = vpop.f32.mrf.mxu0
      %845 = vmatprep.mubr.f32.mxu0 0.0
      %846 = vmatmul.mubr.f32.gmra.mxu0 %v374
      %v847 = vpop.f32.mrf.mxu0
      %v848 = vadd.f32 %v335, %v847
      %v849 = vpop.f32.mrf.mxu0
      %850 = vmatprep.mubr.f32.mxu0 0.0
      %851 = vmatmul.mubr.f32.gmra.mxu0 %v377
      %v852 = vpop.f32.mrf.mxu0
      %v853 = vadd.f32 %v335, %v852
      %v854 = vpop.f32.mrf.mxu0
      %855 = vmatprep.mubr.f32.mxu0 0.0
      %856 = vmatmul.mubr.f32.gmra.mxu0 %v380
      %v857 = vpop.f32.mrf.mxu0
      %v858 = vadd.f32 %v335, %v857
      %v859 = vpop.f32.mrf.mxu0
      %860 = vmatprep.mubr.f32.mxu0 0.0
      %861 = vmatmul.mubr.f32.gmra.mxu0 %v383
      %v862 = vpop.f32.mrf.mxu0
      %v863 = vadd.f32 %v335, %v862
      %v864 = vpop.f32.mrf.mxu0
      %865 = vmatprep.mubr.f32.mxu0 0.0
      %866 = vmatmul.mubr.f32.gmra.mxu0 %v386
      %v867 = vpop.f32.mrf.mxu0
      %v868 = vadd.f32 %v335, %v867
      %v869 = vpop.f32.mrf.mxu0
      %870 = vmatprep.mubr.f32.mxu0 0.0
      %871 = vmatmul.mubr.f32.gmra.mxu0 %v389
      %v872 = vpop.f32.mrf.mxu0
      %v873 = vadd.f32 %v335, %v872
      %v874 = vpop.f32.mrf.mxu0
      %875 = vmatprep.mubr.f32.mxu0 0.0
      %876 = vmatmul.mubr.f32.gmra.mxu0 %v392
      %v877 = vpop.f32.mrf.mxu0
      %v878 = vadd.f32 %v335, %v877
      %v879 = vpop.f32.mrf.mxu0
      %880 = vmatprep.mubr.f32.mxu0 0.0
      %881 = vmatmul.mubr.f32.gmra.mxu0 %v395
      %v882 = vpop.f32.mrf.mxu0
      %v883 = vadd.f32 %v335, %v882
      %v884 = vpop.f32.mrf.mxu0
      %885 = vmatprep.mubr.f32.mxu0 0.0
      %886 = vmatmul.mubr.f32.gmra.mxu0 %v398
      %v887 = vpop.f32.mrf.mxu0
      %v888 = vadd.f32 %v335, %v887
      %v889 = vpop.f32.mrf.mxu0
      %890 = vmatprep.mubr.f32.mxu0 0.0
      %891 = vmatmul.mubr.f32.gmra.mxu0 %v401
      %v892 = vpop.f32.mrf.mxu0
      %v893 = vadd.f32 %v335, %v892
      %v894 = vpop.f32.mrf.mxu0
      %895 = vmatprep.mubr.f32.mxu0 0.0
      %896 = vmatmul.mubr.f32.gmra.mxu0 %v404
      %v897 = vpop.f32.mrf.mxu0
      %v898 = vadd.f32 %v335, %v897
      %v899 = vpop.f32.mrf.mxu0
      %900 = vmatprep.mubr.f32.mxu0 0.0
      %901 = vmatmul.mubr.f32.gmra.mxu0 %v407
      %v902 = vpop.f32.mrf.mxu0
      %v903 = vadd.f32 %v335, %v902
      %v904 = vpop.f32.mrf.mxu0
      %905 = vmatprep.mubr.f32.mxu0 0.0
      %906 = vmatmul.mubr.f32.gmra.mxu0 %v410
      %v907 = vpop.f32.mrf.mxu0
      %v908 = vadd.f32 %v335, %v907
      %v909 = vpop.f32.mrf.mxu0
      %910 = vmatprep.mubr.f32.mxu0 0.0
      %911 = vmatmul.mubr.f32.gmra.mxu0 %v413
      %v912 = vpop.f32.mrf.mxu0
      %v913 = vadd.f32 %v335, %v912
      %v914 = vpop.f32.mrf.mxu0
      %915 = vmatprep.mubr.f32.mxu0 0.0
      %916 = vmatmul.mubr.f32.gmra.mxu0 %v416
      %v917 = vpop.f32.mrf.mxu0
      %v918 = vadd.f32 %v335, %v917
      %v919 = vpop.f32.mrf.mxu0
      %920 = vmatprep.mubr.f32.mxu0 0.0
      %921 = vmatmul.mubr.f32.gmra.mxu0 %v419
      %v922 = vpop.f32.mrf.mxu0
      %v923 = vadd.f32 %v335, %v922
      %v924 = vpop.f32.mrf.mxu0
      %925 = vmatprep.mubr.f32.mxu0 0.0
      %926 = vmatmul.mubr.f32.gmra.mxu0 %v422
      %v927 = vpop.f32.mrf.mxu0
      %v928 = vadd.f32 %v335, %v927
      %v929 = vpop.f32.mrf.mxu0
      %930 = vmatprep.mubr.f32.mxu0 0.0
      %931 = vmatmul.mubr.f32.gmra.mxu0 %v425
      %v932 = vpop.f32.mrf.mxu0
      %v933 = vadd.f32 %v335, %v932
      %v934 = vpop.f32.mrf.mxu0
      %935 = vmatprep.mubr.f32.mxu0 0.0
      %936 = vmatmul.mubr.f32.gmra.mxu0 %v428
      %v937 = vpop.f32.mrf.mxu0
      %v938 = vadd.f32 %v335, %v937
      %v939 = vpop.f32.mrf.mxu0
      %940 = vmatprep.mubr.f32.mxu0 0.0
      %941 = vmatmul.mubr.f32.gmra.mxu0 %v431
      %v942 = vpop.f32.mrf.mxu0
      %v943 = vadd.f32 %v335, %v942
      %v944 = vpop.f32.mrf.mxu0
      %945 = vmatprep.mubr.f32.mxu0 0.0
      %946 = vmatmul.mubr.f32.gmra.mxu0 %v434
      %v947 = vpop.f32.mrf.mxu0
      %v948 = vadd.f32 %v335, %v947
      %v949 = vpop.f32.mrf.mxu0
      %950 = vmatprep.mubr.f32.mxu0 0.0
      %951 = vmatmul.mubr.f32.gmra.mxu0 %v437
      %v952 = vpop.f32.mrf.mxu0
      %v953 = vadd.f32 %v335, %v952
      %v954 = vpop.f32.mrf.mxu0
      %955 = vmatprep.mubr.f32.mxu0 0.0
      %956 = vmatmul.mubr.f32.gmra.mxu0 %v440
      %v957 = vpop.f32.mrf.mxu0
      %v958 = vadd.f32 %v335, %v957
      %v959 = vpop.f32.mrf.mxu0
      %960 = vmatprep.mubr.f32.mxu0 0.0
      %961 = vmatmul.mubr.f32.gmra.mxu0 %v443
      %v962 = vpop.f32.mrf.mxu0
      %v963 = vadd.f32 %v335, %v962
      %v964 = vpop.f32.mrf.mxu0
      %965 = vmatprep.mubr.f32.mxu0 0.0
      %966 = vmatmul.mubr.f32.gmra.mxu0 %v446
      %v967 = vpop.f32.mrf.mxu0
      %v968 = vadd.f32 %v335, %v967
      %v969 = vpop.f32.mrf.mxu0
      %970 = vmatprep.mubr.f32.mxu0 0.0
      %971 = vmatmul.mubr.f32.gmra.mxu0 %v449
      %v972 = vpop.f32.mrf.mxu0
      %v973 = vadd.f32 %v335, %v972
      %v974 = vpop.f32.mrf.mxu0
      %975 = vmatprep.mubr.f32.mxu0 0.0
      %976 = vmatmul.mubr.f32.gmra.mxu0 %v452
      %v977 = vpop.f32.mrf.mxu0
      %v978 = vadd.f32 %v335, %v977
      %v979 = vpop.f32.mrf.mxu0
      %980 = vmatprep.mubr.f32.mxu0 0.0
      %981 = vmatmul.mubr.f32.gmra.mxu0 %v455
      %v982 = vpop.f32.mrf.mxu0
      %v983 = vadd.f32 %v335, %v982
      %v984 = vpop.f32.mrf.mxu0
      %985 = vmatprep.mubr.f32.mxu0 0.0
      %986 = vmatmul.mubr.f32.gmra.mxu0 %v458
      %v987 = vpop.f32.mrf.mxu0
      %v988 = vadd.f32 %v335, %v987
      %v989 = vpop.f32.mrf.mxu0
      %990 = vmatprep.mubr.f32.mxu0 0.0
      %991 = vmatmul.mubr.f32.gmra.mxu0 %v461
      %v992 = vpop.f32.mrf.mxu0
      %v993 = vadd.f32 %v335, %v992
      %v994 = vpop.f32.mrf.mxu0
      %995 = vmatprep.mubr.f32.mxu0 0.0
      %996 = vmatmul.mubr.f32.gmra.mxu0 %v464
      %v997 = vpop.f32.mrf.mxu0
      %v998 = vadd.f32 %v335, %v997
      %v999 = vpop.f32.mrf.mxu0
      %1000 = vmatprep.mubr.f32.mxu0 0.0
      %1001 = vmatmul.mubr.f32.gmra.mxu0 %v467
      %v1002 = vpop.f32.mrf.mxu0
      %v1003 = vadd.f32 %v335, %v1002
      %v1004 = vpop.f32.mrf.mxu0
      %1005 = vmatprep.mubr.f32.mxu0 0.0
      %1006 = vmatmul.mubr.f32.gmra.mxu0 %v470
      %v1007 = vpop.f32.mrf.mxu0
      %v1008 = vadd.f32 %v335, %v1007
      %v1009 = vpop.f32.mrf.mxu0
      %1010 = vmatprep.mubr.f32.mxu0 0.0
      %1011 = vmatmul.mubr.f32.gmra.mxu0 %v473
      %v1012 = vpop.f32.mrf.mxu0
      %v1013 = vadd.f32 %v335, %v1012
      %v1014 = vpop.f32.mrf.mxu0
      %1015 = vmatprep.mubr.f32.mxu0 0.0
      %1016 = vmatmul.mubr.f32.gmra.mxu0 %v476
      %v1017 = vpop.f32.mrf.mxu0
      %v1018 = vadd.f32 %v335, %v1017
      %v1019 = vpop.f32.mrf.mxu0
      %1020 = vmatprep.mubr.f32.mxu0 0.0
      %1021 = vmatmul.mubr.f32.gmra.mxu0 %v479
      %v1022 = vpop.f32.mrf.mxu0
      %v1023 = vadd.f32 %v335, %v1022
      %v1024 = vpop.f32.mrf.mxu0
      %1025 = vmatprep.mubr.f32.mxu0 0.0
      %1026 = vmatmul.mubr.f32.gmra.mxu0 %v482
      %v1027 = vpop.f32.mrf.mxu0
      %v1028 = vadd.f32 %v335, %v1027
      %v1029 = vpop.f32.mrf.mxu0
      %1030 = vmatprep.mubr.f32.mxu0 0.0
      %1031 = vmatmul.mubr.f32.gmra.mxu0 %v485
      %v1032 = vpop.f32.mrf.mxu0
      %v1033 = vadd.f32 %v335, %v1032
      %v1034 = vpop.f32.mrf.mxu0
      %1035 = vmatprep.mubr.f32.mxu0 0.0
      %1036 = vmatmul.mubr.f32.gmra.mxu0 %v488
      %v1037 = vpop.f32.mrf.mxu0
      %v1038 = vadd.f32 %v335, %v1037
      %v1039 = vpop.f32.mrf.mxu0
      %1040 = vmatprep.mubr.f32.mxu0 0.0
      %1041 = vmatmul.mubr.f32.gmra.mxu0 %v491
      %v1042 = vpop.f32.mrf.mxu0
      %v1043 = vadd.f32 %v335, %v1042
      %v1044 = vpop.f32.mrf.mxu0
      %1045 = vmatprep.mubr.f32.mxu0 0.0
      %1046 = vmatmul.mubr.f32.gmra.mxu0 %v494
      %v1047 = vpop.f32.mrf.mxu0
      %v1048 = vadd.f32 %v335, %v1047
      %v1049 = vpop.f32.mrf.mxu0
      %1050 = vmatprep.mubr.f32.mxu0 0.0
      %1051 = vmatmul.mubr.f32.gmra.mxu0 %v497
      %v1052 = vpop.f32.mrf.mxu0
      %v1053 = vadd.f32 %v335, %v1052
      %v1054 = vpop.f32.mrf.mxu0
      %1055 = vmatprep.mubr.f32.mxu0 0.0
      %1056 = vmatmul.mubr.f32.gmra.mxu0 %v500
      %v1057 = vpop.f32.mrf.mxu0
      %v1058 = vadd.f32 %v335, %v1057
      %v1059 = vpop.f32.mrf.mxu0
      %1060 = vmatprep.mubr.f32.mxu0 0.0
      %1061 = vmatmul.mubr.f32.gmra.mxu0 %v503
      %v1062 = vpop.f32.mrf.mxu0
      %v1063 = vadd.f32 %v335, %v1062
      %v1064 = vpop.f32.mrf.mxu0
      %1065 = vmatprep.mubr.f32.mxu0 0.0
      %1066 = vmatmul.mubr.f32.gmra.mxu0 %v506
      %v1067 = vpop.f32.mrf.mxu0
      %v1068 = vadd.f32 %v335, %v1067
      %v1069 = vpop.f32.mrf.mxu0
      %1070 = vmatprep.mubr.f32.mxu0 0.0
      %1071 = vmatmul.mubr.f32.gmra.mxu0 %v509
      %v1072 = vpop.f32.mrf.mxu0
      %v1073 = vadd.f32 %v335, %v1072
      %v1074 = vpop.f32.mrf.mxu0
      %1075 = vmatprep.mubr.f32.mxu0 0.0
      %1076 = vmatmul.mubr.f32.gmra.mxu0 %v512
      %v1077 = vpop.f32.mrf.mxu0
      %v1078 = vadd.f32 %v335, %v1077
      %v1079 = vpop.f32.mrf.mxu0
      %1080 = vmatprep.mubr.f32.mxu0 0.0
      %1081 = vmatmul.mubr.f32.gmra.mxu0 %v515
      %v1082 = vpop.f32.mrf.mxu0
      %v1083 = vadd.f32 %v335, %v1082
      %v1084 = vpop.f32.mrf.mxu0
      %1085 = vmatprep.mubr.f32.mxu0 0.0
      %1086 = vmatmul.mubr.f32.gmra.mxu0 %v518
      %v1087 = vpop.f32.mrf.mxu0
      %v1088 = vadd.f32 %v335, %v1087
      %v1089 = vpop.f32.mrf.mxu0
      %1090 = vmatprep.mubr.f32.mxu0 0.0
      %1091 = vmatmul.mubr.f32.gmra.mxu0 %v521
      %v1092 = vpop.f32.mrf.mxu0
      %v1093 = vadd.f32 %v335, %v1092
      %v1094 = vpop.f32.mrf.mxu0
      %1095 = vmatprep.mubr.f32.mxu0 0.0
      %1096 = vmatmul.mubr.f32.gmra.mxu0 %v524
      %v1097 = vpop.f32.mrf.mxu0
      %v1098 = vadd.f32 %v335, %v1097
      %v1099 = vpop.f32.mrf.mxu0
      %1100 = vmatprep.mubr.f32.mxu0 0.0
      %1101 = vmatmul.mubr.f32.gmra.mxu0 %v527
      %v1102 = vpop.f32.mrf.mxu0
      %v1103 = vadd.f32 %v335, %v1102
      %v1104 = vpop.f32.mrf.mxu0
      %1105 = vmatprep.mubr.f32.mxu0 0.0
      %1106 = vmatmul.mubr.f32.gmra.mxu0 %v530
      %v1107 = vpop.f32.mrf.mxu0
      %v1108 = vadd.f32 %v335, %v1107
      %v1109 = vpop.f32.mrf.mxu0
      %1110 = vmatprep.mubr.f32.mxu0 0.0
      %1111 = vmatmul.mubr.f32.gmra.mxu0 %v533
      %v1112 = vpop.f32.mrf.mxu0
      %v1113 = vadd.f32 %v335, %v1112
      %v1114 = vpop.f32.mrf.mxu0
      %1115 = vmatprep.mubr.f32.mxu0 0.0
      %1116 = vmatmul.mubr.f32.gmra.mxu0 %v536
      %v1117 = vpop.f32.mrf.mxu0
      %v1118 = vadd.f32 %v335, %v1117
      %v1119 = vpop.f32.mrf.mxu0
      %1120 = vmatprep.mubr.f32.mxu0 0.0
      %1121 = vmatmul.mubr.f32.gmra.mxu0 %v539
      %v1122 = vpop.f32.mrf.mxu0
      %v1123 = vadd.f32 %v335, %v1122
      %v1124 = vpop.f32.mrf.mxu0
      %1125 = vmatprep.mubr.f32.mxu0 0.0
      %1126 = vmatmul.mubr.f32.gmra.mxu0 %v542
      %v1127 = vpop.f32.mrf.mxu0
      %v1128 = vadd.f32 %v335, %v1127
      %v1129 = vpop.f32.mrf.mxu0
      %1130 = vmatprep.mubr.f32.mxu0 0.0
      %1131 = vmatmul.mubr.f32.gmra.mxu0 %v545
      %v1132 = vpop.f32.mrf.mxu0
      %v1133 = vadd.f32 %v335, %v1132
      %v1134 = vpop.f32.mrf.mxu0
      %1135 = vmatprep.mubr.f32.mxu0 0.0
      %1136 = vmatmul.mubr.f32.gmra.mxu0 %v548
      %v1137 = vpop.f32.mrf.mxu0
      %v1138 = vadd.f32 %v335, %v1137
      %v1139 = vpop.f32.mrf.mxu0
      %1140 = vmatprep.mubr.f32.mxu0 0.0
      %1141 = vmatmul.mubr.f32.gmra.mxu0 %v551
      %v1142 = vpop.f32.mrf.mxu0
      %v1143 = vadd.f32 %v335, %v1142
      %v1144 = vpop.f32.mrf.mxu0
      %1145 = vmatprep.mubr.f32.mxu0 0.0
      %1146 = vmatmul.mubr.f32.gmra.mxu0 %v554
      %v1147 = vpop.f32.mrf.mxu0
      %v1148 = vadd.f32 %v335, %v1147
      %v1149 = vpop.f32.mrf.mxu0
      %1150 = vmatprep.mubr.f32.mxu0 0.0
      %1151 = vmatmul.mubr.f32.gmra.mxu0 %v557
      %v1152 = vpop.f32.mrf.mxu0
      %v1153 = vadd.f32 %v335, %v1152
      %v1154 = vpop.f32.mrf.mxu0
      %1155 = vmatprep.mubr.f32.mxu0 0.0
      %1156 = vmatmul.mubr.f32.gmra.mxu0 %v560
      %v1157 = vpop.f32.mrf.mxu0
      %v1158 = vadd.f32 %v335, %v1157
      %v1159 = vpop.f32.mrf.mxu0
      %1160 = vmatprep.mubr.f32.mxu0 0.0
      %1161 = vmatmul.mubr.f32.gmra.mxu0 %v563
      %v1162 = vpop.f32.mrf.mxu0
      %v1163 = vadd.f32 %v335, %v1162
      %v1164 = vpop.f32.mrf.mxu0
      %1165 = vmatprep.mubr.f32.mxu0 0.0
      %1166 = vmatmul.mubr.f32.gmra.mxu0 %v566
      %v1167 = vpop.f32.mrf.mxu0
      %v1168 = vadd.f32 %v335, %v1167
      %v1169 = vpop.f32.mrf.mxu0
      %1170 = vmatprep.mubr.f32.mxu0 0.0
      %1171 = vmatmul.mubr.f32.gmra.mxu0 %v569
      %v1172 = vpop.f32.mrf.mxu0
      %v1173 = vadd.f32 %v335, %v1172
      %v1174 = vpop.f32.mrf.mxu0
      %1175 = vmatprep.mubr.f32.mxu0 0.0
      %1176 = vmatmul.mubr.f32.gmra.mxu0 %v572
      %v1177 = vpop.f32.mrf.mxu0
      %v1178 = vadd.f32 %v335, %v1177
      %v1179 = vpop.f32.mrf.mxu0
      %1180 = vmatprep.mubr.f32.mxu0 0.0
      %1181 = vmatmul.mubr.f32.gmra.mxu0 %v575
      %v1182 = vpop.f32.mrf.mxu0
      %v1183 = vadd.f32 %v335, %v1182
      %v1184 = vpop.f32.mrf.mxu0
      %1185 = vmatprep.mubr.f32.mxu0 0.0
      %1186 = vmatmul.mubr.f32.gmra.mxu0 %v578
      %v1187 = vpop.f32.mrf.mxu0
      %v1188 = vadd.f32 %v335, %v1187
      %v1189 = vpop.f32.mrf.mxu0
      %1190 = vmatprep.mubr.f32.mxu0 0.0
      %1191 = vmatmul.mubr.f32.gmra.mxu0 %v581
      %v1192 = vpop.f32.mrf.mxu0
      %v1193 = vadd.f32 %v335, %v1192
      %v1194 = vpop.f32.mrf.mxu0
      %1195 = vmatprep.mubr.f32.mxu0 0.0
      %1196 = vmatmul.mubr.f32.gmra.mxu0 %v584
      %v1197 = vpop.f32.mrf.mxu0
      %v1198 = vadd.f32 %v335, %v1197
      %v1199 = vpop.f32.mrf.mxu0
      %1200 = vmatprep.mubr.f32.mxu0 0.0
      %1201 = vmatmul.mubr.f32.gmra.mxu0 %v587
      %v1202 = vpop.f32.mrf.mxu0
      %v1203 = vadd.f32 %v335, %v1202
      %v1204 = vpop.f32.mrf.mxu0
      %1205 = vmatprep.mubr.f32.mxu0 0.0
      %1206 = vmatmul.mubr.f32.gmra.mxu0 %v590
      %v1207 = vpop.f32.mrf.mxu0
      %v1208 = vadd.f32 %v335, %v1207
      %v1209 = vpop.f32.mrf.mxu0
      %1210 = vmatprep.mubr.f32.mxu0 0.0
      %1211 = vmatmul.mubr.f32.gmra.mxu0 %v593
      %v1212 = vpop.f32.mrf.mxu0
      %v1213 = vadd.f32 %v335, %v1212
      %v1214 = vpop.f32.mrf.mxu0
      %1215 = vmatprep.mubr.f32.mxu0 0.0
      %1216 = vmatmul.mubr.f32.gmra.mxu0 %v596
      %v1217 = vpop.f32.mrf.mxu0
      %v1218 = vadd.f32 %v335, %v1217
      %v1219 = vpop.f32.mrf.mxu0
      %1220 = vmatprep.mubr.f32.mxu0 0.0
      %1221 = vmatmul.mubr.f32.gmra.mxu0 %v599
      %v1222 = vpop.f32.mrf.mxu0
      %v1223 = vadd.f32 %v335, %v1222
      %v1224 = vpop.f32.mrf.mxu0
      %1225 = vmatprep.mubr.f32.mxu0 0.0
      %1226 = vmatmul.mubr.f32.gmra.mxu0 %v602
      %v1227 = vpop.f32.mrf.mxu0
      %v1228 = vadd.f32 %v335, %v1227
      %v1229 = vpop.f32.mrf.mxu0
      %1230 = vmatprep.mubr.f32.mxu0 0.0
      %1231 = vmatmul.mubr.f32.gmra.mxu0 %v605
      %v1232 = vpop.f32.mrf.mxu0
      %v1233 = vadd.f32 %v335, %v1232
      %v1234 = vpop.f32.mrf.mxu0
      %1235 = vmatprep.mubr.f32.mxu0 0.0
      %1236 = vmatmul.mubr.f32.gmra.mxu0 %v608
      %v1237 = vpop.f32.mrf.mxu0
      %v1238 = vadd.f32 %v335, %v1237
      %v1239 = vpop.f32.mrf.mxu0
      %1240 = vmatprep.mubr.f32.mxu0 0.0
      %1241 = vmatmul.mubr.f32.gmra.mxu0 %v611
      %v1242 = vpop.f32.mrf.mxu0
      %v1243 = vadd.f32 %v335, %v1242
      %v1244 = vpop.f32.mrf.mxu0
      %1245 = vmatprep.mubr.f32.mxu0 0.0
      %1246 = vmatmul.mubr.f32.gmra.mxu0 %v614
      %v1247 = vpop.f32.mrf.mxu0
      %v1248 = vadd.f32 %v335, %v1247
      %v1249 = vpop.f32.mrf.mxu0
      %1250 = vmatprep.mubr.f32.mxu0 0.0
      %1251 = vmatmul.mubr.f32.gmra.mxu0 %v617
      %v1252 = vpop.f32.mrf.mxu0
      %v1253 = vadd.f32 %v335, %v1252
      %v1254 = vpop.f32.mrf.mxu0
      %1255 = vmatprep.mubr.f32.mxu0 0.0
      %1256 = vmatmul.mubr.f32.gmra.mxu0 %v620
      %v1257 = vpop.f32.mrf.mxu0
      %v1258 = vadd.f32 %v335, %v1257
      %v1259 = vpop.f32.mrf.mxu0
      %1260 = vmatprep.mubr.f32.mxu0 0.0
      %1261 = vmatmul.mubr.f32.gmra.mxu0 %v623
      %v1262 = vpop.f32.mrf.mxu0
      %v1263 = vadd.f32 %v335, %v1262
      %v1264 = vpop.f32.mrf.mxu0
      %1265 = vmatprep.mubr.f32.mxu0 0.0
      %1266 = vmatmul.mubr.f32.gmra.mxu0 %v626
      %v1267 = vpop.f32.mrf.mxu0
      %v1268 = vadd.f32 %v335, %v1267
      %v1269 = vpop.f32.mrf.mxu0
      %1270 = vmatprep.mubr.f32.mxu0 0.0
      %1271 = vmatmul.mubr.f32.gmra.mxu0 %v629
      %v1272 = vpop.f32.mrf.mxu0
      %v1273 = vadd.f32 %v335, %v1272
      %v1274 = vpop.f32.mrf.mxu0
      %1275 = vmatprep.mubr.f32.mxu0 0.0
      %1276 = vmatmul.mubr.f32.gmra.mxu0 %v632
      %v1277 = vpop.f32.mrf.mxu0
      %v1278 = vadd.f32 %v335, %v1277
      %v1279 = vpop.f32.mrf.mxu0
      %1280 = vmatprep.mubr.f32.mxu0 0.0
      %1281 = vmatmul.mubr.f32.gmra.mxu0 %v635
      %v1282 = vpop.f32.mrf.mxu0
      %v1283 = vadd.f32 %v335, %v1282
      %v1284 = vpop.f32.mrf.mxu0
      %1285 = vmatprep.mubr.f32.mxu0 0.0
      %1286 = vmatmul.mubr.f32.gmra.mxu0 %v638
      %v1287 = vpop.f32.mrf.mxu0
      %v1288 = vadd.f32 %v335, %v1287
      %v1289 = vpop.f32.mrf.mxu0
      %1290 = vmatprep.mubr.f32.mxu0 0.0
      %1291 = vmatmul.mubr.f32.gmra.mxu0 %v641
      %v1292 = vpop.f32.mrf.mxu0
      %v1293 = vadd.f32 %v335, %v1292
      %v1294 = vpop.f32.mrf.mxu0
      %1295 = vmatprep.mubr.f32.mxu0 0.0
      %1296 = vmatmul.mubr.f32.gmra.mxu0 %v644
      %v1297 = vpop.f32.mrf.mxu0
      %v1298 = vadd.f32 %v335, %v1297
      %v1299 = vpop.f32.mrf.mxu0
      %1300 = vmatprep.mubr.f32.mxu0 0.0
      %1301 = vmatmul.mubr.f32.gmra.mxu0 %v647
      %v1302 = vpop.f32.mrf.mxu0
      %v1303 = vadd.f32 %v335, %v1302
      %v1304 = vpop.f32.mrf.mxu0
      %1305 = vmatprep.mubr.f32.mxu0 0.0
      %1306 = vmatmul.mubr.f32.gmra.mxu0 %v650
      %v1307 = vpop.f32.mrf.mxu0
      %v1308 = vadd.f32 %v335, %v1307
      %v1309 = vpop.f32.mrf.mxu0
      %1310 = vmatprep.mubr.f32.mxu0 0.0
      %1311 = vmatmul.mubr.f32.gmra.mxu0 %v653
      %v1312 = vpop.f32.mrf.mxu0
      %v1313 = vadd.f32 %v335, %v1312
      %v1314 = vpop.f32.mrf.mxu0
      %1315 = vmatprep.mubr.f32.mxu0 0.0
      %1316 = vmatmul.mubr.f32.gmra.mxu0 %v656
      %v1317 = vpop.f32.mrf.mxu0
      %v1318 = vadd.f32 %v335, %v1317
      %v1319 = vpop.f32.mrf.mxu0
      %1320 = vmatprep.mubr.f32.mxu0 0.0
      %1321 = vmatmul.mubr.f32.gmra.mxu0 %v659
      %v1322 = vpop.f32.mrf.mxu0
      %v1323 = vadd.f32 %v335, %v1322
      %v1324 = vpop.f32.mrf.mxu0
      %1325 = vmatprep.mubr.f32.mxu0 0.0
      %1326 = vmatmul.mubr.f32.gmra.mxu0 %v662
      %v1327 = vpop.f32.mrf.mxu0
      %v1328 = vadd.f32 %v335, %v1327
      %v1329 = vpop.f32.mrf.mxu0
      %1330 = vmatprep.mubr.f32.mxu0 0.0
      %1331 = vmatmul.mubr.f32.gmra.mxu0 %v665
      %v1332 = vpop.f32.mrf.mxu0
      %v1333 = vadd.f32 %v335, %v1332
      %v1334 = vpop.f32.mrf.mxu0
      %1335 = vmatprep.mubr.f32.mxu0 0.0
      %1336 = vmatmul.mubr.f32.gmra.mxu0 %v668
      %v1337 = vpop.f32.mrf.mxu0
      %v1338 = vadd.f32 %v335, %v1337
      %v1339 = vpop.f32.mrf.mxu0
      %1340 = vmatprep.mubr.f32.mxu0 0.0
      %1341 = vmatmul.mubr.f32.gmra.mxu0 %v671
      %v1342 = vpop.f32.mrf.mxu0
      %v1343 = vadd.f32 %v335, %v1342
      %v1344 = vpop.f32.mrf.mxu0
      %1345 = vmatprep.mubr.f32.mxu0 0.0
      %1346 = vmatmul.mubr.f32.gmra.mxu0 %v674
      %v1347 = vpop.f32.mrf.mxu0
      %v1348 = vadd.f32 %v335, %v1347
      %v1349 = vpop.f32.mrf.mxu0
      %1350 = vmatprep.mubr.f32.mxu0 0.0
      %1351 = vmatmul.mubr.f32.gmra.mxu0 %v677
      %v1352 = vpop.f32.mrf.mxu0
      %v1353 = vadd.f32 %v335, %v1352
      %v1354 = vpop.f32.mrf.mxu0
      %1355 = vmatprep.mubr.f32.mxu0 0.0
      %1356 = vmatmul.mubr.f32.gmra.mxu0 %v680
      %v1357 = vpop.f32.mrf.mxu0
      %v1358 = vadd.f32 %v335, %v1357
      %v1359 = vpop.f32.mrf.mxu0
      %1360 = vmatprep.mubr.f32.mxu0 0.0
      %1361 = vmatmul.mubr.f32.gmra.mxu0 %v683
      %v1362 = vpop.f32.mrf.mxu0
      %v1363 = vadd.f32 %v335, %v1362
      %v1364 = vpop.f32.mrf.mxu0
      %1365 = vmatprep.mubr.f32.mxu0 0.0
      %1366 = vmatmul.mubr.f32.gmra.mxu0 %v686
      %v1367 = vpop.f32.mrf.mxu0
      %v1368 = vadd.f32 %v335, %v1367
      %v1369 = vpop.f32.mrf.mxu0
      %1370 = vmatprep.mubr.f32.mxu0 0.0
      %1371 = vmatmul.mubr.f32.gmra.mxu0 %v689
      %v1372 = vpop.f32.mrf.mxu0
      %v1373 = vadd.f32 %v335, %v1372
      %v1374 = vpop.f32.mrf.mxu0
      %1375 = vmatprep.mubr.f32.mxu0 0.0
      %1376 = vmatmul.mubr.f32.gmra.mxu0 %v692
      %v1377 = vpop.f32.mrf.mxu0
      %v1378 = vadd.f32 %v335, %v1377
      %v1379 = vpop.f32.mrf.mxu0
      %1380 = vmatprep.mubr.f32.mxu0 0.0
      %1381 = vmatmul.mubr.f32.gmra.mxu0 %v695
      %v1382 = vpop.f32.mrf.mxu0
      %v1383 = vadd.f32 %v335, %v1382
      %v1384 = vpop.f32.mrf.mxu0
      %1385 = vmatprep.mubr.f32.mxu0 0.0
      %1386 = vmatmul.mubr.f32.gmra.mxu0 %v698
      %v1387 = vpop.f32.mrf.mxu0
      %v1388 = vadd.f32 %v335, %v1387
      %v1389 = vpop.f32.mrf.mxu0
      %1390 = vmatprep.mubr.f32.mxu0 0.0
      %1391 = vmatmul.mubr.f32.gmra.mxu0 %v701
      %v1392 = vpop.f32.mrf.mxu0
      %v1393 = vadd.f32 %v335, %v1392
      %v1394 = vpop.f32.mrf.mxu0
      %1395 = vmatprep.mubr.f32.mxu0 0.0
      %1396 = vmatmul.mubr.f32.gmra.mxu0 %v704
      %v1397 = vpop.f32.mrf.mxu0
      %v1398 = vadd.f32 %v335, %v1397
      %v1399 = vpop.f32.mrf.mxu0
      %1400 = vmatprep.mubr.f32.mxu0 0.0
      %1401 = vmatmul.mubr.f32.gmra.mxu0 %v707
      %v1402 = vpop.f32.mrf.mxu0
      %v1403 = vadd.f32 %v335, %v1402
      %v1404 = vpop.f32.mrf.mxu0
      %1405 = vmatprep.mubr.f32.mxu0 0.0
      %1406 = vmatmul.mubr.f32.gmra.mxu0 %v710
      %v1407 = vpop.f32.mrf.mxu0
      %v1408 = vadd.f32 %v335, %v1407
      %v1409 = vpop.f32.mrf.mxu0
      %1410 = vmatprep.mubr.f32.mxu0 0.0
      %1411 = vmatmul.mubr.f32.gmra.mxu0 %v713
      %v1412 = vpop.f32.mrf.mxu0
      %v1413 = vadd.f32 %v335, %v1412
      %v1414 = vpop.f32.mrf.mxu0
      %1415 = vmatprep.mubr.f32.mxu0 0.0
      %1416 = vmatmul.mubr.f32.gmra.mxu0 %v716
      %v1417 = vpop.f32.mrf.mxu0
      %v1418 = vadd.f32 %v335, %v1417
      %v1419 = vpop.f32.mrf.mxu0
      %1420 = vmatprep.mubr.f32.mxu0 0.0
      %1421 = vmatmul.mubr.f32.gmra.mxu0 %v719
      %v1422 = vpop.f32.mrf.mxu0
      %v1423 = vadd.f32 %v335, %v1422
      %v1424 = vpop.f32.mrf.mxu0
      %1425 = vdwg.mxu0
      %v1426 = vxor.u32 %v788, 2147483648
      %v1427 = vxor.u32 %v793, 2147483648
      %v1428 = vxor.u32 %v798, 2147483648
      %v1429 = vxor.u32 %v803, 2147483648
      %v1430 = vxor.u32 %v808, 2147483648
      %v1431 = vxor.u32 %v813, 2147483648
      %v1432 = vxor.u32 %v818, 2147483648
      %v1433 = vxor.u32 %v823, 2147483648
      %v1434 = vxor.u32 %v828, 2147483648
      %v1435 = vxor.u32 %v833, 2147483648
      %v1436 = vxor.u32 %v838, 2147483648
      %v1437 = vxor.u32 %v843, 2147483648
      %v1438 = vxor.u32 %v848, 2147483648
      %v1439 = vxor.u32 %v853, 2147483648
      %v1440 = vxor.u32 %v858, 2147483648
      %v1441 = vxor.u32 %v863, 2147483648
      %v1442 = vxor.u32 %v868, 2147483648
      %v1443 = vxor.u32 %v873, 2147483648
      %v1444 = vxor.u32 %v878, 2147483648
      %v1445 = vxor.u32 %v883, 2147483648
      %v1446 = vxor.u32 %v888, 2147483648
      %v1447 = vxor.u32 %v893, 2147483648
      %v1448 = vxor.u32 %v898, 2147483648
      %v1449 = vxor.u32 %v903, 2147483648
      %v1450 = vxor.u32 %v908, 2147483648
      %v1451 = vxor.u32 %v913, 2147483648
      %v1452 = vxor.u32 %v918, 2147483648
      %v1453 = vxor.u32 %v923, 2147483648
      %v1454 = vxor.u32 %v928, 2147483648
      %v1455 = vxor.u32 %v933, 2147483648
      %v1456 = vxor.u32 %v938, 2147483648
      %v1457 = vxor.u32 %v943, 2147483648
      %v1458 = vxor.u32 %v948, 2147483648
      %v1459 = vxor.u32 %v953, 2147483648
      %v1460 = vxor.u32 %v958, 2147483648
      %v1461 = vxor.u32 %v963, 2147483648
      %v1462 = vxor.u32 %v968, 2147483648
      %v1463 = vxor.u32 %v973, 2147483648
      %v1464 = vxor.u32 %v978, 2147483648
      %v1465 = vxor.u32 %v983, 2147483648
      %v1466 = vxor.u32 %v988, 2147483648
      %v1467 = vxor.u32 %v993, 2147483648
      %v1468 = vxor.u32 %v998, 2147483648
      %v1469 = vxor.u32 %v1003, 2147483648
      %v1470 = vxor.u32 %v1008, 2147483648
      %v1471 = vxor.u32 %v1013, 2147483648
      %v1472 = vxor.u32 %v1018, 2147483648
      %v1473 = vxor.u32 %v1023, 2147483648
      %v1474 = vxor.u32 %v1028, 2147483648
      %v1475 = vxor.u32 %v1033, 2147483648
      %v1476 = vxor.u32 %v1038, 2147483648
      %v1477 = vxor.u32 %v1043, 2147483648
      %v1478 = vxor.u32 %v1048, 2147483648
      %v1479 = vxor.u32 %v1053, 2147483648
      %v1480 = vxor.u32 %v1058, 2147483648
      %v1481 = vxor.u32 %v1063, 2147483648
      %v1482 = vxor.u32 %v1068, 2147483648
      %v1483 = vxor.u32 %v1073, 2147483648
      %v1484 = vxor.u32 %v1078, 2147483648
      %v1485 = vxor.u32 %v1083, 2147483648
      %v1486 = vxor.u32 %v1088, 2147483648
      %v1487 = vxor.u32 %v1093, 2147483648
      %v1488 = vxor.u32 %v1098, 2147483648
      %v1489 = vxor.u32 %v1103, 2147483648
      %v1490 = vxor.u32 %v1108, 2147483648
      %v1491 = vxor.u32 %v1113, 2147483648
      %v1492 = vxor.u32 %v1118, 2147483648
      %v1493 = vxor.u32 %v1123, 2147483648
      %v1494 = vxor.u32 %v1128, 2147483648
      %v1495 = vxor.u32 %v1133, 2147483648
      %v1496 = vxor.u32 %v1138, 2147483648
      %v1497 = vxor.u32 %v1143, 2147483648
      %v1498 = vxor.u32 %v1148, 2147483648
      %v1499 = vxor.u32 %v1153, 2147483648
      %v1500 = vxor.u32 %v1158, 2147483648
      %v1501 = vxor.u32 %v1163, 2147483648
      %v1502 = vxor.u32 %v1168, 2147483648
      %v1503 = vxor.u32 %v1173, 2147483648
      %v1504 = vxor.u32 %v1178, 2147483648
      %v1505 = vxor.u32 %v1183, 2147483648
      %v1506 = vxor.u32 %v1188, 2147483648
      %v1507 = vxor.u32 %v1193, 2147483648
      %v1508 = vxor.u32 %v1198, 2147483648
      %v1509 = vxor.u32 %v1203, 2147483648
      %v1510 = vxor.u32 %v1208, 2147483648
      %v1511 = vxor.u32 %v1213, 2147483648
      %v1512 = vxor.u32 %v1218, 2147483648
      %v1513 = vxor.u32 %v1223, 2147483648
      %v1514 = vxor.u32 %v1228, 2147483648
      %v1515 = vxor.u32 %v1233, 2147483648
      %v1516 = vxor.u32 %v1238, 2147483648
      %v1517 = vxor.u32 %v1243, 2147483648
      %v1518 = vxor.u32 %v1248, 2147483648
      %v1519 = vxor.u32 %v1253, 2147483648
      %v1520 = vxor.u32 %v1258, 2147483648
      %v1521 = vxor.u32 %v1263, 2147483648
      %v1522 = vxor.u32 %v1268, 2147483648
      %v1523 = vxor.u32 %v1273, 2147483648
      %v1524 = vxor.u32 %v1278, 2147483648
      %v1525 = vxor.u32 %v1283, 2147483648
      %v1526 = vxor.u32 %v1288, 2147483648
      %v1527 = vxor.u32 %v1293, 2147483648
      %v1528 = vxor.u32 %v1298, 2147483648
      %v1529 = vxor.u32 %v1303, 2147483648
      %v1530 = vxor.u32 %v1308, 2147483648
      %v1531 = vxor.u32 %v1313, 2147483648
      %v1532 = vxor.u32 %v1318, 2147483648
      %v1533 = vxor.u32 %v1323, 2147483648
      %v1534 = vxor.u32 %v1328, 2147483648
      %v1535 = vxor.u32 %v1333, 2147483648
      %v1536 = vxor.u32 %v1338, 2147483648
      %v1537 = vxor.u32 %v1343, 2147483648
      %v1538 = vxor.u32 %v1348, 2147483648
      %v1539 = vxor.u32 %v1353, 2147483648
      %v1540 = vxor.u32 %v1358, 2147483648
      %v1541 = vxor.u32 %v1363, 2147483648
      %v1542 = vxor.u32 %v1368, 2147483648
      %v1543 = vxor.u32 %v1373, 2147483648
      %v1544 = vxor.u32 %v1378, 2147483648
      %v1545 = vxor.u32 %v1383, 2147483648
      %v1546 = vxor.u32 %v1388, 2147483648
      %v1547 = vxor.u32 %v1393, 2147483648
      %v1548 = vxor.u32 %v1398, 2147483648
      %v1549 = vxor.u32 %v1403, 2147483648
      %v1550 = vxor.u32 %v1408, 2147483648
      %v1551 = vxor.u32 %v1413, 2147483648
      %v1552 = vxor.u32 %v1418, 2147483648
      %v1553 = vxor.u32 %v1423, 2147483648
      %v1554 = vmul.f32 %v1426, 1.442695
      %v1555 = vpow.pop %v1554
      %v1556 = vmul.f32 %v1427, 1.442695
      %v1557 = vpow.pop %v1556
      %v1558 = vmul.f32 %v1428, 1.442695
      %v1559 = vpow.pop %v1558
      %v1560 = vmul.f32 %v1429, 1.442695
      %v1561 = vpow.pop %v1560
      %v1562 = vmul.f32 %v1430, 1.442695
      %v1563 = vpow.pop %v1562
      %v1564 = vmul.f32 %v1431, 1.442695
      %v1565 = vpow.pop %v1564
      %v1566 = vmul.f32 %v1432, 1.442695
      %v1567 = vpow.pop %v1566
      %v1568 = vmul.f32 %v1433, 1.442695
      %v1569 = vpow.pop %v1568
      %v1570 = vmul.f32 %v1434, 1.442695
      %v1571 = vpow.pop %v1570
      %v1572 = vmul.f32 %v1435, 1.442695
      %v1573 = vpow.pop %v1572
      %v1574 = vmul.f32 %v1436, 1.442695
      %v1575 = vpow.pop %v1574
      %v1576 = vmul.f32 %v1437, 1.442695
      %v1577 = vpow.pop %v1576
      %v1578 = vmul.f32 %v1438, 1.442695
      %v1579 = vpow.pop %v1578
      %v1580 = vmul.f32 %v1439, 1.442695
      %v1581 = vpow.pop %v1580
      %v1582 = vmul.f32 %v1440, 1.442695
      %v1583 = vpow.pop %v1582
      %v1584 = vmul.f32 %v1441, 1.442695
      %v1585 = vpow.pop %v1584
      %v1586 = vmul.f32 %v1442, 1.442695
      %v1587 = vpow.pop %v1586
      %v1588 = vmul.f32 %v1443, 1.442695
      %v1589 = vpow.pop %v1588
      %v1590 = vmul.f32 %v1444, 1.442695
      %v1591 = vpow.pop %v1590
      %v1592 = vmul.f32 %v1445, 1.442695
      %v1593 = vpow.pop %v1592
      %v1594 = vmul.f32 %v1446, 1.442695
      %v1595 = vpow.pop %v1594
      %v1596 = vmul.f32 %v1447, 1.442695
      %v1597 = vpow.pop %v1596
      %v1598 = vmul.f32 %v1448, 1.442695
      %v1599 = vpow.pop %v1598
      %v1600 = vmul.f32 %v1449, 1.442695
      %v1601 = vpow.pop %v1600
      %v1602 = vmul.f32 %v1450, 1.442695
      %v1603 = vpow.pop %v1602
      %v1604 = vmul.f32 %v1451, 1.442695
      %v1605 = vpow.pop %v1604
      %v1606 = vmul.f32 %v1452, 1.442695
      %v1607 = vpow.pop %v1606
      %v1608 = vmul.f32 %v1453, 1.442695
      %v1609 = vpow.pop %v1608
      %v1610 = vmul.f32 %v1454, 1.442695
      %v1611 = vpow.pop %v1610
      %v1612 = vmul.f32 %v1455, 1.442695
      %v1613 = vpow.pop %v1612
      %v1614 = vmul.f32 %v1456, 1.442695
      %v1615 = vpow.pop %v1614
      %v1616 = vmul.f32 %v1457, 1.442695
      %v1617 = vpow.pop %v1616
      %v1618 = vmul.f32 %v1458, 1.442695
      %v1619 = vpow.pop %v1618
      %v1620 = vmul.f32 %v1459, 1.442695
      %v1621 = vpow.pop %v1620
      %v1622 = vmul.f32 %v1460, 1.442695
      %v1623 = vpow.pop %v1622
      %v1624 = vmul.f32 %v1461, 1.442695
      %v1625 = vpow.pop %v1624
      %v1626 = vmul.f32 %v1462, 1.442695
      %v1627 = vpow.pop %v1626
      %v1628 = vmul.f32 %v1463, 1.442695
      %v1629 = vpow.pop %v1628
      %v1630 = vmul.f32 %v1464, 1.442695
      %v1631 = vpow.pop %v1630
      %v1632 = vmul.f32 %v1465, 1.442695
      %v1633 = vpow.pop %v1632
      %v1634 = vmul.f32 %v1466, 1.442695
      %v1635 = vpow.pop %v1634
      %v1636 = vmul.f32 %v1467, 1.442695
      %v1637 = vpow.pop %v1636
      %v1638 = vmul.f32 %v1468, 1.442695
      %v1639 = vpow.pop %v1638
      %v1640 = vmul.f32 %v1469, 1.442695
      %v1641 = vpow.pop %v1640
      %v1642 = vmul.f32 %v1470, 1.442695
      %v1643 = vpow.pop %v1642
      %v1644 = vmul.f32 %v1471, 1.442695
      %v1645 = vpow.pop %v1644
      %v1646 = vmul.f32 %v1472, 1.442695
      %v1647 = vpow.pop %v1646
      %v1648 = vmul.f32 %v1473, 1.442695
      %v1649 = vpow.pop %v1648
      %v1650 = vmul.f32 %v1474, 1.442695
      %v1651 = vpow.pop %v1650
      %v1652 = vmul.f32 %v1475, 1.442695
      %v1653 = vpow.pop %v1652
      %v1654 = vmul.f32 %v1476, 1.442695
      %v1655 = vpow.pop %v1654
      %v1656 = vmul.f32 %v1477, 1.442695
      %v1657 = vpow.pop %v1656
      %v1658 = vmul.f32 %v1478, 1.442695
      %v1659 = vpow.pop %v1658
      %v1660 = vmul.f32 %v1479, 1.442695
      %v1661 = vpow.pop %v1660
      %v1662 = vmul.f32 %v1480, 1.442695
      %v1663 = vpow.pop %v1662
      %v1664 = vmul.f32 %v1481, 1.442695
      %v1665 = vpow.pop %v1664
      %v1666 = vmul.f32 %v1482, 1.442695
      %v1667 = vpow.pop %v1666
      %v1668 = vmul.f32 %v1483, 1.442695
      %v1669 = vpow.pop %v1668
      %v1670 = vmul.f32 %v1484, 1.442695
      %v1671 = vpow.pop %v1670
      %v1672 = vmul.f32 %v1485, 1.442695
      %v1673 = vpow.pop %v1672
      %v1674 = vmul.f32 %v1486, 1.442695
      %v1675 = vpow.pop %v1674
      %v1676 = vmul.f32 %v1487, 1.442695
      %v1677 = vpow.pop %v1676
      %v1678 = vmul.f32 %v1488, 1.442695
      %v1679 = vpow.pop %v1678
      %v1680 = vmul.f32 %v1489, 1.442695
      %v1681 = vpow.pop %v1680
      %v1682 = vmul.f32 %v1490, 1.442695
      %v1683 = vpow.pop %v1682
      %v1684 = vmul.f32 %v1491, 1.442695
      %v1685 = vpow.pop %v1684
      %v1686 = vmul.f32 %v1492, 1.442695
      %v1687 = vpow.pop %v1686
      %v1688 = vmul.f32 %v1493, 1.442695
      %v1689 = vpow.pop %v1688
      %v1690 = vmul.f32 %v1494, 1.442695
      %v1691 = vpow.pop %v1690
      %v1692 = vmul.f32 %v1495, 1.442695
      %v1693 = vpow.pop %v1692
      %v1694 = vmul.f32 %v1496, 1.442695
      %v1695 = vpow.pop %v1694
      %v1696 = vmul.f32 %v1497, 1.442695
      %v1697 = vpow.pop %v1696
      %v1698 = vmul.f32 %v1498, 1.442695
      %v1699 = vpow.pop %v1698
      %v1700 = vmul.f32 %v1499, 1.442695
      %v1701 = vpow.pop %v1700
      %v1702 = vmul.f32 %v1500, 1.442695
      %v1703 = vpow.pop %v1702
      %v1704 = vmul.f32 %v1501, 1.442695
      %v1705 = vpow.pop %v1704
      %v1706 = vmul.f32 %v1502, 1.442695
      %v1707 = vpow.pop %v1706
      %v1708 = vmul.f32 %v1503, 1.442695
      %v1709 = vpow.pop %v1708
      %v1710 = vmul.f32 %v1504, 1.442695
      %v1711 = vpow.pop %v1710
      %v1712 = vmul.f32 %v1505, 1.442695
      %v1713 = vpow.pop %v1712
      %v1714 = vmul.f32 %v1506, 1.442695
      %v1715 = vpow.pop %v1714
      %v1716 = vmul.f32 %v1507, 1.442695
      %v1717 = vpow.pop %v1716
      %v1718 = vmul.f32 %v1508, 1.442695
      %v1719 = vpow.pop %v1718
      %v1720 = vmul.f32 %v1509, 1.442695
      %v1721 = vpow.pop %v1720
      %v1722 = vmul.f32 %v1510, 1.442695
      %v1723 = vpow.pop %v1722
      %v1724 = vmul.f32 %v1511, 1.442695
      %v1725 = vpow.pop %v1724
      %v1726 = vmul.f32 %v1512, 1.442695
      %v1727 = vpow.pop %v1726
      %v1728 = vmul.f32 %v1513, 1.442695
      %v1729 = vpow.pop %v1728
      %v1730 = vmul.f32 %v1514, 1.442695
      %v1731 = vpow.pop %v1730
      %v1732 = vmul.f32 %v1515, 1.442695
      %v1733 = vpow.pop %v1732
      %v1734 = vmul.f32 %v1516, 1.442695
      %v1735 = vpow.pop %v1734
      %v1736 = vmul.f32 %v1517, 1.442695
      %v1737 = vpow.pop %v1736
      %v1738 = vmul.f32 %v1518, 1.442695
      %v1739 = vpow.pop %v1738
      %v1740 = vmul.f32 %v1519, 1.442695
      %v1741 = vpow.pop %v1740
      %v1742 = vmul.f32 %v1520, 1.442695
      %v1743 = vpow.pop %v1742
      %v1744 = vmul.f32 %v1521, 1.442695
      %v1745 = vpow.pop %v1744
      %v1746 = vmul.f32 %v1522, 1.442695
      %v1747 = vpow.pop %v1746
      %v1748 = vmul.f32 %v1523, 1.442695
      %v1749 = vpow.pop %v1748
      %v1750 = vmul.f32 %v1524, 1.442695
      %v1751 = vpow.pop %v1750
      %v1752 = vmul.f32 %v1525, 1.442695
      %v1753 = vpow.pop %v1752
      %v1754 = vmul.f32 %v1526, 1.442695
      %v1755 = vpow.pop %v1754
      %v1756 = vmul.f32 %v1527, 1.442695
      %v1757 = vpow.pop %v1756
      %v1758 = vmul.f32 %v1528, 1.442695
      %v1759 = vpow.pop %v1758
      %v1760 = vmul.f32 %v1529, 1.442695
      %v1761 = vpow.pop %v1760
      %v1762 = vmul.f32 %v1530, 1.442695
      %v1763 = vpow.pop %v1762
      %v1764 = vmul.f32 %v1531, 1.442695
      %v1765 = vpow.pop %v1764
      %v1766 = vmul.f32 %v1532, 1.442695
      %v1767 = vpow.pop %v1766
      %v1768 = vmul.f32 %v1533, 1.442695
      %v1769 = vpow.pop %v1768
      %v1770 = vmul.f32 %v1534, 1.442695
      %v1771 = vpow.pop %v1770
      %v1772 = vmul.f32 %v1535, 1.442695
      %v1773 = vpow.pop %v1772
      %v1774 = vmul.f32 %v1536, 1.442695
      %v1775 = vpow.pop %v1774
      %v1776 = vmul.f32 %v1537, 1.442695
      %v1777 = vpow.pop %v1776
      %v1778 = vmul.f32 %v1538, 1.442695
      %v1779 = vpow.pop %v1778
      %v1780 = vmul.f32 %v1539, 1.442695
      %v1781 = vpow.pop %v1780
      %v1782 = vmul.f32 %v1540, 1.442695
      %v1783 = vpow.pop %v1782
      %v1784 = vmul.f32 %v1541, 1.442695
      %v1785 = vpow.pop %v1784
      %v1786 = vmul.f32 %v1542, 1.442695
      %v1787 = vpow.pop %v1786
      %v1788 = vmul.f32 %v1543, 1.442695
      %v1789 = vpow.pop %v1788
      %v1790 = vmul.f32 %v1544, 1.442695
      %v1791 = vpow.pop %v1790
      %v1792 = vmul.f32 %v1545, 1.442695
      %v1793 = vpow.pop %v1792
      %v1794 = vmul.f32 %v1546, 1.442695
      %v1795 = vpow.pop %v1794
      %v1796 = vmul.f32 %v1547, 1.442695
      %v1797 = vpow.pop %v1796
      %v1798 = vmul.f32 %v1548, 1.442695
      %v1799 = vpow.pop %v1798
      %v1800 = vmul.f32 %v1549, 1.442695
      %v1801 = vpow.pop %v1800
      %v1802 = vmul.f32 %v1550, 1.442695
      %v1803 = vpow.pop %v1802
      %v1804 = vmul.f32 %v1551, 1.442695
      %v1805 = vpow.pop %v1804
      %v1806 = vmul.f32 %v1552, 1.442695
      %v1807 = vpow.pop %v1806
      %v1808 = vmul.f32 %v1553, 1.442695
      %v1809 = vpow.pop %v1808
      %v1810 = vadd.f32 %v1555, 1.0
      %v1811 = vadd.f32 %v1557, 1.0
      %v1812 = vadd.f32 %v1559, 1.0
      %v1813 = vadd.f32 %v1561, 1.0
      %v1814 = vadd.f32 %v1563, 1.0
      %v1815 = vadd.f32 %v1565, 1.0
      %v1816 = vadd.f32 %v1567, 1.0
      %v1817 = vadd.f32 %v1569, 1.0
      %v1818 = vadd.f32 %v1571, 1.0
      %v1819 = vadd.f32 %v1573, 1.0
      %v1820 = vadd.f32 %v1575, 1.0
      %v1821 = vadd.f32 %v1577, 1.0
      %v1822 = vadd.f32 %v1579, 1.0
      %v1823 = vadd.f32 %v1581, 1.0
      %v1824 = vadd.f32 %v1583, 1.0
      %v1825 = vadd.f32 %v1585, 1.0
      %v1826 = vadd.f32 %v1587, 1.0
      %v1827 = vadd.f32 %v1589, 1.0
      %v1828 = vadd.f32 %v1591, 1.0
      %v1829 = vadd.f32 %v1593, 1.0
      %v1830 = vadd.f32 %v1595, 1.0
      %v1831 = vadd.f32 %v1597, 1.0
      %v1832 = vadd.f32 %v1599, 1.0
      %v1833 = vadd.f32 %v1601, 1.0
      %v1834 = vadd.f32 %v1603, 1.0
      %v1835 = vadd.f32 %v1605, 1.0
      %v1836 = vadd.f32 %v1607, 1.0
      %v1837 = vadd.f32 %v1609, 1.0
      %v1838 = vadd.f32 %v1611, 1.0
      %v1839 = vadd.f32 %v1613, 1.0
      %v1840 = vadd.f32 %v1615, 1.0
      %v1841 = vadd.f32 %v1617, 1.0
      %v1842 = vadd.f32 %v1619, 1.0
      %v1843 = vadd.f32 %v1621, 1.0
      %v1844 = vadd.f32 %v1623, 1.0
      %v1845 = vadd.f32 %v1625, 1.0
      %v1846 = vadd.f32 %v1627, 1.0
      %v1847 = vadd.f32 %v1629, 1.0
      %v1848 = vadd.f32 %v1631, 1.0
      %v1849 = vadd.f32 %v1633, 1.0
      %v1850 = vadd.f32 %v1635, 1.0
      %v1851 = vadd.f32 %v1637, 1.0
      %v1852 = vadd.f32 %v1639, 1.0
      %v1853 = vadd.f32 %v1641, 1.0
      %v1854 = vadd.f32 %v1643, 1.0
      %v1855 = vadd.f32 %v1645, 1.0
      %v1856 = vadd.f32 %v1647, 1.0
      %v1857 = vadd.f32 %v1649, 1.0
      %v1858 = vadd.f32 %v1651, 1.0
      %v1859 = vadd.f32 %v1653, 1.0
      %v1860 = vadd.f32 %v1655, 1.0
      %v1861 = vadd.f32 %v1657, 1.0
      %v1862 = vadd.f32 %v1659, 1.0
      %v1863 = vadd.f32 %v1661, 1.0
      %v1864 = vadd.f32 %v1663, 1.0
      %v1865 = vadd.f32 %v1665, 1.0
      %v1866 = vadd.f32 %v1667, 1.0
      %v1867 = vadd.f32 %v1669, 1.0
      %v1868 = vadd.f32 %v1671, 1.0
      %v1869 = vadd.f32 %v1673, 1.0
      %v1870 = vadd.f32 %v1675, 1.0
      %v1871 = vadd.f32 %v1677, 1.0
      %v1872 = vadd.f32 %v1679, 1.0
      %v1873 = vadd.f32 %v1681, 1.0
      %v1874 = vadd.f32 %v1683, 1.0
      %v1875 = vadd.f32 %v1685, 1.0
      %v1876 = vadd.f32 %v1687, 1.0
      %v1877 = vadd.f32 %v1689, 1.0
      %v1878 = vadd.f32 %v1691, 1.0
      %v1879 = vadd.f32 %v1693, 1.0
      %v1880 = vadd.f32 %v1695, 1.0
      %v1881 = vadd.f32 %v1697, 1.0
      %v1882 = vadd.f32 %v1699, 1.0
      %v1883 = vadd.f32 %v1701, 1.0
      %v1884 = vadd.f32 %v1703, 1.0
      %v1885 = vadd.f32 %v1705, 1.0
      %v1886 = vadd.f32 %v1707, 1.0
      %v1887 = vadd.f32 %v1709, 1.0
      %v1888 = vadd.f32 %v1711, 1.0
      %v1889 = vadd.f32 %v1713, 1.0
      %v1890 = vadd.f32 %v1715, 1.0
      %v1891 = vadd.f32 %v1717, 1.0
      %v1892 = vadd.f32 %v1719, 1.0
      %v1893 = vadd.f32 %v1721, 1.0
      %v1894 = vadd.f32 %v1723, 1.0
      %v1895 = vadd.f32 %v1725, 1.0
      %v1896 = vadd.f32 %v1727, 1.0
      %v1897 = vadd.f32 %v1729, 1.0
      %v1898 = vadd.f32 %v1731, 1.0
      %v1899 = vadd.f32 %v1733, 1.0
      %v1900 = vadd.f32 %v1735, 1.0
      %v1901 = vadd.f32 %v1737, 1.0
      %v1902 = vadd.f32 %v1739, 1.0
      %v1903 = vadd.f32 %v1741, 1.0
      %v1904 = vadd.f32 %v1743, 1.0
      %v1905 = vadd.f32 %v1745, 1.0
      %v1906 = vadd.f32 %v1747, 1.0
      %v1907 = vadd.f32 %v1749, 1.0
      %v1908 = vadd.f32 %v1751, 1.0
      %v1909 = vadd.f32 %v1753, 1.0
      %v1910 = vadd.f32 %v1755, 1.0
      %v1911 = vadd.f32 %v1757, 1.0
      %v1912 = vadd.f32 %v1759, 1.0
      %v1913 = vadd.f32 %v1761, 1.0
      %v1914 = vadd.f32 %v1763, 1.0
      %v1915 = vadd.f32 %v1765, 1.0
      %v1916 = vadd.f32 %v1767, 1.0
      %v1917 = vadd.f32 %v1769, 1.0
      %v1918 = vadd.f32 %v1771, 1.0
      %v1919 = vadd.f32 %v1773, 1.0
      %v1920 = vadd.f32 %v1775, 1.0
      %v1921 = vadd.f32 %v1777, 1.0
      %v1922 = vadd.f32 %v1779, 1.0
      %v1923 = vadd.f32 %v1781, 1.0
      %v1924 = vadd.f32 %v1783, 1.0
      %v1925 = vadd.f32 %v1785, 1.0
      %v1926 = vadd.f32 %v1787, 1.0
      %v1927 = vadd.f32 %v1789, 1.0
      %v1928 = vadd.f32 %v1791, 1.0
      %v1929 = vadd.f32 %v1793, 1.0
      %v1930 = vadd.f32 %v1795, 1.0
      %v1931 = vadd.f32 %v1797, 1.0
      %v1932 = vadd.f32 %v1799, 1.0
      %v1933 = vadd.f32 %v1801, 1.0
      %v1934 = vadd.f32 %v1803, 1.0
      %v1935 = vadd.f32 %v1805, 1.0
      %v1936 = vadd.f32 %v1807, 1.0
      %v1937 = vadd.f32 %v1809, 1.0
      %v1938 = vrcp.pop %v1810
      %v1939 = vmul.f32 1.0, %v1938
      %v1940 = vrcp.pop %v1811
      %v1941 = vmul.f32 1.0, %v1940
      %v1942 = vrcp.pop %v1812
      %v1943 = vmul.f32 1.0, %v1942
      %v1944 = vrcp.pop %v1813
      %v1945 = vmul.f32 1.0, %v1944
      %v1946 = vrcp.pop %v1814
      %v1947 = vmul.f32 1.0, %v1946
      %v1948 = vrcp.pop %v1815
      %v1949 = vmul.f32 1.0, %v1948
      %v1950 = vrcp.pop %v1816
      %v1951 = vmul.f32 1.0, %v1950
      %v1952 = vrcp.pop %v1817
      %v1953 = vmul.f32 1.0, %v1952
      %v1954 = vrcp.pop %v1818
      %v1955 = vmul.f32 1.0, %v1954
      %v1956 = vrcp.pop %v1819
      %v1957 = vmul.f32 1.0, %v1956
      %v1958 = vrcp.pop %v1820
      %v1959 = vmul.f32 1.0, %v1958
      %v1960 = vrcp.pop %v1821
      %v1961 = vmul.f32 1.0, %v1960
      %v1962 = vrcp.pop %v1822
      %v1963 = vmul.f32 1.0, %v1962
      %v1964 = vrcp.pop %v1823
      %v1965 = vmul.f32 1.0, %v1964
      %v1966 = vrcp.pop %v1824
      %v1967 = vmul.f32 1.0, %v1966
      %v1968 = vrcp.pop %v1825
      %v1969 = vmul.f32 1.0, %v1968
      %v1970 = vrcp.pop %v1826
      %v1971 = vmul.f32 1.0, %v1970
      %v1972 = vrcp.pop %v1827
      %v1973 = vmul.f32 1.0, %v1972
      %v1974 = vrcp.pop %v1828
      %v1975 = vmul.f32 1.0, %v1974
      %v1976 = vrcp.pop %v1829
      %v1977 = vmul.f32 1.0, %v1976
      %v1978 = vrcp.pop %v1830
      %v1979 = vmul.f32 1.0, %v1978
      %v1980 = vrcp.pop %v1831
      %v1981 = vmul.f32 1.0, %v1980
      %v1982 = vrcp.pop %v1832
      %v1983 = vmul.f32 1.0, %v1982
      %v1984 = vrcp.pop %v1833
      %v1985 = vmul.f32 1.0, %v1984
      %v1986 = vrcp.pop %v1834
      %v1987 = vmul.f32 1.0, %v1986
      %v1988 = vrcp.pop %v1835
      %v1989 = vmul.f32 1.0, %v1988
      %v1990 = vrcp.pop %v1836
      %v1991 = vmul.f32 1.0, %v1990
      %v1992 = vrcp.pop %v1837
      %v1993 = vmul.f32 1.0, %v1992
      %v1994 = vrcp.pop %v1838
      %v1995 = vmul.f32 1.0, %v1994
      %v1996 = vrcp.pop %v1839
      %v1997 = vmul.f32 1.0, %v1996
      %v1998 = vrcp.pop %v1840
      %v1999 = vmul.f32 1.0, %v1998
      %v2000 = vrcp.pop %v1841
      %v2001 = vmul.f32 1.0, %v2000
      %v2002 = vrcp.pop %v1842
      %v2003 = vmul.f32 1.0, %v2002
      %v2004 = vrcp.pop %v1843
      %v2005 = vmul.f32 1.0, %v2004
      %v2006 = vrcp.pop %v1844
      %v2007 = vmul.f32 1.0, %v2006
      %v2008 = vrcp.pop %v1845
      %v2009 = vmul.f32 1.0, %v2008
      %v2010 = vrcp.pop %v1846
      %v2011 = vmul.f32 1.0, %v2010
      %v2012 = vrcp.pop %v1847
      %v2013 = vmul.f32 1.0, %v2012
      %v2014 = vrcp.pop %v1848
      %v2015 = vmul.f32 1.0, %v2014
      %v2016 = vrcp.pop %v1849
      %v2017 = vmul.f32 1.0, %v2016
      %v2018 = vrcp.pop %v1850
      %v2019 = vmul.f32 1.0, %v2018
      %v2020 = vrcp.pop %v1851
      %v2021 = vmul.f32 1.0, %v2020
      %v2022 = vrcp.pop %v1852
      %v2023 = vmul.f32 1.0, %v2022
      %v2024 = vrcp.pop %v1853
      %v2025 = vmul.f32 1.0, %v2024
      %v2026 = vrcp.pop %v1854
      %v2027 = vmul.f32 1.0, %v2026
      %v2028 = vrcp.pop %v1855
      %v2029 = vmul.f32 1.0, %v2028
      %v2030 = vrcp.pop %v1856
      %v2031 = vmul.f32 1.0, %v2030
      %v2032 = vrcp.pop %v1857
      %v2033 = vmul.f32 1.0, %v2032
      %v2034 = vrcp.pop %v1858
      %v2035 = vmul.f32 1.0, %v2034
      %v2036 = vrcp.pop %v1859
      %v2037 = vmul.f32 1.0, %v2036
      %v2038 = vrcp.pop %v1860
      %v2039 = vmul.f32 1.0, %v2038
      %v2040 = vrcp.pop %v1861
      %v2041 = vmul.f32 1.0, %v2040
      %v2042 = vrcp.pop %v1862
      %v2043 = vmul.f32 1.0, %v2042
      %v2044 = vrcp.pop %v1863
      %v2045 = vmul.f32 1.0, %v2044
      %v2046 = vrcp.pop %v1864
      %v2047 = vmul.f32 1.0, %v2046
      %v2048 = vrcp.pop %v1865
      %v2049 = vmul.f32 1.0, %v2048
      %v2050 = vrcp.pop %v1866
      %v2051 = vmul.f32 1.0, %v2050
      %v2052 = vrcp.pop %v1867
      %v2053 = vmul.f32 1.0, %v2052
      %v2054 = vrcp.pop %v1868
      %v2055 = vmul.f32 1.0, %v2054
      %v2056 = vrcp.pop %v1869
      %v2057 = vmul.f32 1.0, %v2056
      %v2058 = vrcp.pop %v1870
      %v2059 = vmul.f32 1.0, %v2058
      %v2060 = vrcp.pop %v1871
      %v2061 = vmul.f32 1.0, %v2060
      %v2062 = vrcp.pop %v1872
      %v2063 = vmul.f32 1.0, %v2062
      %v2064 = vrcp.pop %v1873
      %v2065 = vmul.f32 1.0, %v2064
      %v2066 = vrcp.pop %v1874
      %v2067 = vmul.f32 1.0, %v2066
      %v2068 = vrcp.pop %v1875
      %v2069 = vmul.f32 1.0, %v2068
      %v2070 = vrcp.pop %v1876
      %v2071 = vmul.f32 1.0, %v2070
      %v2072 = vrcp.pop %v1877
      %v2073 = vmul.f32 1.0, %v2072
      %v2074 = vrcp.pop %v1878
      %v2075 = vmul.f32 1.0, %v2074
      %v2076 = vrcp.pop %v1879
      %v2077 = vmul.f32 1.0, %v2076
      %v2078 = vrcp.pop %v1880
      %v2079 = vmul.f32 1.0, %v2078
      %v2080 = vrcp.pop %v1881
      %v2081 = vmul.f32 1.0, %v2080
      %v2082 = vrcp.pop %v1882
      %v2083 = vmul.f32 1.0, %v2082
      %v2084 = vrcp.pop %v1883
      %v2085 = vmul.f32 1.0, %v2084
      %v2086 = vrcp.pop %v1884
      %v2087 = vmul.f32 1.0, %v2086
      %v2088 = vrcp.pop %v1885
      %v2089 = vmul.f32 1.0, %v2088
      %v2090 = vrcp.pop %v1886
      %v2091 = vmul.f32 1.0, %v2090
      %v2092 = vrcp.pop %v1887
      %v2093 = vmul.f32 1.0, %v2092
      %v2094 = vrcp.pop %v1888
      %v2095 = vmul.f32 1.0, %v2094
      %v2096 = vrcp.pop %v1889
      %v2097 = vmul.f32 1.0, %v2096
      %v2098 = vrcp.pop %v1890
      %v2099 = vmul.f32 1.0, %v2098
      %v2100 = vrcp.pop %v1891
      %v2101 = vmul.f32 1.0, %v2100
      %v2102 = vrcp.pop %v1892
      %v2103 = vmul.f32 1.0, %v2102
      %v2104 = vrcp.pop %v1893
      %v2105 = vmul.f32 1.0, %v2104
      %v2106 = vrcp.pop %v1894
      %v2107 = vmul.f32 1.0, %v2106
      %v2108 = vrcp.pop %v1895
      %v2109 = vmul.f32 1.0, %v2108
      %v2110 = vrcp.pop %v1896
      %v2111 = vmul.f32 1.0, %v2110
      %v2112 = vrcp.pop %v1897
      %v2113 = vmul.f32 1.0, %v2112
      %v2114 = vrcp.pop %v1898
      %v2115 = vmul.f32 1.0, %v2114
      %v2116 = vrcp.pop %v1899
      %v2117 = vmul.f32 1.0, %v2116
      %v2118 = vrcp.pop %v1900
      %v2119 = vmul.f32 1.0, %v2118
      %v2120 = vrcp.pop %v1901
      %v2121 = vmul.f32 1.0, %v2120
      %v2122 = vrcp.pop %v1902
      %v2123 = vmul.f32 1.0, %v2122
      %v2124 = vrcp.pop %v1903
      %v2125 = vmul.f32 1.0, %v2124
      %v2126 = vrcp.pop %v1904
      %v2127 = vmul.f32 1.0, %v2126
      %v2128 = vrcp.pop %v1905
      %v2129 = vmul.f32 1.0, %v2128
      %v2130 = vrcp.pop %v1906
      %v2131 = vmul.f32 1.0, %v2130
      %v2132 = vrcp.pop %v1907
      %v2133 = vmul.f32 1.0, %v2132
      %v2134 = vrcp.pop %v1908
      %v2135 = vmul.f32 1.0, %v2134
      %v2136 = vrcp.pop %v1909
      %v2137 = vmul.f32 1.0, %v2136
      %v2138 = vrcp.pop %v1910
      %v2139 = vmul.f32 1.0, %v2138
      %v2140 = vrcp.pop %v1911
      %v2141 = vmul.f32 1.0, %v2140
      %v2142 = vrcp.pop %v1912
      %v2143 = vmul.f32 1.0, %v2142
      %v2144 = vrcp.pop %v1913
      %v2145 = vmul.f32 1.0, %v2144
      %v2146 = vrcp.pop %v1914
      %v2147 = vmul.f32 1.0, %v2146
      %v2148 = vrcp.pop %v1915
      %v2149 = vmul.f32 1.0, %v2148
      %v2150 = vrcp.pop %v1916
      %v2151 = vmul.f32 1.0, %v2150
      %v2152 = vrcp.pop %v1917
      %v2153 = vmul.f32 1.0, %v2152
      %v2154 = vrcp.pop %v1918
      %v2155 = vmul.f32 1.0, %v2154
      %v2156 = vrcp.pop %v1919
      %v2157 = vmul.f32 1.0, %v2156
      %v2158 = vrcp.pop %v1920
      %v2159 = vmul.f32 1.0, %v2158
      %v2160 = vrcp.pop %v1921
      %v2161 = vmul.f32 1.0, %v2160
      %v2162 = vrcp.pop %v1922
      %v2163 = vmul.f32 1.0, %v2162
      %v2164 = vrcp.pop %v1923
      %v2165 = vmul.f32 1.0, %v2164
      %v2166 = vrcp.pop %v1924
      %v2167 = vmul.f32 1.0, %v2166
      %v2168 = vrcp.pop %v1925
      %v2169 = vmul.f32 1.0, %v2168
      %v2170 = vrcp.pop %v1926
      %v2171 = vmul.f32 1.0, %v2170
      %v2172 = vrcp.pop %v1927
      %v2173 = vmul.f32 1.0, %v2172
      %v2174 = vrcp.pop %v1928
      %v2175 = vmul.f32 1.0, %v2174
      %v2176 = vrcp.pop %v1929
      %v2177 = vmul.f32 1.0, %v2176
      %v2178 = vrcp.pop %v1930
      %v2179 = vmul.f32 1.0, %v2178
      %v2180 = vrcp.pop %v1931
      %v2181 = vmul.f32 1.0, %v2180
      %v2182 = vrcp.pop %v1932
      %v2183 = vmul.f32 1.0, %v2182
      %v2184 = vrcp.pop %v1933
      %v2185 = vmul.f32 1.0, %v2184
      %v2186 = vrcp.pop %v1934
      %v2187 = vmul.f32 1.0, %v2186
      %v2188 = vrcp.pop %v1935
      %v2189 = vmul.f32 1.0, %v2188
      %v2190 = vrcp.pop %v1936
      %v2191 = vmul.f32 1.0, %v2190
      %v2192 = vrcp.pop %v1937
      %v2193 = vmul.f32 1.0, %v2192
      %v2194 = vmul.f32 %v788, %v1939
      %v2195 = vmul.f32 %v793, %v1941
      %v2196 = vmul.f32 %v798, %v1943
      %v2197 = vmul.f32 %v803, %v1945
      %v2198 = vmul.f32 %v808, %v1947
      %v2199 = vmul.f32 %v813, %v1949
      %v2200 = vmul.f32 %v818, %v1951
      %v2201 = vmul.f32 %v823, %v1953
      %v2202 = vmul.f32 %v828, %v1955
      %v2203 = vmul.f32 %v833, %v1957
      %v2204 = vmul.f32 %v838, %v1959
      %v2205 = vmul.f32 %v843, %v1961
      %v2206 = vmul.f32 %v848, %v1963
      %v2207 = vmul.f32 %v853, %v1965
      %v2208 = vmul.f32 %v858, %v1967
      %v2209 = vmul.f32 %v863, %v1969
      %v2210 = vmul.f32 %v868, %v1971
      %v2211 = vmul.f32 %v873, %v1973
      %v2212 = vmul.f32 %v878, %v1975
      %v2213 = vmul.f32 %v883, %v1977
      %v2214 = vmul.f32 %v888, %v1979
      %v2215 = vmul.f32 %v893, %v1981
      %v2216 = vmul.f32 %v898, %v1983
      %v2217 = vmul.f32 %v903, %v1985
      %v2218 = vmul.f32 %v908, %v1987
      %v2219 = vmul.f32 %v913, %v1989
      %v2220 = vmul.f32 %v918, %v1991
      %v2221 = vmul.f32 %v923, %v1993
      %v2222 = vmul.f32 %v928, %v1995
      %v2223 = vmul.f32 %v933, %v1997
      %v2224 = vmul.f32 %v938, %v1999
      %v2225 = vmul.f32 %v943, %v2001
      %v2226 = vmul.f32 %v948, %v2003
      %v2227 = vmul.f32 %v953, %v2005
      %v2228 = vmul.f32 %v958, %v2007
      %v2229 = vmul.f32 %v963, %v2009
      %v2230 = vmul.f32 %v968, %v2011
      %v2231 = vmul.f32 %v973, %v2013
      %v2232 = vmul.f32 %v978, %v2015
      %v2233 = vmul.f32 %v983, %v2017
      %v2234 = vmul.f32 %v988, %v2019
      %v2235 = vmul.f32 %v993, %v2021
      %v2236 = vmul.f32 %v998, %v2023
      %v2237 = vmul.f32 %v1003, %v2025
      %v2238 = vmul.f32 %v1008, %v2027
      %v2239 = vmul.f32 %v1013, %v2029
      %v2240 = vmul.f32 %v1018, %v2031
      %v2241 = vmul.f32 %v1023, %v2033
      %v2242 = vmul.f32 %v1028, %v2035
      %v2243 = vmul.f32 %v1033, %v2037
      %v2244 = vmul.f32 %v1038, %v2039
      %v2245 = vmul.f32 %v1043, %v2041
      %v2246 = vmul.f32 %v1048, %v2043
      %v2247 = vmul.f32 %v1053, %v2045
      %v2248 = vmul.f32 %v1058, %v2047
      %v2249 = vmul.f32 %v1063, %v2049
      %v2250 = vmul.f32 %v1068, %v2051
      %v2251 = vmul.f32 %v1073, %v2053
      %v2252 = vmul.f32 %v1078, %v2055
      %v2253 = vmul.f32 %v1083, %v2057
      %v2254 = vmul.f32 %v1088, %v2059
      %v2255 = vmul.f32 %v1093, %v2061
      %v2256 = vmul.f32 %v1098, %v2063
      %v2257 = vmul.f32 %v1103, %v2065
      %v2258 = vmul.f32 %v1108, %v2067
      %v2259 = vmul.f32 %v1113, %v2069
      %v2260 = vmul.f32 %v1118, %v2071
      %v2261 = vmul.f32 %v1123, %v2073
      %v2262 = vmul.f32 %v1128, %v2075
      %v2263 = vmul.f32 %v1133, %v2077
      %v2264 = vmul.f32 %v1138, %v2079
      %v2265 = vmul.f32 %v1143, %v2081
      %v2266 = vmul.f32 %v1148, %v2083
      %v2267 = vmul.f32 %v1153, %v2085
      %v2268 = vmul.f32 %v1158, %v2087
      %v2269 = vmul.f32 %v1163, %v2089
      %v2270 = vmul.f32 %v1168, %v2091
      %v2271 = vmul.f32 %v1173, %v2093
      %v2272 = vmul.f32 %v1178, %v2095
      %v2273 = vmul.f32 %v1183, %v2097
      %v2274 = vmul.f32 %v1188, %v2099
      %v2275 = vmul.f32 %v1193, %v2101
      %v2276 = vmul.f32 %v1198, %v2103
      %v2277 = vmul.f32 %v1203, %v2105
      %v2278 = vmul.f32 %v1208, %v2107
      %v2279 = vmul.f32 %v1213, %v2109
      %v2280 = vmul.f32 %v1218, %v2111
      %v2281 = vmul.f32 %v1223, %v2113
      %v2282 = vmul.f32 %v1228, %v2115
      %v2283 = vmul.f32 %v1233, %v2117
      %v2284 = vmul.f32 %v1238, %v2119
      %v2285 = vmul.f32 %v1243, %v2121
      %v2286 = vmul.f32 %v1248, %v2123
      %v2287 = vmul.f32 %v1253, %v2125
      %v2288 = vmul.f32 %v1258, %v2127
      %v2289 = vmul.f32 %v1263, %v2129
      %v2290 = vmul.f32 %v1268, %v2131
      %v2291 = vmul.f32 %v1273, %v2133
      %v2292 = vmul.f32 %v1278, %v2135
      %v2293 = vmul.f32 %v1283, %v2137
      %v2294 = vmul.f32 %v1288, %v2139
      %v2295 = vmul.f32 %v1293, %v2141
      %v2296 = vmul.f32 %v1298, %v2143
      %v2297 = vmul.f32 %v1303, %v2145
      %v2298 = vmul.f32 %v1308, %v2147
      %v2299 = vmul.f32 %v1313, %v2149
      %v2300 = vmul.f32 %v1318, %v2151
      %v2301 = vmul.f32 %v1323, %v2153
      %v2302 = vmul.f32 %v1328, %v2155
      %v2303 = vmul.f32 %v1333, %v2157
      %v2304 = vmul.f32 %v1338, %v2159
      %v2305 = vmul.f32 %v1343, %v2161
      %v2306 = vmul.f32 %v1348, %v2163
      %v2307 = vmul.f32 %v1353, %v2165
      %v2308 = vmul.f32 %v1358, %v2167
      %v2309 = vmul.f32 %v1363, %v2169
      %v2310 = vmul.f32 %v1368, %v2171
      %v2311 = vmul.f32 %v1373, %v2173
      %v2312 = vmul.f32 %v1378, %v2175
      %v2313 = vmul.f32 %v1383, %v2177
      %v2314 = vmul.f32 %v1388, %v2179
      %v2315 = vmul.f32 %v1393, %v2181
      %v2316 = vmul.f32 %v1398, %v2183
      %v2317 = vmul.f32 %v1403, %v2185
      %v2318 = vmul.f32 %v1408, %v2187
      %v2319 = vmul.f32 %v1413, %v2189
      %v2320 = vmul.f32 %v1418, %v2191
      %v2321 = vmul.f32 %v1423, %v2193
      %v2322 = vlaneseq
      %v2323 = vshrl.u32 %v2322, 7
      %v2324 = vsub.s32 1, %v2323
      %v2325 = vrot.slane %v331, %v2324
      %2326 = vmatprep.subr.mxu0 0.0
      %2327 = vmatpush1.msra.mxu0 %v298
      %2328 = vmatprep.subr.mxu0 0.0
      %2329 = vmatpush1.msra.mxu0 %v297
      %2330 = vmatprep.subr.mxu0 0.0
      %2331 = vmatpush1.msra.mxu0 %v296
      %2332 = vmatprep.subr.mxu0 0.0
      %2333 = vmatpush1.msra.mxu0 %v295
      %2334 = vmatprep.subr.mxu0 0.0
      %2335 = vmatpush1.msra.mxu0 %v294
      %2336 = vmatprep.subr.mxu0 0.0
      %2337 = vmatpush1.msra.mxu0 %v293
      %2338 = vmatprep.subr.mxu0 0.0
      %2339 = vmatpush1.msra.mxu0 %v292
      %2340 = vmatprep.subr.mxu0 0.0
      %2341 = vmatpush1.msra.mxu0 %v291
      %2342 = vmatprep.subr.mxu0 0.0
      %2343 = vmatpush1.msra.mxu0 %v290
      %2344 = vmatprep.subr.mxu0 0.0
      %2345 = vmatpush1.msra.mxu0 %v289
      %2346 = vmatprep.subr.mxu0 0.0
      %2347 = vmatpush1.msra.mxu0 %v288
      %2348 = vmatprep.subr.mxu0 0.0
      %2349 = vmatpush1.msra.mxu0 %v287
      %2350 = vmatprep.subr.mxu0 0.0
      %2351 = vmatpush1.msra.mxu0 %v286
      %2352 = vmatprep.subr.mxu0 0.0
      %2353 = vmatpush1.msra.mxu0 %v285
      %2354 = vmatprep.subr.mxu0 0.0
      %2355 = vmatpush1.msra.mxu0 %v284
      %2356 = vmatprep.subr.mxu0 0.0
      %2357 = vmatpush1.msra.mxu0 %v283
      %2358 = vmatprep.subr.mxu0 0.0
      %2359 = vmatpush2.msra.mxu0 0.0
      %2360 = vmatprep.subr.mxu0 0.0
      %2361 = vmatpush2.msra.mxu0 0.0
      %2362 = vmatprep.subr.mxu0 0.0
      %2363 = vmatpush2.msra.mxu0 0.0
      %2364 = vmatprep.subr.mxu0 0.0
      %2365 = vmatpush2.msra.mxu0 0.0
      %2366 = vmatprep.subr.mxu0 0.0
      %2367 = vmatpush2.msra.mxu0 0.0
      %2368 = vmatprep.subr.mxu0 0.0
      %2369 = vmatpush2.msra.mxu0 0.0
      %2370 = vmatprep.subr.mxu0 0.0
      %2371 = vmatpush2.msra.mxu0 0.0
      %2372 = vmatprep.subr.mxu0 0.0
      %2373 = vmatpush2.msra.mxu0 0.0
      %2374 = vmatprep.subr.mxu0 0.0
      %2375 = vmatpush2.msra.mxu0 0.0
      %2376 = vmatprep.subr.mxu0 0.0
      %2377 = vmatpush2.msra.mxu0 0.0
      %2378 = vmatprep.subr.mxu0 0.0
      %2379 = vmatpush2.msra.mxu0 0.0
      %2380 = vmatprep.subr.mxu0 0.0
      %2381 = vmatpush2.msra.mxu0 0.0
      %2382 = vmatprep.subr.mxu0 0.0
      %2383 = vmatpush2.msra.mxu0 0.0
      %2384 = vmatprep.subr.mxu0 0.0
      %2385 = vmatpush2.msra.mxu0 0.0
      %2386 = vmatprep.subr.mxu0 0.0
      %2387 = vmatpush2.msra.mxu0 0.0
      %2388 = vmatprep.subr.mxu0 0.0
      %2389 = vmatpush2.msra.mxu0 0.0
      %2390 = vmatprep.mubr.f32.mxu0 0.0
      %2391 = vmatmul.mubr.f32.gmra.mxu0 %v2194
      %v2392 = vpop.f32.mrf.mxu0
      %v2393 = vadd.f32 %v2325, %v2392
      %v2394 = vpop.f32.mrf.mxu0
      %2395 = vmatprep.mubr.f32.mxu0 0.0
      %2396 = vmatmul.mubr.f32.gmra.mxu0 %v2195
      %v2397 = vpop.f32.mrf.mxu0
      %v2398 = vadd.f32 %v2325, %v2397
      %v2399 = vpop.f32.mrf.mxu0
      %2400 = vmatprep.mubr.f32.mxu0 0.0
      %2401 = vmatmul.mubr.f32.gmra.mxu0 %v2196
      %v2402 = vpop.f32.mrf.mxu0
      %v2403 = vadd.f32 %v2325, %v2402
      %v2404 = vpop.f32.mrf.mxu0
      %2405 = vmatprep.mubr.f32.mxu0 0.0
      %2406 = vmatmul.mubr.f32.gmra.mxu0 %v2197
      %v2407 = vpop.f32.mrf.mxu0
      %v2408 = vadd.f32 %v2325, %v2407
      %v2409 = vpop.f32.mrf.mxu0
      %2410 = vmatprep.mubr.f32.mxu0 0.0
      %2411 = vmatmul.mubr.f32.gmra.mxu0 %v2198
      %v2412 = vpop.f32.mrf.mxu0
      %v2413 = vadd.f32 %v2325, %v2412
      %v2414 = vpop.f32.mrf.mxu0
      %2415 = vmatprep.mubr.f32.mxu0 0.0
      %2416 = vmatmul.mubr.f32.gmra.mxu0 %v2199
      %v2417 = vpop.f32.mrf.mxu0
      %v2418 = vadd.f32 %v2325, %v2417
      %v2419 = vpop.f32.mrf.mxu0
      %2420 = vmatprep.mubr.f32.mxu0 0.0
      %2421 = vmatmul.mubr.f32.gmra.mxu0 %v2200
      %v2422 = vpop.f32.mrf.mxu0
      %v2423 = vadd.f32 %v2325, %v2422
      %v2424 = vpop.f32.mrf.mxu0
      %2425 = vmatprep.mubr.f32.mxu0 0.0
      %2426 = vmatmul.mubr.f32.gmra.mxu0 %v2201
      %v2427 = vpop.f32.mrf.mxu0
      %v2428 = vadd.f32 %v2325, %v2427
      %v2429 = vpop.f32.mrf.mxu0
      %2430 = vmatprep.mubr.f32.mxu0 0.0
      %2431 = vmatmul.mubr.f32.gmra.mxu0 %v2202
      %v2432 = vpop.f32.mrf.mxu0
      %v2433 = vadd.f32 %v2325, %v2432
      %v2434 = vpop.f32.mrf.mxu0
      %2435 = vmatprep.mubr.f32.mxu0 0.0
      %2436 = vmatmul.mubr.f32.gmra.mxu0 %v2203
      %v2437 = vpop.f32.mrf.mxu0
      %v2438 = vadd.f32 %v2325, %v2437
      %v2439 = vpop.f32.mrf.mxu0
      %2440 = vmatprep.mubr.f32.mxu0 0.0
      %2441 = vmatmul.mubr.f32.gmra.mxu0 %v2204
      %v2442 = vpop.f32.mrf.mxu0
      %v2443 = vadd.f32 %v2325, %v2442
      %v2444 = vpop.f32.mrf.mxu0
      %2445 = vmatprep.mubr.f32.mxu0 0.0
      %2446 = vmatmul.mubr.f32.gmra.mxu0 %v2205
      %v2447 = vpop.f32.mrf.mxu0
      %v2448 = vadd.f32 %v2325, %v2447
      %v2449 = vpop.f32.mrf.mxu0
      %2450 = vmatprep.mubr.f32.mxu0 0.0
      %2451 = vmatmul.mubr.f32.gmra.mxu0 %v2206
      %v2452 = vpop.f32.mrf.mxu0
      %v2453 = vadd.f32 %v2325, %v2452
      %v2454 = vpop.f32.mrf.mxu0
      %2455 = vmatprep.mubr.f32.mxu0 0.0
      %2456 = vmatmul.mubr.f32.gmra.mxu0 %v2207
      %v2457 = vpop.f32.mrf.mxu0
      %v2458 = vadd.f32 %v2325, %v2457
      %v2459 = vpop.f32.mrf.mxu0
      %2460 = vmatprep.mubr.f32.mxu0 0.0
      %2461 = vmatmul.mubr.f32.gmra.mxu0 %v2208
      %v2462 = vpop.f32.mrf.mxu0
      %v2463 = vadd.f32 %v2325, %v2462
      %v2464 = vpop.f32.mrf.mxu0
      %2465 = vmatprep.mubr.f32.mxu0 0.0
      %2466 = vmatmul.mubr.f32.gmra.mxu0 %v2209
      %v2467 = vpop.f32.mrf.mxu0
      %v2468 = vadd.f32 %v2325, %v2467
      %v2469 = vpop.f32.mrf.mxu0
      %2470 = vmatprep.mubr.f32.mxu0 0.0
      %2471 = vmatmul.mubr.f32.gmra.mxu0 %v2210
      %v2472 = vpop.f32.mrf.mxu0
      %v2473 = vadd.f32 %v2325, %v2472
      %v2474 = vpop.f32.mrf.mxu0
      %2475 = vmatprep.mubr.f32.mxu0 0.0
      %2476 = vmatmul.mubr.f32.gmra.mxu0 %v2211
      %v2477 = vpop.f32.mrf.mxu0
      %v2478 = vadd.f32 %v2325, %v2477
      %v2479 = vpop.f32.mrf.mxu0
      %2480 = vmatprep.mubr.f32.mxu0 0.0
      %2481 = vmatmul.mubr.f32.gmra.mxu0 %v2212
      %v2482 = vpop.f32.mrf.mxu0
      %v2483 = vadd.f32 %v2325, %v2482
      %v2484 = vpop.f32.mrf.mxu0
      %2485 = vmatprep.mubr.f32.mxu0 0.0
      %2486 = vmatmul.mubr.f32.gmra.mxu0 %v2213
      %v2487 = vpop.f32.mrf.mxu0
      %v2488 = vadd.f32 %v2325, %v2487
      %v2489 = vpop.f32.mrf.mxu0
      %2490 = vmatprep.mubr.f32.mxu0 0.0
      %2491 = vmatmul.mubr.f32.gmra.mxu0 %v2214
      %v2492 = vpop.f32.mrf.mxu0
      %v2493 = vadd.f32 %v2325, %v2492
      %v2494 = vpop.f32.mrf.mxu0
      %2495 = vmatprep.mubr.f32.mxu0 0.0
      %2496 = vmatmul.mubr.f32.gmra.mxu0 %v2215
      %v2497 = vpop.f32.mrf.mxu0
      %v2498 = vadd.f32 %v2325, %v2497
      %v2499 = vpop.f32.mrf.mxu0
      %2500 = vmatprep.mubr.f32.mxu0 0.0
      %2501 = vmatmul.mubr.f32.gmra.mxu0 %v2216
      %v2502 = vpop.f32.mrf.mxu0
      %v2503 = vadd.f32 %v2325, %v2502
      %v2504 = vpop.f32.mrf.mxu0
      %2505 = vmatprep.mubr.f32.mxu0 0.0
      %2506 = vmatmul.mubr.f32.gmra.mxu0 %v2217
      %v2507 = vpop.f32.mrf.mxu0
      %v2508 = vadd.f32 %v2325, %v2507
      %v2509 = vpop.f32.mrf.mxu0
      %2510 = vmatprep.mubr.f32.mxu0 0.0
      %2511 = vmatmul.mubr.f32.gmra.mxu0 %v2218
      %v2512 = vpop.f32.mrf.mxu0
      %v2513 = vadd.f32 %v2325, %v2512
      %v2514 = vpop.f32.mrf.mxu0
      %2515 = vmatprep.mubr.f32.mxu0 0.0
      %2516 = vmatmul.mubr.f32.gmra.mxu0 %v2219
      %v2517 = vpop.f32.mrf.mxu0
      %v2518 = vadd.f32 %v2325, %v2517
      %v2519 = vpop.f32.mrf.mxu0
      %2520 = vmatprep.mubr.f32.mxu0 0.0
      %2521 = vmatmul.mubr.f32.gmra.mxu0 %v2220
      %v2522 = vpop.f32.mrf.mxu0
      %v2523 = vadd.f32 %v2325, %v2522
      %v2524 = vpop.f32.mrf.mxu0
      %2525 = vmatprep.mubr.f32.mxu0 0.0
      %2526 = vmatmul.mubr.f32.gmra.mxu0 %v2221
      %v2527 = vpop.f32.mrf.mxu0
      %v2528 = vadd.f32 %v2325, %v2527
      %v2529 = vpop.f32.mrf.mxu0
      %2530 = vmatprep.mubr.f32.mxu0 0.0
      %2531 = vmatmul.mubr.f32.gmra.mxu0 %v2222
      %v2532 = vpop.f32.mrf.mxu0
      %v2533 = vadd.f32 %v2325, %v2532
      %v2534 = vpop.f32.mrf.mxu0
      %2535 = vmatprep.mubr.f32.mxu0 0.0
      %2536 = vmatmul.mubr.f32.gmra.mxu0 %v2223
      %v2537 = vpop.f32.mrf.mxu0
      %v2538 = vadd.f32 %v2325, %v2537
      %v2539 = vpop.f32.mrf.mxu0
      %2540 = vmatprep.mubr.f32.mxu0 0.0
      %2541 = vmatmul.mubr.f32.gmra.mxu0 %v2224
      %v2542 = vpop.f32.mrf.mxu0
      %v2543 = vadd.f32 %v2325, %v2542
      %v2544 = vpop.f32.mrf.mxu0
      %2545 = vmatprep.mubr.f32.mxu0 0.0
      %2546 = vmatmul.mubr.f32.gmra.mxu0 %v2225
      %v2547 = vpop.f32.mrf.mxu0
      %v2548 = vadd.f32 %v2325, %v2547
      %v2549 = vpop.f32.mrf.mxu0
      %2550 = vmatprep.mubr.f32.mxu0 0.0
      %2551 = vmatmul.mubr.f32.gmra.mxu0 %v2226
      %v2552 = vpop.f32.mrf.mxu0
      %v2553 = vadd.f32 %v2325, %v2552
      %v2554 = vpop.f32.mrf.mxu0
      %2555 = vmatprep.mubr.f32.mxu0 0.0
      %2556 = vmatmul.mubr.f32.gmra.mxu0 %v2227
      %v2557 = vpop.f32.mrf.mxu0
      %v2558 = vadd.f32 %v2325, %v2557
      %v2559 = vpop.f32.mrf.mxu0
      %2560 = vmatprep.mubr.f32.mxu0 0.0
      %2561 = vmatmul.mubr.f32.gmra.mxu0 %v2228
      %v2562 = vpop.f32.mrf.mxu0
      %v2563 = vadd.f32 %v2325, %v2562
      %v2564 = vpop.f32.mrf.mxu0
      %2565 = vmatprep.mubr.f32.mxu0 0.0
      %2566 = vmatmul.mubr.f32.gmra.mxu0 %v2229
      %v2567 = vpop.f32.mrf.mxu0
      %v2568 = vadd.f32 %v2325, %v2567
      %v2569 = vpop.f32.mrf.mxu0
      %2570 = vmatprep.mubr.f32.mxu0 0.0
      %2571 = vmatmul.mubr.f32.gmra.mxu0 %v2230
      %v2572 = vpop.f32.mrf.mxu0
      %v2573 = vadd.f32 %v2325, %v2572
      %v2574 = vpop.f32.mrf.mxu0
      %2575 = vmatprep.mubr.f32.mxu0 0.0
      %2576 = vmatmul.mubr.f32.gmra.mxu0 %v2231
      %v2577 = vpop.f32.mrf.mxu0
      %v2578 = vadd.f32 %v2325, %v2577
      %v2579 = vpop.f32.mrf.mxu0
      %2580 = vmatprep.mubr.f32.mxu0 0.0
      %2581 = vmatmul.mubr.f32.gmra.mxu0 %v2232
      %v2582 = vpop.f32.mrf.mxu0
      %v2583 = vadd.f32 %v2325, %v2582
      %v2584 = vpop.f32.mrf.mxu0
      %2585 = vmatprep.mubr.f32.mxu0 0.0
      %2586 = vmatmul.mubr.f32.gmra.mxu0 %v2233
      %v2587 = vpop.f32.mrf.mxu0
      %v2588 = vadd.f32 %v2325, %v2587
      %v2589 = vpop.f32.mrf.mxu0
      %2590 = vmatprep.mubr.f32.mxu0 0.0
      %2591 = vmatmul.mubr.f32.gmra.mxu0 %v2234
      %v2592 = vpop.f32.mrf.mxu0
      %v2593 = vadd.f32 %v2325, %v2592
      %v2594 = vpop.f32.mrf.mxu0
      %2595 = vmatprep.mubr.f32.mxu0 0.0
      %2596 = vmatmul.mubr.f32.gmra.mxu0 %v2235
      %v2597 = vpop.f32.mrf.mxu0
      %v2598 = vadd.f32 %v2325, %v2597
      %v2599 = vpop.f32.mrf.mxu0
      %2600 = vmatprep.mubr.f32.mxu0 0.0
      %2601 = vmatmul.mubr.f32.gmra.mxu0 %v2236
      %v2602 = vpop.f32.mrf.mxu0
      %v2603 = vadd.f32 %v2325, %v2602
      %v2604 = vpop.f32.mrf.mxu0
      %2605 = vmatprep.mubr.f32.mxu0 0.0
      %2606 = vmatmul.mubr.f32.gmra.mxu0 %v2237
      %v2607 = vpop.f32.mrf.mxu0
      %v2608 = vadd.f32 %v2325, %v2607
      %v2609 = vpop.f32.mrf.mxu0
      %2610 = vmatprep.mubr.f32.mxu0 0.0
      %2611 = vmatmul.mubr.f32.gmra.mxu0 %v2238
      %v2612 = vpop.f32.mrf.mxu0
      %v2613 = vadd.f32 %v2325, %v2612
      %v2614 = vpop.f32.mrf.mxu0
      %2615 = vmatprep.mubr.f32.mxu0 0.0
      %2616 = vmatmul.mubr.f32.gmra.mxu0 %v2239
      %v2617 = vpop.f32.mrf.mxu0
      %v2618 = vadd.f32 %v2325, %v2617
      %v2619 = vpop.f32.mrf.mxu0
      %2620 = vmatprep.mubr.f32.mxu0 0.0
      %2621 = vmatmul.mubr.f32.gmra.mxu0 %v2240
      %v2622 = vpop.f32.mrf.mxu0
      %v2623 = vadd.f32 %v2325, %v2622
      %v2624 = vpop.f32.mrf.mxu0
      %2625 = vmatprep.mubr.f32.mxu0 0.0
      %2626 = vmatmul.mubr.f32.gmra.mxu0 %v2241
      %v2627 = vpop.f32.mrf.mxu0
      %v2628 = vadd.f32 %v2325, %v2627
      %v2629 = vpop.f32.mrf.mxu0
      %2630 = vmatprep.mubr.f32.mxu0 0.0
      %2631 = vmatmul.mubr.f32.gmra.mxu0 %v2242
      %v2632 = vpop.f32.mrf.mxu0
      %v2633 = vadd.f32 %v2325, %v2632
      %v2634 = vpop.f32.mrf.mxu0
      %2635 = vmatprep.mubr.f32.mxu0 0.0
      %2636 = vmatmul.mubr.f32.gmra.mxu0 %v2243
      %v2637 = vpop.f32.mrf.mxu0
      %v2638 = vadd.f32 %v2325, %v2637
      %v2639 = vpop.f32.mrf.mxu0
      %2640 = vmatprep.mubr.f32.mxu0 0.0
      %2641 = vmatmul.mubr.f32.gmra.mxu0 %v2244
      %v2642 = vpop.f32.mrf.mxu0
      %v2643 = vadd.f32 %v2325, %v2642
      %v2644 = vpop.f32.mrf.mxu0
      %2645 = vmatprep.mubr.f32.mxu0 0.0
      %2646 = vmatmul.mubr.f32.gmra.mxu0 %v2245
      %v2647 = vpop.f32.mrf.mxu0
      %v2648 = vadd.f32 %v2325, %v2647
      %v2649 = vpop.f32.mrf.mxu0
      %2650 = vmatprep.mubr.f32.mxu0 0.0
      %2651 = vmatmul.mubr.f32.gmra.mxu0 %v2246
      %v2652 = vpop.f32.mrf.mxu0
      %v2653 = vadd.f32 %v2325, %v2652
      %v2654 = vpop.f32.mrf.mxu0
      %2655 = vmatprep.mubr.f32.mxu0 0.0
      %2656 = vmatmul.mubr.f32.gmra.mxu0 %v2247
      %v2657 = vpop.f32.mrf.mxu0
      %v2658 = vadd.f32 %v2325, %v2657
      %v2659 = vpop.f32.mrf.mxu0
      %2660 = vmatprep.mubr.f32.mxu0 0.0
      %2661 = vmatmul.mubr.f32.gmra.mxu0 %v2248
      %v2662 = vpop.f32.mrf.mxu0
      %v2663 = vadd.f32 %v2325, %v2662
      %v2664 = vpop.f32.mrf.mxu0
      %2665 = vmatprep.mubr.f32.mxu0 0.0
      %2666 = vmatmul.mubr.f32.gmra.mxu0 %v2249
      %v2667 = vpop.f32.mrf.mxu0
      %v2668 = vadd.f32 %v2325, %v2667
      %v2669 = vpop.f32.mrf.mxu0
      %2670 = vmatprep.mubr.f32.mxu0 0.0
      %2671 = vmatmul.mubr.f32.gmra.mxu0 %v2250
      %v2672 = vpop.f32.mrf.mxu0
      %v2673 = vadd.f32 %v2325, %v2672
      %v2674 = vpop.f32.mrf.mxu0
      %2675 = vmatprep.mubr.f32.mxu0 0.0
      %2676 = vmatmul.mubr.f32.gmra.mxu0 %v2251
      %v2677 = vpop.f32.mrf.mxu0
      %v2678 = vadd.f32 %v2325, %v2677
      %v2679 = vpop.f32.mrf.mxu0
      %2680 = vmatprep.mubr.f32.mxu0 0.0
      %2681 = vmatmul.mubr.f32.gmra.mxu0 %v2252
      %v2682 = vpop.f32.mrf.mxu0
      %v2683 = vadd.f32 %v2325, %v2682
      %v2684 = vpop.f32.mrf.mxu0
      %2685 = vmatprep.mubr.f32.mxu0 0.0
      %2686 = vmatmul.mubr.f32.gmra.mxu0 %v2253
      %v2687 = vpop.f32.mrf.mxu0
      %v2688 = vadd.f32 %v2325, %v2687
      %v2689 = vpop.f32.mrf.mxu0
      %2690 = vmatprep.mubr.f32.mxu0 0.0
      %2691 = vmatmul.mubr.f32.gmra.mxu0 %v2254
      %v2692 = vpop.f32.mrf.mxu0
      %v2693 = vadd.f32 %v2325, %v2692
      %v2694 = vpop.f32.mrf.mxu0
      %2695 = vmatprep.mubr.f32.mxu0 0.0
      %2696 = vmatmul.mubr.f32.gmra.mxu0 %v2255
      %v2697 = vpop.f32.mrf.mxu0
      %v2698 = vadd.f32 %v2325, %v2697
      %v2699 = vpop.f32.mrf.mxu0
      %2700 = vmatprep.mubr.f32.mxu0 0.0
      %2701 = vmatmul.mubr.f32.gmra.mxu0 %v2256
      %v2702 = vpop.f32.mrf.mxu0
      %v2703 = vadd.f32 %v2325, %v2702
      %v2704 = vpop.f32.mrf.mxu0
      %2705 = vmatprep.mubr.f32.mxu0 0.0
      %2706 = vmatmul.mubr.f32.gmra.mxu0 %v2257
      %v2707 = vpop.f32.mrf.mxu0
      %v2708 = vadd.f32 %v2325, %v2707
      %v2709 = vpop.f32.mrf.mxu0
      %2710 = vmatprep.mubr.f32.mxu0 0.0
      %2711 = vmatmul.mubr.f32.gmra.mxu0 %v2258
      %v2712 = vpop.f32.mrf.mxu0
      %v2713 = vadd.f32 %v2325, %v2712
      %v2714 = vpop.f32.mrf.mxu0
      %2715 = vmatprep.mubr.f32.mxu0 0.0
      %2716 = vmatmul.mubr.f32.gmra.mxu0 %v2259
      %v2717 = vpop.f32.mrf.mxu0
      %v2718 = vadd.f32 %v2325, %v2717
      %v2719 = vpop.f32.mrf.mxu0
      %2720 = vmatprep.mubr.f32.mxu0 0.0
      %2721 = vmatmul.mubr.f32.gmra.mxu0 %v2260
      %v2722 = vpop.f32.mrf.mxu0
      %v2723 = vadd.f32 %v2325, %v2722
      %v2724 = vpop.f32.mrf.mxu0
      %2725 = vmatprep.mubr.f32.mxu0 0.0
      %2726 = vmatmul.mubr.f32.gmra.mxu0 %v2261
      %v2727 = vpop.f32.mrf.mxu0
      %v2728 = vadd.f32 %v2325, %v2727
      %v2729 = vpop.f32.mrf.mxu0
      %2730 = vmatprep.mubr.f32.mxu0 0.0
      %2731 = vmatmul.mubr.f32.gmra.mxu0 %v2262
      %v2732 = vpop.f32.mrf.mxu0
      %v2733 = vadd.f32 %v2325, %v2732
      %v2734 = vpop.f32.mrf.mxu0
      %2735 = vmatprep.mubr.f32.mxu0 0.0
      %2736 = vmatmul.mubr.f32.gmra.mxu0 %v2263
      %v2737 = vpop.f32.mrf.mxu0
      %v2738 = vadd.f32 %v2325, %v2737
      %v2739 = vpop.f32.mrf.mxu0
      %2740 = vmatprep.mubr.f32.mxu0 0.0
      %2741 = vmatmul.mubr.f32.gmra.mxu0 %v2264
      %v2742 = vpop.f32.mrf.mxu0
      %v2743 = vadd.f32 %v2325, %v2742
      %v2744 = vpop.f32.mrf.mxu0
      %2745 = vmatprep.mubr.f32.mxu0 0.0
      %2746 = vmatmul.mubr.f32.gmra.mxu0 %v2265
      %v2747 = vpop.f32.mrf.mxu0
      %v2748 = vadd.f32 %v2325, %v2747
      %v2749 = vpop.f32.mrf.mxu0
      %2750 = vmatprep.mubr.f32.mxu0 0.0
      %2751 = vmatmul.mubr.f32.gmra.mxu0 %v2266
      %v2752 = vpop.f32.mrf.mxu0
      %v2753 = vadd.f32 %v2325, %v2752
      %v2754 = vpop.f32.mrf.mxu0
      %2755 = vmatprep.mubr.f32.mxu0 0.0
      %2756 = vmatmul.mubr.f32.gmra.mxu0 %v2267
      %v2757 = vpop.f32.mrf.mxu0
      %v2758 = vadd.f32 %v2325, %v2757
      %v2759 = vpop.f32.mrf.mxu0
      %2760 = vmatprep.mubr.f32.mxu0 0.0
      %2761 = vmatmul.mubr.f32.gmra.mxu0 %v2268
      %v2762 = vpop.f32.mrf.mxu0
      %v2763 = vadd.f32 %v2325, %v2762
      %v2764 = vpop.f32.mrf.mxu0
      %2765 = vmatprep.mubr.f32.mxu0 0.0
      %2766 = vmatmul.mubr.f32.gmra.mxu0 %v2269
      %v2767 = vpop.f32.mrf.mxu0
      %v2768 = vadd.f32 %v2325, %v2767
      %v2769 = vpop.f32.mrf.mxu0
      %2770 = vmatprep.mubr.f32.mxu0 0.0
      %2771 = vmatmul.mubr.f32.gmra.mxu0 %v2270
      %v2772 = vpop.f32.mrf.mxu0
      %v2773 = vadd.f32 %v2325, %v2772
      %v2774 = vpop.f32.mrf.mxu0
      %2775 = vmatprep.mubr.f32.mxu0 0.0
      %2776 = vmatmul.mubr.f32.gmra.mxu0 %v2271
      %v2777 = vpop.f32.mrf.mxu0
      %v2778 = vadd.f32 %v2325, %v2777
      %v2779 = vpop.f32.mrf.mxu0
      %2780 = vmatprep.mubr.f32.mxu0 0.0
      %2781 = vmatmul.mubr.f32.gmra.mxu0 %v2272
      %v2782 = vpop.f32.mrf.mxu0
      %v2783 = vadd.f32 %v2325, %v2782
      %v2784 = vpop.f32.mrf.mxu0
      %2785 = vmatprep.mubr.f32.mxu0 0.0
      %2786 = vmatmul.mubr.f32.gmra.mxu0 %v2273
      %v2787 = vpop.f32.mrf.mxu0
      %v2788 = vadd.f32 %v2325, %v2787
      %v2789 = vpop.f32.mrf.mxu0
      %2790 = vmatprep.mubr.f32.mxu0 0.0
      %2791 = vmatmul.mubr.f32.gmra.mxu0 %v2274
      %v2792 = vpop.f32.mrf.mxu0
      %v2793 = vadd.f32 %v2325, %v2792
      %v2794 = vpop.f32.mrf.mxu0
      %2795 = vmatprep.mubr.f32.mxu0 0.0
      %2796 = vmatmul.mubr.f32.gmra.mxu0 %v2275
      %v2797 = vpop.f32.mrf.mxu0
      %v2798 = vadd.f32 %v2325, %v2797
      %v2799 = vpop.f32.mrf.mxu0
      %2800 = vmatprep.mubr.f32.mxu0 0.0
      %2801 = vmatmul.mubr.f32.gmra.mxu0 %v2276
      %v2802 = vpop.f32.mrf.mxu0
      %v2803 = vadd.f32 %v2325, %v2802
      %v2804 = vpop.f32.mrf.mxu0
      %2805 = vmatprep.mubr.f32.mxu0 0.0
      %2806 = vmatmul.mubr.f32.gmra.mxu0 %v2277
      %v2807 = vpop.f32.mrf.mxu0
      %v2808 = vadd.f32 %v2325, %v2807
      %v2809 = vpop.f32.mrf.mxu0
      %2810 = vmatprep.mubr.f32.mxu0 0.0
      %2811 = vmatmul.mubr.f32.gmra.mxu0 %v2278
      %v2812 = vpop.f32.mrf.mxu0
      %v2813 = vadd.f32 %v2325, %v2812
      %v2814 = vpop.f32.mrf.mxu0
      %2815 = vmatprep.mubr.f32.mxu0 0.0
      %2816 = vmatmul.mubr.f32.gmra.mxu0 %v2279
      %v2817 = vpop.f32.mrf.mxu0
      %v2818 = vadd.f32 %v2325, %v2817
      %v2819 = vpop.f32.mrf.mxu0
      %2820 = vmatprep.mubr.f32.mxu0 0.0
      %2821 = vmatmul.mubr.f32.gmra.mxu0 %v2280
      %v2822 = vpop.f32.mrf.mxu0
      %v2823 = vadd.f32 %v2325, %v2822
      %v2824 = vpop.f32.mrf.mxu0
      %2825 = vmatprep.mubr.f32.mxu0 0.0
      %2826 = vmatmul.mubr.f32.gmra.mxu0 %v2281
      %v2827 = vpop.f32.mrf.mxu0
      %v2828 = vadd.f32 %v2325, %v2827
      %v2829 = vpop.f32.mrf.mxu0
      %2830 = vmatprep.mubr.f32.mxu0 0.0
      %2831 = vmatmul.mubr.f32.gmra.mxu0 %v2282
      %v2832 = vpop.f32.mrf.mxu0
      %v2833 = vadd.f32 %v2325, %v2832
      %v2834 = vpop.f32.mrf.mxu0
      %2835 = vmatprep.mubr.f32.mxu0 0.0
      %2836 = vmatmul.mubr.f32.gmra.mxu0 %v2283
      %v2837 = vpop.f32.mrf.mxu0
      %v2838 = vadd.f32 %v2325, %v2837
      %v2839 = vpop.f32.mrf.mxu0
      %2840 = vmatprep.mubr.f32.mxu0 0.0
      %2841 = vmatmul.mubr.f32.gmra.mxu0 %v2284
      %v2842 = vpop.f32.mrf.mxu0
      %v2843 = vadd.f32 %v2325, %v2842
      %v2844 = vpop.f32.mrf.mxu0
      %2845 = vmatprep.mubr.f32.mxu0 0.0
      %2846 = vmatmul.mubr.f32.gmra.mxu0 %v2285
      %v2847 = vpop.f32.mrf.mxu0
      %v2848 = vadd.f32 %v2325, %v2847
      %v2849 = vpop.f32.mrf.mxu0
      %2850 = vmatprep.mubr.f32.mxu0 0.0
      %2851 = vmatmul.mubr.f32.gmra.mxu0 %v2286
      %v2852 = vpop.f32.mrf.mxu0
      %v2853 = vadd.f32 %v2325, %v2852
      %v2854 = vpop.f32.mrf.mxu0
      %2855 = vmatprep.mubr.f32.mxu0 0.0
      %2856 = vmatmul.mubr.f32.gmra.mxu0 %v2287
      %v2857 = vpop.f32.mrf.mxu0
      %v2858 = vadd.f32 %v2325, %v2857
      %v2859 = vpop.f32.mrf.mxu0
      %2860 = vmatprep.mubr.f32.mxu0 0.0
      %2861 = vmatmul.mubr.f32.gmra.mxu0 %v2288
      %v2862 = vpop.f32.mrf.mxu0
      %v2863 = vadd.f32 %v2325, %v2862
      %v2864 = vpop.f32.mrf.mxu0
      %2865 = vmatprep.mubr.f32.mxu0 0.0
      %2866 = vmatmul.mubr.f32.gmra.mxu0 %v2289
      %v2867 = vpop.f32.mrf.mxu0
      %v2868 = vadd.f32 %v2325, %v2867
      %v2869 = vpop.f32.mrf.mxu0
      %2870 = vmatprep.mubr.f32.mxu0 0.0
      %2871 = vmatmul.mubr.f32.gmra.mxu0 %v2290
      %v2872 = vpop.f32.mrf.mxu0
      %v2873 = vadd.f32 %v2325, %v2872
      %v2874 = vpop.f32.mrf.mxu0
      %2875 = vmatprep.mubr.f32.mxu0 0.0
      %2876 = vmatmul.mubr.f32.gmra.mxu0 %v2291
      %v2877 = vpop.f32.mrf.mxu0
      %v2878 = vadd.f32 %v2325, %v2877
      %v2879 = vpop.f32.mrf.mxu0
      %2880 = vmatprep.mubr.f32.mxu0 0.0
      %2881 = vmatmul.mubr.f32.gmra.mxu0 %v2292
      %v2882 = vpop.f32.mrf.mxu0
      %v2883 = vadd.f32 %v2325, %v2882
      %v2884 = vpop.f32.mrf.mxu0
      %2885 = vmatprep.mubr.f32.mxu0 0.0
      %2886 = vmatmul.mubr.f32.gmra.mxu0 %v2293
      %v2887 = vpop.f32.mrf.mxu0
      %v2888 = vadd.f32 %v2325, %v2887
      %v2889 = vpop.f32.mrf.mxu0
      %2890 = vmatprep.mubr.f32.mxu0 0.0
      %2891 = vmatmul.mubr.f32.gmra.mxu0 %v2294
      %v2892 = vpop.f32.mrf.mxu0
      %v2893 = vadd.f32 %v2325, %v2892
      %v2894 = vpop.f32.mrf.mxu0
      %2895 = vmatprep.mubr.f32.mxu0 0.0
      %2896 = vmatmul.mubr.f32.gmra.mxu0 %v2295
      %v2897 = vpop.f32.mrf.mxu0
      %v2898 = vadd.f32 %v2325, %v2897
      %v2899 = vpop.f32.mrf.mxu0
      %2900 = vmatprep.mubr.f32.mxu0 0.0
      %2901 = vmatmul.mubr.f32.gmra.mxu0 %v2296
      %v2902 = vpop.f32.mrf.mxu0
      %v2903 = vadd.f32 %v2325, %v2902
      %v2904 = vpop.f32.mrf.mxu0
      %2905 = vmatprep.mubr.f32.mxu0 0.0
      %2906 = vmatmul.mubr.f32.gmra.mxu0 %v2297
      %v2907 = vpop.f32.mrf.mxu0
      %v2908 = vadd.f32 %v2325, %v2907
      %v2909 = vpop.f32.mrf.mxu0
      %2910 = vmatprep.mubr.f32.mxu0 0.0
      %2911 = vmatmul.mubr.f32.gmra.mxu0 %v2298
      %v2912 = vpop.f32.mrf.mxu0
      %v2913 = vadd.f32 %v2325, %v2912
      %v2914 = vpop.f32.mrf.mxu0
      %2915 = vmatprep.mubr.f32.mxu0 0.0
      %2916 = vmatmul.mubr.f32.gmra.mxu0 %v2299
      %v2917 = vpop.f32.mrf.mxu0
      %v2918 = vadd.f32 %v2325, %v2917
      %v2919 = vpop.f32.mrf.mxu0
      %2920 = vmatprep.mubr.f32.mxu0 0.0
      %2921 = vmatmul.mubr.f32.gmra.mxu0 %v2300
      %v2922 = vpop.f32.mrf.mxu0
      %v2923 = vadd.f32 %v2325, %v2922
      %v2924 = vpop.f32.mrf.mxu0
      %2925 = vmatprep.mubr.f32.mxu0 0.0
      %2926 = vmatmul.mubr.f32.gmra.mxu0 %v2301
      %v2927 = vpop.f32.mrf.mxu0
      %v2928 = vadd.f32 %v2325, %v2927
      %v2929 = vpop.f32.mrf.mxu0
      %2930 = vmatprep.mubr.f32.mxu0 0.0
      %2931 = vmatmul.mubr.f32.gmra.mxu0 %v2302
      %v2932 = vpop.f32.mrf.mxu0
      %v2933 = vadd.f32 %v2325, %v2932
      %v2934 = vpop.f32.mrf.mxu0
      %2935 = vmatprep.mubr.f32.mxu0 0.0
      %2936 = vmatmul.mubr.f32.gmra.mxu0 %v2303
      %v2937 = vpop.f32.mrf.mxu0
      %v2938 = vadd.f32 %v2325, %v2937
      %v2939 = vpop.f32.mrf.mxu0
      %2940 = vmatprep.mubr.f32.mxu0 0.0
      %2941 = vmatmul.mubr.f32.gmra.mxu0 %v2304
      %v2942 = vpop.f32.mrf.mxu0
      %v2943 = vadd.f32 %v2325, %v2942
      %v2944 = vpop.f32.mrf.mxu0
      %2945 = vmatprep.mubr.f32.mxu0 0.0
      %2946 = vmatmul.mubr.f32.gmra.mxu0 %v2305
      %v2947 = vpop.f32.mrf.mxu0
      %v2948 = vadd.f32 %v2325, %v2947
      %v2949 = vpop.f32.mrf.mxu0
      %2950 = vmatprep.mubr.f32.mxu0 0.0
      %2951 = vmatmul.mubr.f32.gmra.mxu0 %v2306
      %v2952 = vpop.f32.mrf.mxu0
      %v2953 = vadd.f32 %v2325, %v2952
      %v2954 = vpop.f32.mrf.mxu0
      %2955 = vmatprep.mubr.f32.mxu0 0.0
      %2956 = vmatmul.mubr.f32.gmra.mxu0 %v2307
      %v2957 = vpop.f32.mrf.mxu0
      %v2958 = vadd.f32 %v2325, %v2957
      %v2959 = vpop.f32.mrf.mxu0
      %2960 = vmatprep.mubr.f32.mxu0 0.0
      %2961 = vmatmul.mubr.f32.gmra.mxu0 %v2308
      %v2962 = vpop.f32.mrf.mxu0
      %v2963 = vadd.f32 %v2325, %v2962
      %v2964 = vpop.f32.mrf.mxu0
      %2965 = vmatprep.mubr.f32.mxu0 0.0
      %2966 = vmatmul.mubr.f32.gmra.mxu0 %v2309
      %v2967 = vpop.f32.mrf.mxu0
      %v2968 = vadd.f32 %v2325, %v2967
      %v2969 = vpop.f32.mrf.mxu0
      %2970 = vmatprep.mubr.f32.mxu0 0.0
      %2971 = vmatmul.mubr.f32.gmra.mxu0 %v2310
      %v2972 = vpop.f32.mrf.mxu0
      %v2973 = vadd.f32 %v2325, %v2972
      %v2974 = vpop.f32.mrf.mxu0
      %2975 = vmatprep.mubr.f32.mxu0 0.0
      %2976 = vmatmul.mubr.f32.gmra.mxu0 %v2311
      %v2977 = vpop.f32.mrf.mxu0
      %v2978 = vadd.f32 %v2325, %v2977
      %v2979 = vpop.f32.mrf.mxu0
      %2980 = vmatprep.mubr.f32.mxu0 0.0
      %2981 = vmatmul.mubr.f32.gmra.mxu0 %v2312
      %v2982 = vpop.f32.mrf.mxu0
      %v2983 = vadd.f32 %v2325, %v2982
      %v2984 = vpop.f32.mrf.mxu0
      %2985 = vmatprep.mubr.f32.mxu0 0.0
      %2986 = vmatmul.mubr.f32.gmra.mxu0 %v2313
      %v2987 = vpop.f32.mrf.mxu0
      %v2988 = vadd.f32 %v2325, %v2987
      %v2989 = vpop.f32.mrf.mxu0
      %2990 = vmatprep.mubr.f32.mxu0 0.0
      %2991 = vmatmul.mubr.f32.gmra.mxu0 %v2314
      %v2992 = vpop.f32.mrf.mxu0
      %v2993 = vadd.f32 %v2325, %v2992
      %v2994 = vpop.f32.mrf.mxu0
      %2995 = vmatprep.mubr.f32.mxu0 0.0
      %2996 = vmatmul.mubr.f32.gmra.mxu0 %v2315
      %v2997 = vpop.f32.mrf.mxu0
      %v2998 = vadd.f32 %v2325, %v2997
      %v2999 = vpop.f32.mrf.mxu0
      %3000 = vmatprep.mubr.f32.mxu0 0.0
      %3001 = vmatmul.mubr.f32.gmra.mxu0 %v2316
      %v3002 = vpop.f32.mrf.mxu0
      %v3003 = vadd.f32 %v2325, %v3002
      %v3004 = vpop.f32.mrf.mxu0
      %3005 = vmatprep.mubr.f32.mxu0 0.0
      %3006 = vmatmul.mubr.f32.gmra.mxu0 %v2317
      %v3007 = vpop.f32.mrf.mxu0
      %v3008 = vadd.f32 %v2325, %v3007
      %v3009 = vpop.f32.mrf.mxu0
      %3010 = vmatprep.mubr.f32.mxu0 0.0
      %3011 = vmatmul.mubr.f32.gmra.mxu0 %v2318
      %v3012 = vpop.f32.mrf.mxu0
      %v3013 = vadd.f32 %v2325, %v3012
      %v3014 = vpop.f32.mrf.mxu0
      %3015 = vmatprep.mubr.f32.mxu0 0.0
      %3016 = vmatmul.mubr.f32.gmra.mxu0 %v2319
      %v3017 = vpop.f32.mrf.mxu0
      %v3018 = vadd.f32 %v2325, %v3017
      %v3019 = vpop.f32.mrf.mxu0
      %3020 = vmatprep.mubr.f32.mxu0 0.0
      %3021 = vmatmul.mubr.f32.gmra.mxu0 %v2320
      %v3022 = vpop.f32.mrf.mxu0
      %v3023 = vadd.f32 %v2325, %v3022
      %v3024 = vpop.f32.mrf.mxu0
      %3025 = vmatprep.mubr.f32.mxu0 0.0
      %3026 = vmatmul.mubr.f32.gmra.mxu0 %v2321
      %v3027 = vpop.f32.mrf.mxu0
      %v3028 = vadd.f32 %v2325, %v3027
      %v3029 = vpop.f32.mrf.mxu0
      %3030 = vdwg.mxu0
      %v3031 = vlaneseq
      %v3032 = vshrl.u32 %v3031, 7
      %v3033 = vsub.s32 2, %v3032
      %v3034 = vrot.slane %v331, %v3033
      %3035 = vmatprep.subr.mxu0 0.0
      %3036 = vmatpush1.msra.mxu0 %v314
      %3037 = vmatprep.subr.mxu0 0.0
      %3038 = vmatpush1.msra.mxu0 %v313
      %3039 = vmatprep.subr.mxu0 0.0
      %3040 = vmatpush1.msra.mxu0 %v312
      %3041 = vmatprep.subr.mxu0 0.0
      %3042 = vmatpush1.msra.mxu0 %v311
      %3043 = vmatprep.subr.mxu0 0.0
      %3044 = vmatpush1.msra.mxu0 %v310
      %3045 = vmatprep.subr.mxu0 0.0
      %3046 = vmatpush1.msra.mxu0 %v309
      %3047 = vmatprep.subr.mxu0 0.0
      %3048 = vmatpush1.msra.mxu0 %v308
      %3049 = vmatprep.subr.mxu0 0.0
      %3050 = vmatpush1.msra.mxu0 %v307
      %3051 = vmatprep.subr.mxu0 0.0
      %3052 = vmatpush1.msra.mxu0 %v306
      %3053 = vmatprep.subr.mxu0 0.0
      %3054 = vmatpush1.msra.mxu0 %v305
      %3055 = vmatprep.subr.mxu0 0.0
      %3056 = vmatpush1.msra.mxu0 %v304
      %3057 = vmatprep.subr.mxu0 0.0
      %3058 = vmatpush1.msra.mxu0 %v303
      %3059 = vmatprep.subr.mxu0 0.0
      %3060 = vmatpush1.msra.mxu0 %v302
      %3061 = vmatprep.subr.mxu0 0.0
      %3062 = vmatpush1.msra.mxu0 %v301
      %3063 = vmatprep.subr.mxu0 0.0
      %3064 = vmatpush1.msra.mxu0 %v300
      %3065 = vmatprep.subr.mxu0 0.0
      %3066 = vmatpush1.msra.mxu0 %v299
      %3067 = vmatprep.subr.mxu0 0.0
      %3068 = vmatpush2.msra.mxu0 0.0
      %3069 = vmatprep.subr.mxu0 0.0
      %3070 = vmatpush2.msra.mxu0 0.0
      %3071 = vmatprep.subr.mxu0 0.0
      %3072 = vmatpush2.msra.mxu0 0.0
      %3073 = vmatprep.subr.mxu0 0.0
      %3074 = vmatpush2.msra.mxu0 0.0
      %3075 = vmatprep.subr.mxu0 0.0
      %3076 = vmatpush2.msra.mxu0 0.0
      %3077 = vmatprep.subr.mxu0 0.0
      %3078 = vmatpush2.msra.mxu0 0.0
      %3079 = vmatprep.subr.mxu0 0.0
      %3080 = vmatpush2.msra.mxu0 0.0
      %3081 = vmatprep.subr.mxu0 0.0
      %3082 = vmatpush2.msra.mxu0 0.0
      %3083 = vmatprep.subr.mxu0 0.0
      %3084 = vmatpush2.msra.mxu0 0.0
      %3085 = vmatprep.subr.mxu0 0.0
      %3086 = vmatpush2.msra.mxu0 0.0
      %3087 = vmatprep.subr.mxu0 0.0
      %3088 = vmatpush2.msra.mxu0 0.0
      %3089 = vmatprep.subr.mxu0 0.0
      %3090 = vmatpush2.msra.mxu0 0.0
      %3091 = vmatprep.subr.mxu0 0.0
      %3092 = vmatpush2.msra.mxu0 0.0
      %3093 = vmatprep.subr.mxu0 0.0
      %3094 = vmatpush2.msra.mxu0 0.0
      %3095 = vmatprep.subr.mxu0 0.0
      %3096 = vmatpush2.msra.mxu0 0.0
      %3097 = vmatprep.subr.mxu0 0.0
      %3098 = vmatpush2.msra.mxu0 0.0
      %3099 = vmatprep.mubr.f32.mxu0 0.0
      %3100 = vmatmul.mubr.f32.gmra.mxu0 %v2393
      %v3101 = vpop.f32.mrf.mxu0
      %v3102 = vadd.f32 %v3034, %v3101
      %v3103 = vpop.f32.mrf.mxu0
      %3104 = vmatprep.mubr.f32.mxu0 0.0
      %3105 = vmatmul.mubr.f32.gmra.mxu0 %v2398
      %v3106 = vpop.f32.mrf.mxu0
      %v3107 = vadd.f32 %v3034, %v3106
      %v3108 = vpop.f32.mrf.mxu0
      %3109 = vmatprep.mubr.f32.mxu0 0.0
      %3110 = vmatmul.mubr.f32.gmra.mxu0 %v2403
      %v3111 = vpop.f32.mrf.mxu0
      %v3112 = vadd.f32 %v3034, %v3111
      %v3113 = vpop.f32.mrf.mxu0
      %3114 = vmatprep.mubr.f32.mxu0 0.0
      %3115 = vmatmul.mubr.f32.gmra.mxu0 %v2408
      %v3116 = vpop.f32.mrf.mxu0
      %v3117 = vadd.f32 %v3034, %v3116
      %v3118 = vpop.f32.mrf.mxu0
      %3119 = vmatprep.mubr.f32.mxu0 0.0
      %3120 = vmatmul.mubr.f32.gmra.mxu0 %v2413
      %v3121 = vpop.f32.mrf.mxu0
      %v3122 = vadd.f32 %v3034, %v3121
      %v3123 = vpop.f32.mrf.mxu0
      %3124 = vmatprep.mubr.f32.mxu0 0.0
      %3125 = vmatmul.mubr.f32.gmra.mxu0 %v2418
      %v3126 = vpop.f32.mrf.mxu0
      %v3127 = vadd.f32 %v3034, %v3126
      %v3128 = vpop.f32.mrf.mxu0
      %3129 = vmatprep.mubr.f32.mxu0 0.0
      %3130 = vmatmul.mubr.f32.gmra.mxu0 %v2423
      %v3131 = vpop.f32.mrf.mxu0
      %v3132 = vadd.f32 %v3034, %v3131
      %v3133 = vpop.f32.mrf.mxu0
      %3134 = vmatprep.mubr.f32.mxu0 0.0
      %3135 = vmatmul.mubr.f32.gmra.mxu0 %v2428
      %v3136 = vpop.f32.mrf.mxu0
      %v3137 = vadd.f32 %v3034, %v3136
      %v3138 = vpop.f32.mrf.mxu0
      %3139 = vmatprep.mubr.f32.mxu0 0.0
      %3140 = vmatmul.mubr.f32.gmra.mxu0 %v2433
      %v3141 = vpop.f32.mrf.mxu0
      %v3142 = vadd.f32 %v3034, %v3141
      %v3143 = vpop.f32.mrf.mxu0
      %3144 = vmatprep.mubr.f32.mxu0 0.0
      %3145 = vmatmul.mubr.f32.gmra.mxu0 %v2438
      %v3146 = vpop.f32.mrf.mxu0
      %v3147 = vadd.f32 %v3034, %v3146
      %v3148 = vpop.f32.mrf.mxu0
      %3149 = vmatprep.mubr.f32.mxu0 0.0
      %3150 = vmatmul.mubr.f32.gmra.mxu0 %v2443
      %v3151 = vpop.f32.mrf.mxu0
      %v3152 = vadd.f32 %v3034, %v3151
      %v3153 = vpop.f32.mrf.mxu0
      %3154 = vmatprep.mubr.f32.mxu0 0.0
      %3155 = vmatmul.mubr.f32.gmra.mxu0 %v2448
      %v3156 = vpop.f32.mrf.mxu0
      %v3157 = vadd.f32 %v3034, %v3156
      %v3158 = vpop.f32.mrf.mxu0
      %3159 = vmatprep.mubr.f32.mxu0 0.0
      %3160 = vmatmul.mubr.f32.gmra.mxu0 %v2453
      %v3161 = vpop.f32.mrf.mxu0
      %v3162 = vadd.f32 %v3034, %v3161
      %v3163 = vpop.f32.mrf.mxu0
      %3164 = vmatprep.mubr.f32.mxu0 0.0
      %3165 = vmatmul.mubr.f32.gmra.mxu0 %v2458
      %v3166 = vpop.f32.mrf.mxu0
      %v3167 = vadd.f32 %v3034, %v3166
      %v3168 = vpop.f32.mrf.mxu0
      %3169 = vmatprep.mubr.f32.mxu0 0.0
      %3170 = vmatmul.mubr.f32.gmra.mxu0 %v2463
      %v3171 = vpop.f32.mrf.mxu0
      %v3172 = vadd.f32 %v3034, %v3171
      %v3173 = vpop.f32.mrf.mxu0
      %3174 = vmatprep.mubr.f32.mxu0 0.0
      %3175 = vmatmul.mubr.f32.gmra.mxu0 %v2468
      %v3176 = vpop.f32.mrf.mxu0
      %v3177 = vadd.f32 %v3034, %v3176
      %v3178 = vpop.f32.mrf.mxu0
      %3179 = vmatprep.mubr.f32.mxu0 0.0
      %3180 = vmatmul.mubr.f32.gmra.mxu0 %v2473
      %v3181 = vpop.f32.mrf.mxu0
      %v3182 = vadd.f32 %v3034, %v3181
      %v3183 = vpop.f32.mrf.mxu0
      %3184 = vmatprep.mubr.f32.mxu0 0.0
      %3185 = vmatmul.mubr.f32.gmra.mxu0 %v2478
      %v3186 = vpop.f32.mrf.mxu0
      %v3187 = vadd.f32 %v3034, %v3186
      %v3188 = vpop.f32.mrf.mxu0
      %3189 = vmatprep.mubr.f32.mxu0 0.0
      %3190 = vmatmul.mubr.f32.gmra.mxu0 %v2483
      %v3191 = vpop.f32.mrf.mxu0
      %v3192 = vadd.f32 %v3034, %v3191
      %v3193 = vpop.f32.mrf.mxu0
      %3194 = vmatprep.mubr.f32.mxu0 0.0
      %3195 = vmatmul.mubr.f32.gmra.mxu0 %v2488
      %v3196 = vpop.f32.mrf.mxu0
      %v3197 = vadd.f32 %v3034, %v3196
      %v3198 = vpop.f32.mrf.mxu0
      %3199 = vmatprep.mubr.f32.mxu0 0.0
      %3200 = vmatmul.mubr.f32.gmra.mxu0 %v2493
      %v3201 = vpop.f32.mrf.mxu0
      %v3202 = vadd.f32 %v3034, %v3201
      %v3203 = vpop.f32.mrf.mxu0
      %3204 = vmatprep.mubr.f32.mxu0 0.0
      %3205 = vmatmul.mubr.f32.gmra.mxu0 %v2498
      %v3206 = vpop.f32.mrf.mxu0
      %v3207 = vadd.f32 %v3034, %v3206
      %v3208 = vpop.f32.mrf.mxu0
      %3209 = vmatprep.mubr.f32.mxu0 0.0
      %3210 = vmatmul.mubr.f32.gmra.mxu0 %v2503
      %v3211 = vpop.f32.mrf.mxu0
      %v3212 = vadd.f32 %v3034, %v3211
      %v3213 = vpop.f32.mrf.mxu0
      %3214 = vmatprep.mubr.f32.mxu0 0.0
      %3215 = vmatmul.mubr.f32.gmra.mxu0 %v2508
      %v3216 = vpop.f32.mrf.mxu0
      %v3217 = vadd.f32 %v3034, %v3216
      %v3218 = vpop.f32.mrf.mxu0
      %3219 = vmatprep.mubr.f32.mxu0 0.0
      %3220 = vmatmul.mubr.f32.gmra.mxu0 %v2513
      %v3221 = vpop.f32.mrf.mxu0
      %v3222 = vadd.f32 %v3034, %v3221
      %v3223 = vpop.f32.mrf.mxu0
      %3224 = vmatprep.mubr.f32.mxu0 0.0
      %3225 = vmatmul.mubr.f32.gmra.mxu0 %v2518
      %v3226 = vpop.f32.mrf.mxu0
      %v3227 = vadd.f32 %v3034, %v3226
      %v3228 = vpop.f32.mrf.mxu0
      %3229 = vmatprep.mubr.f32.mxu0 0.0
      %3230 = vmatmul.mubr.f32.gmra.mxu0 %v2523
      %v3231 = vpop.f32.mrf.mxu0
      %v3232 = vadd.f32 %v3034, %v3231
      %v3233 = vpop.f32.mrf.mxu0
      %3234 = vmatprep.mubr.f32.mxu0 0.0
      %3235 = vmatmul.mubr.f32.gmra.mxu0 %v2528
      %v3236 = vpop.f32.mrf.mxu0
      %v3237 = vadd.f32 %v3034, %v3236
      %v3238 = vpop.f32.mrf.mxu0
      %3239 = vmatprep.mubr.f32.mxu0 0.0
      %3240 = vmatmul.mubr.f32.gmra.mxu0 %v2533
      %v3241 = vpop.f32.mrf.mxu0
      %v3242 = vadd.f32 %v3034, %v3241
      %v3243 = vpop.f32.mrf.mxu0
      %3244 = vmatprep.mubr.f32.mxu0 0.0
      %3245 = vmatmul.mubr.f32.gmra.mxu0 %v2538
      %v3246 = vpop.f32.mrf.mxu0
      %v3247 = vadd.f32 %v3034, %v3246
      %v3248 = vpop.f32.mrf.mxu0
      %3249 = vmatprep.mubr.f32.mxu0 0.0
      %3250 = vmatmul.mubr.f32.gmra.mxu0 %v2543
      %v3251 = vpop.f32.mrf.mxu0
      %v3252 = vadd.f32 %v3034, %v3251
      %v3253 = vpop.f32.mrf.mxu0
      %3254 = vmatprep.mubr.f32.mxu0 0.0
      %3255 = vmatmul.mubr.f32.gmra.mxu0 %v2548
      %v3256 = vpop.f32.mrf.mxu0
      %v3257 = vadd.f32 %v3034, %v3256
      %v3258 = vpop.f32.mrf.mxu0
      %3259 = vmatprep.mubr.f32.mxu0 0.0
      %3260 = vmatmul.mubr.f32.gmra.mxu0 %v2553
      %v3261 = vpop.f32.mrf.mxu0
      %v3262 = vadd.f32 %v3034, %v3261
      %v3263 = vpop.f32.mrf.mxu0
      %3264 = vmatprep.mubr.f32.mxu0 0.0
      %3265 = vmatmul.mubr.f32.gmra.mxu0 %v2558
      %v3266 = vpop.f32.mrf.mxu0
      %v3267 = vadd.f32 %v3034, %v3266
      %v3268 = vpop.f32.mrf.mxu0
      %3269 = vmatprep.mubr.f32.mxu0 0.0
      %3270 = vmatmul.mubr.f32.gmra.mxu0 %v2563
      %v3271 = vpop.f32.mrf.mxu0
      %v3272 = vadd.f32 %v3034, %v3271
      %v3273 = vpop.f32.mrf.mxu0
      %3274 = vmatprep.mubr.f32.mxu0 0.0
      %3275 = vmatmul.mubr.f32.gmra.mxu0 %v2568
      %v3276 = vpop.f32.mrf.mxu0
      %v3277 = vadd.f32 %v3034, %v3276
      %v3278 = vpop.f32.mrf.mxu0
      %3279 = vmatprep.mubr.f32.mxu0 0.0
      %3280 = vmatmul.mubr.f32.gmra.mxu0 %v2573
      %v3281 = vpop.f32.mrf.mxu0
      %v3282 = vadd.f32 %v3034, %v3281
      %v3283 = vpop.f32.mrf.mxu0
      %3284 = vmatprep.mubr.f32.mxu0 0.0
      %3285 = vmatmul.mubr.f32.gmra.mxu0 %v2578
      %v3286 = vpop.f32.mrf.mxu0
      %v3287 = vadd.f32 %v3034, %v3286
      %v3288 = vpop.f32.mrf.mxu0
      %3289 = vmatprep.mubr.f32.mxu0 0.0
      %3290 = vmatmul.mubr.f32.gmra.mxu0 %v2583
      %v3291 = vpop.f32.mrf.mxu0
      %v3292 = vadd.f32 %v3034, %v3291
      %v3293 = vpop.f32.mrf.mxu0
      %3294 = vmatprep.mubr.f32.mxu0 0.0
      %3295 = vmatmul.mubr.f32.gmra.mxu0 %v2588
      %v3296 = vpop.f32.mrf.mxu0
      %v3297 = vadd.f32 %v3034, %v3296
      %v3298 = vpop.f32.mrf.mxu0
      %3299 = vmatprep.mubr.f32.mxu0 0.0
      %3300 = vmatmul.mubr.f32.gmra.mxu0 %v2593
      %v3301 = vpop.f32.mrf.mxu0
      %v3302 = vadd.f32 %v3034, %v3301
      %v3303 = vpop.f32.mrf.mxu0
      %3304 = vmatprep.mubr.f32.mxu0 0.0
      %3305 = vmatmul.mubr.f32.gmra.mxu0 %v2598
      %v3306 = vpop.f32.mrf.mxu0
      %v3307 = vadd.f32 %v3034, %v3306
      %v3308 = vpop.f32.mrf.mxu0
      %3309 = vmatprep.mubr.f32.mxu0 0.0
      %3310 = vmatmul.mubr.f32.gmra.mxu0 %v2603
      %v3311 = vpop.f32.mrf.mxu0
      %v3312 = vadd.f32 %v3034, %v3311
      %v3313 = vpop.f32.mrf.mxu0
      %3314 = vmatprep.mubr.f32.mxu0 0.0
      %3315 = vmatmul.mubr.f32.gmra.mxu0 %v2608
      %v3316 = vpop.f32.mrf.mxu0
      %v3317 = vadd.f32 %v3034, %v3316
      %v3318 = vpop.f32.mrf.mxu0
      %3319 = vmatprep.mubr.f32.mxu0 0.0
      %3320 = vmatmul.mubr.f32.gmra.mxu0 %v2613
      %v3321 = vpop.f32.mrf.mxu0
      %v3322 = vadd.f32 %v3034, %v3321
      %v3323 = vpop.f32.mrf.mxu0
      %3324 = vmatprep.mubr.f32.mxu0 0.0
      %3325 = vmatmul.mubr.f32.gmra.mxu0 %v2618
      %v3326 = vpop.f32.mrf.mxu0
      %v3327 = vadd.f32 %v3034, %v3326
      %v3328 = vpop.f32.mrf.mxu0
      %3329 = vmatprep.mubr.f32.mxu0 0.0
      %3330 = vmatmul.mubr.f32.gmra.mxu0 %v2623
      %v3331 = vpop.f32.mrf.mxu0
      %v3332 = vadd.f32 %v3034, %v3331
      %v3333 = vpop.f32.mrf.mxu0
      %3334 = vmatprep.mubr.f32.mxu0 0.0
      %3335 = vmatmul.mubr.f32.gmra.mxu0 %v2628
      %v3336 = vpop.f32.mrf.mxu0
      %v3337 = vadd.f32 %v3034, %v3336
      %v3338 = vpop.f32.mrf.mxu0
      %3339 = vmatprep.mubr.f32.mxu0 0.0
      %3340 = vmatmul.mubr.f32.gmra.mxu0 %v2633
      %v3341 = vpop.f32.mrf.mxu0
      %v3342 = vadd.f32 %v3034, %v3341
      %v3343 = vpop.f32.mrf.mxu0
      %3344 = vmatprep.mubr.f32.mxu0 0.0
      %3345 = vmatmul.mubr.f32.gmra.mxu0 %v2638
      %v3346 = vpop.f32.mrf.mxu0
      %v3347 = vadd.f32 %v3034, %v3346
      %v3348 = vpop.f32.mrf.mxu0
      %3349 = vmatprep.mubr.f32.mxu0 0.0
      %3350 = vmatmul.mubr.f32.gmra.mxu0 %v2643
      %v3351 = vpop.f32.mrf.mxu0
      %v3352 = vadd.f32 %v3034, %v3351
      %v3353 = vpop.f32.mrf.mxu0
      %3354 = vmatprep.mubr.f32.mxu0 0.0
      %3355 = vmatmul.mubr.f32.gmra.mxu0 %v2648
      %v3356 = vpop.f32.mrf.mxu0
      %v3357 = vadd.f32 %v3034, %v3356
      %v3358 = vpop.f32.mrf.mxu0
      %3359 = vmatprep.mubr.f32.mxu0 0.0
      %3360 = vmatmul.mubr.f32.gmra.mxu0 %v2653
      %v3361 = vpop.f32.mrf.mxu0
      %v3362 = vadd.f32 %v3034, %v3361
      %v3363 = vpop.f32.mrf.mxu0
      %3364 = vmatprep.mubr.f32.mxu0 0.0
      %3365 = vmatmul.mubr.f32.gmra.mxu0 %v2658
      %v3366 = vpop.f32.mrf.mxu0
      %v3367 = vadd.f32 %v3034, %v3366
      %v3368 = vpop.f32.mrf.mxu0
      %3369 = vmatprep.mubr.f32.mxu0 0.0
      %3370 = vmatmul.mubr.f32.gmra.mxu0 %v2663
      %v3371 = vpop.f32.mrf.mxu0
      %v3372 = vadd.f32 %v3034, %v3371
      %v3373 = vpop.f32.mrf.mxu0
      %3374 = vmatprep.mubr.f32.mxu0 0.0
      %3375 = vmatmul.mubr.f32.gmra.mxu0 %v2668
      %v3376 = vpop.f32.mrf.mxu0
      %v3377 = vadd.f32 %v3034, %v3376
      %v3378 = vpop.f32.mrf.mxu0
      %3379 = vmatprep.mubr.f32.mxu0 0.0
      %3380 = vmatmul.mubr.f32.gmra.mxu0 %v2673
      %v3381 = vpop.f32.mrf.mxu0
      %v3382 = vadd.f32 %v3034, %v3381
      %v3383 = vpop.f32.mrf.mxu0
      %3384 = vmatprep.mubr.f32.mxu0 0.0
      %3385 = vmatmul.mubr.f32.gmra.mxu0 %v2678
      %v3386 = vpop.f32.mrf.mxu0
      %v3387 = vadd.f32 %v3034, %v3386
      %v3388 = vpop.f32.mrf.mxu0
      %3389 = vmatprep.mubr.f32.mxu0 0.0
      %3390 = vmatmul.mubr.f32.gmra.mxu0 %v2683
      %v3391 = vpop.f32.mrf.mxu0
      %v3392 = vadd.f32 %v3034, %v3391
      %v3393 = vpop.f32.mrf.mxu0
      %3394 = vmatprep.mubr.f32.mxu0 0.0
      %3395 = vmatmul.mubr.f32.gmra.mxu0 %v2688
      %v3396 = vpop.f32.mrf.mxu0
      %v3397 = vadd.f32 %v3034, %v3396
      %v3398 = vpop.f32.mrf.mxu0
      %3399 = vmatprep.mubr.f32.mxu0 0.0
      %3400 = vmatmul.mubr.f32.gmra.mxu0 %v2693
      %v3401 = vpop.f32.mrf.mxu0
      %v3402 = vadd.f32 %v3034, %v3401
      %v3403 = vpop.f32.mrf.mxu0
      %3404 = vmatprep.mubr.f32.mxu0 0.0
      %3405 = vmatmul.mubr.f32.gmra.mxu0 %v2698
      %v3406 = vpop.f32.mrf.mxu0
      %v3407 = vadd.f32 %v3034, %v3406
      %v3408 = vpop.f32.mrf.mxu0
      %3409 = vmatprep.mubr.f32.mxu0 0.0
      %3410 = vmatmul.mubr.f32.gmra.mxu0 %v2703
      %v3411 = vpop.f32.mrf.mxu0
      %v3412 = vadd.f32 %v3034, %v3411
      %v3413 = vpop.f32.mrf.mxu0
      %3414 = vmatprep.mubr.f32.mxu0 0.0
      %3415 = vmatmul.mubr.f32.gmra.mxu0 %v2708
      %v3416 = vpop.f32.mrf.mxu0
      %v3417 = vadd.f32 %v3034, %v3416
      %v3418 = vpop.f32.mrf.mxu0
      %3419 = vmatprep.mubr.f32.mxu0 0.0
      %3420 = vmatmul.mubr.f32.gmra.mxu0 %v2713
      %v3421 = vpop.f32.mrf.mxu0
      %v3422 = vadd.f32 %v3034, %v3421
      %v3423 = vpop.f32.mrf.mxu0
      %3424 = vmatprep.mubr.f32.mxu0 0.0
      %3425 = vmatmul.mubr.f32.gmra.mxu0 %v2718
      %v3426 = vpop.f32.mrf.mxu0
      %v3427 = vadd.f32 %v3034, %v3426
      %v3428 = vpop.f32.mrf.mxu0
      %3429 = vmatprep.mubr.f32.mxu0 0.0
      %3430 = vmatmul.mubr.f32.gmra.mxu0 %v2723
      %v3431 = vpop.f32.mrf.mxu0
      %v3432 = vadd.f32 %v3034, %v3431
      %v3433 = vpop.f32.mrf.mxu0
      %3434 = vmatprep.mubr.f32.mxu0 0.0
      %3435 = vmatmul.mubr.f32.gmra.mxu0 %v2728
      %v3436 = vpop.f32.mrf.mxu0
      %v3437 = vadd.f32 %v3034, %v3436
      %v3438 = vpop.f32.mrf.mxu0
      %3439 = vmatprep.mubr.f32.mxu0 0.0
      %3440 = vmatmul.mubr.f32.gmra.mxu0 %v2733
      %v3441 = vpop.f32.mrf.mxu0
      %v3442 = vadd.f32 %v3034, %v3441
      %v3443 = vpop.f32.mrf.mxu0
      %3444 = vmatprep.mubr.f32.mxu0 0.0
      %3445 = vmatmul.mubr.f32.gmra.mxu0 %v2738
      %v3446 = vpop.f32.mrf.mxu0
      %v3447 = vadd.f32 %v3034, %v3446
      %v3448 = vpop.f32.mrf.mxu0
      %3449 = vmatprep.mubr.f32.mxu0 0.0
      %3450 = vmatmul.mubr.f32.gmra.mxu0 %v2743
      %v3451 = vpop.f32.mrf.mxu0
      %v3452 = vadd.f32 %v3034, %v3451
      %v3453 = vpop.f32.mrf.mxu0
      %3454 = vmatprep.mubr.f32.mxu0 0.0
      %3455 = vmatmul.mubr.f32.gmra.mxu0 %v2748
      %v3456 = vpop.f32.mrf.mxu0
      %v3457 = vadd.f32 %v3034, %v3456
      %v3458 = vpop.f32.mrf.mxu0
      %3459 = vmatprep.mubr.f32.mxu0 0.0
      %3460 = vmatmul.mubr.f32.gmra.mxu0 %v2753
      %v3461 = vpop.f32.mrf.mxu0
      %v3462 = vadd.f32 %v3034, %v3461
      %v3463 = vpop.f32.mrf.mxu0
      %3464 = vmatprep.mubr.f32.mxu0 0.0
      %3465 = vmatmul.mubr.f32.gmra.mxu0 %v2758
      %v3466 = vpop.f32.mrf.mxu0
      %v3467 = vadd.f32 %v3034, %v3466
      %v3468 = vpop.f32.mrf.mxu0
      %3469 = vmatprep.mubr.f32.mxu0 0.0
      %3470 = vmatmul.mubr.f32.gmra.mxu0 %v2763
      %v3471 = vpop.f32.mrf.mxu0
      %v3472 = vadd.f32 %v3034, %v3471
      %v3473 = vpop.f32.mrf.mxu0
      %3474 = vmatprep.mubr.f32.mxu0 0.0
      %3475 = vmatmul.mubr.f32.gmra.mxu0 %v2768
      %v3476 = vpop.f32.mrf.mxu0
      %v3477 = vadd.f32 %v3034, %v3476
      %v3478 = vpop.f32.mrf.mxu0
      %3479 = vmatprep.mubr.f32.mxu0 0.0
      %3480 = vmatmul.mubr.f32.gmra.mxu0 %v2773
      %v3481 = vpop.f32.mrf.mxu0
      %v3482 = vadd.f32 %v3034, %v3481
      %v3483 = vpop.f32.mrf.mxu0
      %3484 = vmatprep.mubr.f32.mxu0 0.0
      %3485 = vmatmul.mubr.f32.gmra.mxu0 %v2778
      %v3486 = vpop.f32.mrf.mxu0
      %v3487 = vadd.f32 %v3034, %v3486
      %v3488 = vpop.f32.mrf.mxu0
      %3489 = vmatprep.mubr.f32.mxu0 0.0
      %3490 = vmatmul.mubr.f32.gmra.mxu0 %v2783
      %v3491 = vpop.f32.mrf.mxu0
      %v3492 = vadd.f32 %v3034, %v3491
      %v3493 = vpop.f32.mrf.mxu0
      %3494 = vmatprep.mubr.f32.mxu0 0.0
      %3495 = vmatmul.mubr.f32.gmra.mxu0 %v2788
      %v3496 = vpop.f32.mrf.mxu0
      %v3497 = vadd.f32 %v3034, %v3496
      %v3498 = vpop.f32.mrf.mxu0
      %3499 = vmatprep.mubr.f32.mxu0 0.0
      %3500 = vmatmul.mubr.f32.gmra.mxu0 %v2793
      %v3501 = vpop.f32.mrf.mxu0
      %v3502 = vadd.f32 %v3034, %v3501
      %v3503 = vpop.f32.mrf.mxu0
      %3504 = vmatprep.mubr.f32.mxu0 0.0
      %3505 = vmatmul.mubr.f32.gmra.mxu0 %v2798
      %v3506 = vpop.f32.mrf.mxu0
      %v3507 = vadd.f32 %v3034, %v3506
      %v3508 = vpop.f32.mrf.mxu0
      %3509 = vmatprep.mubr.f32.mxu0 0.0
      %3510 = vmatmul.mubr.f32.gmra.mxu0 %v2803
      %v3511 = vpop.f32.mrf.mxu0
      %v3512 = vadd.f32 %v3034, %v3511
      %v3513 = vpop.f32.mrf.mxu0
      %3514 = vmatprep.mubr.f32.mxu0 0.0
      %3515 = vmatmul.mubr.f32.gmra.mxu0 %v2808
      %v3516 = vpop.f32.mrf.mxu0
      %v3517 = vadd.f32 %v3034, %v3516
      %v3518 = vpop.f32.mrf.mxu0
      %3519 = vmatprep.mubr.f32.mxu0 0.0
      %3520 = vmatmul.mubr.f32.gmra.mxu0 %v2813
      %v3521 = vpop.f32.mrf.mxu0
      %v3522 = vadd.f32 %v3034, %v3521
      %v3523 = vpop.f32.mrf.mxu0
      %3524 = vmatprep.mubr.f32.mxu0 0.0
      %3525 = vmatmul.mubr.f32.gmra.mxu0 %v2818
      %v3526 = vpop.f32.mrf.mxu0
      %v3527 = vadd.f32 %v3034, %v3526
      %v3528 = vpop.f32.mrf.mxu0
      %3529 = vmatprep.mubr.f32.mxu0 0.0
      %3530 = vmatmul.mubr.f32.gmra.mxu0 %v2823
      %v3531 = vpop.f32.mrf.mxu0
      %v3532 = vadd.f32 %v3034, %v3531
      %v3533 = vpop.f32.mrf.mxu0
      %3534 = vmatprep.mubr.f32.mxu0 0.0
      %3535 = vmatmul.mubr.f32.gmra.mxu0 %v2828
      %v3536 = vpop.f32.mrf.mxu0
      %v3537 = vadd.f32 %v3034, %v3536
      %v3538 = vpop.f32.mrf.mxu0
      %3539 = vmatprep.mubr.f32.mxu0 0.0
      %3540 = vmatmul.mubr.f32.gmra.mxu0 %v2833
      %v3541 = vpop.f32.mrf.mxu0
      %v3542 = vadd.f32 %v3034, %v3541
      %v3543 = vpop.f32.mrf.mxu0
      %3544 = vmatprep.mubr.f32.mxu0 0.0
      %3545 = vmatmul.mubr.f32.gmra.mxu0 %v2838
      %v3546 = vpop.f32.mrf.mxu0
      %v3547 = vadd.f32 %v3034, %v3546
      %v3548 = vpop.f32.mrf.mxu0
      %3549 = vmatprep.mubr.f32.mxu0 0.0
      %3550 = vmatmul.mubr.f32.gmra.mxu0 %v2843
      %v3551 = vpop.f32.mrf.mxu0
      %v3552 = vadd.f32 %v3034, %v3551
      %v3553 = vpop.f32.mrf.mxu0
      %3554 = vmatprep.mubr.f32.mxu0 0.0
      %3555 = vmatmul.mubr.f32.gmra.mxu0 %v2848
      %v3556 = vpop.f32.mrf.mxu0
      %v3557 = vadd.f32 %v3034, %v3556
      %v3558 = vpop.f32.mrf.mxu0
      %3559 = vmatprep.mubr.f32.mxu0 0.0
      %3560 = vmatmul.mubr.f32.gmra.mxu0 %v2853
      %v3561 = vpop.f32.mrf.mxu0
      %v3562 = vadd.f32 %v3034, %v3561
      %v3563 = vpop.f32.mrf.mxu0
      %3564 = vmatprep.mubr.f32.mxu0 0.0
      %3565 = vmatmul.mubr.f32.gmra.mxu0 %v2858
      %v3566 = vpop.f32.mrf.mxu0
      %v3567 = vadd.f32 %v3034, %v3566
      %v3568 = vpop.f32.mrf.mxu0
      %3569 = vmatprep.mubr.f32.mxu0 0.0
      %3570 = vmatmul.mubr.f32.gmra.mxu0 %v2863
      %v3571 = vpop.f32.mrf.mxu0
      %v3572 = vadd.f32 %v3034, %v3571
      %v3573 = vpop.f32.mrf.mxu0
      %3574 = vmatprep.mubr.f32.mxu0 0.0
      %3575 = vmatmul.mubr.f32.gmra.mxu0 %v2868
      %v3576 = vpop.f32.mrf.mxu0
      %v3577 = vadd.f32 %v3034, %v3576
      %v3578 = vpop.f32.mrf.mxu0
      %3579 = vmatprep.mubr.f32.mxu0 0.0
      %3580 = vmatmul.mubr.f32.gmra.mxu0 %v2873
      %v3581 = vpop.f32.mrf.mxu0
      %v3582 = vadd.f32 %v3034, %v3581
      %v3583 = vpop.f32.mrf.mxu0
      %3584 = vmatprep.mubr.f32.mxu0 0.0
      %3585 = vmatmul.mubr.f32.gmra.mxu0 %v2878
      %v3586 = vpop.f32.mrf.mxu0
      %v3587 = vadd.f32 %v3034, %v3586
      %v3588 = vpop.f32.mrf.mxu0
      %3589 = vmatprep.mubr.f32.mxu0 0.0
      %3590 = vmatmul.mubr.f32.gmra.mxu0 %v2883
      %v3591 = vpop.f32.mrf.mxu0
      %v3592 = vadd.f32 %v3034, %v3591
      %v3593 = vpop.f32.mrf.mxu0
      %3594 = vmatprep.mubr.f32.mxu0 0.0
      %3595 = vmatmul.mubr.f32.gmra.mxu0 %v2888
      %v3596 = vpop.f32.mrf.mxu0
      %v3597 = vadd.f32 %v3034, %v3596
      %v3598 = vpop.f32.mrf.mxu0
      %3599 = vmatprep.mubr.f32.mxu0 0.0
      %3600 = vmatmul.mubr.f32.gmra.mxu0 %v2893
      %v3601 = vpop.f32.mrf.mxu0
      %v3602 = vadd.f32 %v3034, %v3601
      %v3603 = vpop.f32.mrf.mxu0
      %3604 = vmatprep.mubr.f32.mxu0 0.0
      %3605 = vmatmul.mubr.f32.gmra.mxu0 %v2898
      %v3606 = vpop.f32.mrf.mxu0
      %v3607 = vadd.f32 %v3034, %v3606
      %v3608 = vpop.f32.mrf.mxu0
      %3609 = vmatprep.mubr.f32.mxu0 0.0
      %3610 = vmatmul.mubr.f32.gmra.mxu0 %v2903
      %v3611 = vpop.f32.mrf.mxu0
      %v3612 = vadd.f32 %v3034, %v3611
      %v3613 = vpop.f32.mrf.mxu0
      %3614 = vmatprep.mubr.f32.mxu0 0.0
      %3615 = vmatmul.mubr.f32.gmra.mxu0 %v2908
      %v3616 = vpop.f32.mrf.mxu0
      %v3617 = vadd.f32 %v3034, %v3616
      %v3618 = vpop.f32.mrf.mxu0
      %3619 = vmatprep.mubr.f32.mxu0 0.0
      %3620 = vmatmul.mubr.f32.gmra.mxu0 %v2913
      %v3621 = vpop.f32.mrf.mxu0
      %v3622 = vadd.f32 %v3034, %v3621
      %v3623 = vpop.f32.mrf.mxu0
      %3624 = vmatprep.mubr.f32.mxu0 0.0
      %3625 = vmatmul.mubr.f32.gmra.mxu0 %v2918
      %v3626 = vpop.f32.mrf.mxu0
      %v3627 = vadd.f32 %v3034, %v3626
      %v3628 = vpop.f32.mrf.mxu0
      %3629 = vmatprep.mubr.f32.mxu0 0.0
      %3630 = vmatmul.mubr.f32.gmra.mxu0 %v2923
      %v3631 = vpop.f32.mrf.mxu0
      %v3632 = vadd.f32 %v3034, %v3631
      %v3633 = vpop.f32.mrf.mxu0
      %3634 = vmatprep.mubr.f32.mxu0 0.0
      %3635 = vmatmul.mubr.f32.gmra.mxu0 %v2928
      %v3636 = vpop.f32.mrf.mxu0
      %v3637 = vadd.f32 %v3034, %v3636
      %v3638 = vpop.f32.mrf.mxu0
      %3639 = vmatprep.mubr.f32.mxu0 0.0
      %3640 = vmatmul.mubr.f32.gmra.mxu0 %v2933
      %v3641 = vpop.f32.mrf.mxu0
      %v3642 = vadd.f32 %v3034, %v3641
      %v3643 = vpop.f32.mrf.mxu0
      %3644 = vmatprep.mubr.f32.mxu0 0.0
      %3645 = vmatmul.mubr.f32.gmra.mxu0 %v2938
      %v3646 = vpop.f32.mrf.mxu0
      %v3647 = vadd.f32 %v3034, %v3646
      %v3648 = vpop.f32.mrf.mxu0
      %3649 = vmatprep.mubr.f32.mxu0 0.0
      %3650 = vmatmul.mubr.f32.gmra.mxu0 %v2943
      %v3651 = vpop.f32.mrf.mxu0
      %v3652 = vadd.f32 %v3034, %v3651
      %v3653 = vpop.f32.mrf.mxu0
      %3654 = vmatprep.mubr.f32.mxu0 0.0
      %3655 = vmatmul.mubr.f32.gmra.mxu0 %v2948
      %v3656 = vpop.f32.mrf.mxu0
      %v3657 = vadd.f32 %v3034, %v3656
      %v3658 = vpop.f32.mrf.mxu0
      %3659 = vmatprep.mubr.f32.mxu0 0.0
      %3660 = vmatmul.mubr.f32.gmra.mxu0 %v2953
      %v3661 = vpop.f32.mrf.mxu0
      %v3662 = vadd.f32 %v3034, %v3661
      %v3663 = vpop.f32.mrf.mxu0
      %3664 = vmatprep.mubr.f32.mxu0 0.0
      %3665 = vmatmul.mubr.f32.gmra.mxu0 %v2958
      %v3666 = vpop.f32.mrf.mxu0
      %v3667 = vadd.f32 %v3034, %v3666
      %v3668 = vpop.f32.mrf.mxu0
      %3669 = vmatprep.mubr.f32.mxu0 0.0
      %3670 = vmatmul.mubr.f32.gmra.mxu0 %v2963
      %v3671 = vpop.f32.mrf.mxu0
      %v3672 = vadd.f32 %v3034, %v3671
      %v3673 = vpop.f32.mrf.mxu0
      %3674 = vmatprep.mubr.f32.mxu0 0.0
      %3675 = vmatmul.mubr.f32.gmra.mxu0 %v2968
      %v3676 = vpop.f32.mrf.mxu0
      %v3677 = vadd.f32 %v3034, %v3676
      %v3678 = vpop.f32.mrf.mxu0
      %3679 = vmatprep.mubr.f32.mxu0 0.0
      %3680 = vmatmul.mubr.f32.gmra.mxu0 %v2973
      %v3681 = vpop.f32.mrf.mxu0
      %v3682 = vadd.f32 %v3034, %v3681
      %v3683 = vpop.f32.mrf.mxu0
      %3684 = vmatprep.mubr.f32.mxu0 0.0
      %3685 = vmatmul.mubr.f32.gmra.mxu0 %v2978
      %v3686 = vpop.f32.mrf.mxu0
      %v3687 = vadd.f32 %v3034, %v3686
      %v3688 = vpop.f32.mrf.mxu0
      %3689 = vmatprep.mubr.f32.mxu0 0.0
      %3690 = vmatmul.mubr.f32.gmra.mxu0 %v2983
      %v3691 = vpop.f32.mrf.mxu0
      %v3692 = vadd.f32 %v3034, %v3691
      %v3693 = vpop.f32.mrf.mxu0
      %3694 = vmatprep.mubr.f32.mxu0 0.0
      %3695 = vmatmul.mubr.f32.gmra.mxu0 %v2988
      %v3696 = vpop.f32.mrf.mxu0
      %v3697 = vadd.f32 %v3034, %v3696
      %v3698 = vpop.f32.mrf.mxu0
      %3699 = vmatprep.mubr.f32.mxu0 0.0
      %3700 = vmatmul.mubr.f32.gmra.mxu0 %v2993
      %v3701 = vpop.f32.mrf.mxu0
      %v3702 = vadd.f32 %v3034, %v3701
      %v3703 = vpop.f32.mrf.mxu0
      %3704 = vmatprep.mubr.f32.mxu0 0.0
      %3705 = vmatmul.mubr.f32.gmra.mxu0 %v2998
      %v3706 = vpop.f32.mrf.mxu0
      %v3707 = vadd.f32 %v3034, %v3706
      %v3708 = vpop.f32.mrf.mxu0
      %3709 = vmatprep.mubr.f32.mxu0 0.0
      %3710 = vmatmul.mubr.f32.gmra.mxu0 %v3003
      %v3711 = vpop.f32.mrf.mxu0
      %v3712 = vadd.f32 %v3034, %v3711
      %v3713 = vpop.f32.mrf.mxu0
      %3714 = vmatprep.mubr.f32.mxu0 0.0
      %3715 = vmatmul.mubr.f32.gmra.mxu0 %v3008
      %v3716 = vpop.f32.mrf.mxu0
      %v3717 = vadd.f32 %v3034, %v3716
      %v3718 = vpop.f32.mrf.mxu0
      %3719 = vmatprep.mubr.f32.mxu0 0.0
      %3720 = vmatmul.mubr.f32.gmra.mxu0 %v3013
      %v3721 = vpop.f32.mrf.mxu0
      %v3722 = vadd.f32 %v3034, %v3721
      %v3723 = vpop.f32.mrf.mxu0
      %3724 = vmatprep.mubr.f32.mxu0 0.0
      %3725 = vmatmul.mubr.f32.gmra.mxu0 %v3018
      %v3726 = vpop.f32.mrf.mxu0
      %v3727 = vadd.f32 %v3034, %v3726
      %v3728 = vpop.f32.mrf.mxu0
      %3729 = vmatprep.mubr.f32.mxu0 0.0
      %3730 = vmatmul.mubr.f32.gmra.mxu0 %v3023
      %v3731 = vpop.f32.mrf.mxu0
      %v3732 = vadd.f32 %v3034, %v3731
      %v3733 = vpop.f32.mrf.mxu0
      %3734 = vmatprep.mubr.f32.mxu0 0.0
      %3735 = vmatmul.mubr.f32.gmra.mxu0 %v3028
      %v3736 = vpop.f32.mrf.mxu0
      %v3737 = vadd.f32 %v3034, %v3736
      %v3738 = vpop.f32.mrf.mxu0
      %3739 = vdwg.mxu0
      %v3740 = vmax.f32 %v3102, 0.0
      %v3741 = vmax.f32 %v3107, 0.0
      %v3742 = vmax.f32 %v3112, 0.0
      %v3743 = vmax.f32 %v3117, 0.0
      %v3744 = vmax.f32 %v3122, 0.0
      %v3745 = vmax.f32 %v3127, 0.0
      %v3746 = vmax.f32 %v3132, 0.0
      %v3747 = vmax.f32 %v3137, 0.0
      %v3748 = vmax.f32 %v3142, 0.0
      %v3749 = vmax.f32 %v3147, 0.0
      %v3750 = vmax.f32 %v3152, 0.0
      %v3751 = vmax.f32 %v3157, 0.0
      %v3752 = vmax.f32 %v3162, 0.0
      %v3753 = vmax.f32 %v3167, 0.0
      %v3754 = vmax.f32 %v3172, 0.0
      %v3755 = vmax.f32 %v3177, 0.0
      %v3756 = vmax.f32 %v3182, 0.0
      %v3757 = vmax.f32 %v3187, 0.0
      %v3758 = vmax.f32 %v3192, 0.0
      %v3759 = vmax.f32 %v3197, 0.0
      %v3760 = vmax.f32 %v3202, 0.0
      %v3761 = vmax.f32 %v3207, 0.0
      %v3762 = vmax.f32 %v3212, 0.0
      %v3763 = vmax.f32 %v3217, 0.0
      %v3764 = vmax.f32 %v3222, 0.0
      %v3765 = vmax.f32 %v3227, 0.0
      %v3766 = vmax.f32 %v3232, 0.0
      %v3767 = vmax.f32 %v3237, 0.0
      %v3768 = vmax.f32 %v3242, 0.0
      %v3769 = vmax.f32 %v3247, 0.0
      %v3770 = vmax.f32 %v3252, 0.0
      %v3771 = vmax.f32 %v3257, 0.0
      %v3772 = vmax.f32 %v3262, 0.0
      %v3773 = vmax.f32 %v3267, 0.0
      %v3774 = vmax.f32 %v3272, 0.0
      %v3775 = vmax.f32 %v3277, 0.0
      %v3776 = vmax.f32 %v3282, 0.0
      %v3777 = vmax.f32 %v3287, 0.0
      %v3778 = vmax.f32 %v3292, 0.0
      %v3779 = vmax.f32 %v3297, 0.0
      %v3780 = vmax.f32 %v3302, 0.0
      %v3781 = vmax.f32 %v3307, 0.0
      %v3782 = vmax.f32 %v3312, 0.0
      %v3783 = vmax.f32 %v3317, 0.0
      %v3784 = vmax.f32 %v3322, 0.0
      %v3785 = vmax.f32 %v3327, 0.0
      %v3786 = vmax.f32 %v3332, 0.0
      %v3787 = vmax.f32 %v3337, 0.0
      %v3788 = vmax.f32 %v3342, 0.0
      %v3789 = vmax.f32 %v3347, 0.0
      %v3790 = vmax.f32 %v3352, 0.0
      %v3791 = vmax.f32 %v3357, 0.0
      %v3792 = vmax.f32 %v3362, 0.0
      %v3793 = vmax.f32 %v3367, 0.0
      %v3794 = vmax.f32 %v3372, 0.0
      %v3795 = vmax.f32 %v3377, 0.0
      %v3796 = vmax.f32 %v3382, 0.0
      %v3797 = vmax.f32 %v3387, 0.0
      %v3798 = vmax.f32 %v3392, 0.0
      %v3799 = vmax.f32 %v3397, 0.0
      %v3800 = vmax.f32 %v3402, 0.0
      %v3801 = vmax.f32 %v3407, 0.0
      %v3802 = vmax.f32 %v3412, 0.0
      %v3803 = vmax.f32 %v3417, 0.0
      %v3804 = vmax.f32 %v3422, 0.0
      %v3805 = vmax.f32 %v3427, 0.0
      %v3806 = vmax.f32 %v3432, 0.0
      %v3807 = vmax.f32 %v3437, 0.0
      %v3808 = vmax.f32 %v3442, 0.0
      %v3809 = vmax.f32 %v3447, 0.0
      %v3810 = vmax.f32 %v3452, 0.0
      %v3811 = vmax.f32 %v3457, 0.0
      %v3812 = vmax.f32 %v3462, 0.0
      %v3813 = vmax.f32 %v3467, 0.0
      %v3814 = vmax.f32 %v3472, 0.0
      %v3815 = vmax.f32 %v3477, 0.0
      %v3816 = vmax.f32 %v3482, 0.0
      %v3817 = vmax.f32 %v3487, 0.0
      %v3818 = vmax.f32 %v3492, 0.0
      %v3819 = vmax.f32 %v3497, 0.0
      %v3820 = vmax.f32 %v3502, 0.0
      %v3821 = vmax.f32 %v3507, 0.0
      %v3822 = vmax.f32 %v3512, 0.0
      %v3823 = vmax.f32 %v3517, 0.0
      %v3824 = vmax.f32 %v3522, 0.0
      %v3825 = vmax.f32 %v3527, 0.0
      %v3826 = vmax.f32 %v3532, 0.0
      %v3827 = vmax.f32 %v3537, 0.0
      %v3828 = vmax.f32 %v3542, 0.0
      %v3829 = vmax.f32 %v3547, 0.0
      %v3830 = vmax.f32 %v3552, 0.0
      %v3831 = vmax.f32 %v3557, 0.0
      %v3832 = vmax.f32 %v3562, 0.0
      %v3833 = vmax.f32 %v3567, 0.0
      %v3834 = vmax.f32 %v3572, 0.0
      %v3835 = vmax.f32 %v3577, 0.0
      %v3836 = vmax.f32 %v3582, 0.0
      %v3837 = vmax.f32 %v3587, 0.0
      %v3838 = vmax.f32 %v3592, 0.0
      %v3839 = vmax.f32 %v3597, 0.0
      %v3840 = vmax.f32 %v3602, 0.0
      %v3841 = vmax.f32 %v3607, 0.0
      %v3842 = vmax.f32 %v3612, 0.0
      %v3843 = vmax.f32 %v3617, 0.0
      %v3844 = vmax.f32 %v3622, 0.0
      %v3845 = vmax.f32 %v3627, 0.0
      %v3846 = vmax.f32 %v3632, 0.0
      %v3847 = vmax.f32 %v3637, 0.0
      %v3848 = vmax.f32 %v3642, 0.0
      %v3849 = vmax.f32 %v3647, 0.0
      %v3850 = vmax.f32 %v3652, 0.0
      %v3851 = vmax.f32 %v3657, 0.0
      %v3852 = vmax.f32 %v3662, 0.0
      %v3853 = vmax.f32 %v3667, 0.0
      %v3854 = vmax.f32 %v3672, 0.0
      %v3855 = vmax.f32 %v3677, 0.0
      %v3856 = vmax.f32 %v3682, 0.0
      %v3857 = vmax.f32 %v3687, 0.0
      %v3858 = vmax.f32 %v3692, 0.0
      %v3859 = vmax.f32 %v3697, 0.0
      %v3860 = vmax.f32 %v3702, 0.0
      %v3861 = vmax.f32 %v3707, 0.0
      %v3862 = vmax.f32 %v3712, 0.0
      %v3863 = vmax.f32 %v3717, 0.0
      %v3864 = vmax.f32 %v3722, 0.0
      %v3865 = vmax.f32 %v3727, 0.0
      %v3866 = vmax.f32 %v3732, 0.0
      %v3867 = vmax.f32 %v3737, 0.0
      %v3868 = vlaneseq
      %v3869 = vshrl.u32 %v3868, 7
      %v3870 = vsub.s32 3, %v3869
      %v3871 = vrot.slane %v331, %v3870
      %3872 = vmatprep.subr.mxu0 0.0
      %3873 = vmatpush1.msra.mxu0 %v330
      %3874 = vmatprep.subr.mxu0 0.0
      %3875 = vmatpush1.msra.mxu0 %v329
      %3876 = vmatprep.subr.mxu0 0.0
      %3877 = vmatpush1.msra.mxu0 %v328
      %3878 = vmatprep.subr.mxu0 0.0
      %3879 = vmatpush1.msra.mxu0 %v327
      %3880 = vmatprep.subr.mxu0 0.0
      %3881 = vmatpush1.msra.mxu0 %v326
      %3882 = vmatprep.subr.mxu0 0.0
      %3883 = vmatpush1.msra.mxu0 %v325
      %3884 = vmatprep.subr.mxu0 0.0
      %3885 = vmatpush1.msra.mxu0 %v324
      %3886 = vmatprep.subr.mxu0 0.0
      %3887 = vmatpush1.msra.mxu0 %v323
      %3888 = vmatprep.subr.mxu0 0.0
      %3889 = vmatpush1.msra.mxu0 %v322
      %3890 = vmatprep.subr.mxu0 0.0
      %3891 = vmatpush1.msra.mxu0 %v321
      %3892 = vmatprep.subr.mxu0 0.0
      %3893 = vmatpush1.msra.mxu0 %v320
      %3894 = vmatprep.subr.mxu0 0.0
      %3895 = vmatpush1.msra.mxu0 %v319
      %3896 = vmatprep.subr.mxu0 0.0
      %3897 = vmatpush1.msra.mxu0 %v318
      %3898 = vmatprep.subr.mxu0 0.0
      %3899 = vmatpush1.msra.mxu0 %v317
      %3900 = vmatprep.subr.mxu0 0.0
      %3901 = vmatpush1.msra.mxu0 %v316
      %3902 = vmatprep.subr.mxu0 0.0
      %3903 = vmatpush1.msra.mxu0 %v315
      %3904 = vmatprep.subr.mxu0 0.0
      %3905 = vmatpush2.msra.mxu0 0.0
      %3906 = vmatprep.subr.mxu0 0.0
      %3907 = vmatpush2.msra.mxu0 0.0
      %3908 = vmatprep.subr.mxu0 0.0
      %3909 = vmatpush2.msra.mxu0 0.0
      %3910 = vmatprep.subr.mxu0 0.0
      %3911 = vmatpush2.msra.mxu0 0.0
      %3912 = vmatprep.subr.mxu0 0.0
      %3913 = vmatpush2.msra.mxu0 0.0
      %3914 = vmatprep.subr.mxu0 0.0
      %3915 = vmatpush2.msra.mxu0 0.0
      %3916 = vmatprep.subr.mxu0 0.0
      %3917 = vmatpush2.msra.mxu0 0.0
      %3918 = vmatprep.subr.mxu0 0.0
      %3919 = vmatpush2.msra.mxu0 0.0
      %3920 = vmatprep.subr.mxu0 0.0
      %3921 = vmatpush2.msra.mxu0 0.0
      %3922 = vmatprep.subr.mxu0 0.0
      %3923 = vmatpush2.msra.mxu0 0.0
      %3924 = vmatprep.subr.mxu0 0.0
      %3925 = vmatpush2.msra.mxu0 0.0
      %3926 = vmatprep.subr.mxu0 0.0
      %3927 = vmatpush2.msra.mxu0 0.0
      %3928 = vmatprep.subr.mxu0 0.0
      %3929 = vmatpush2.msra.mxu0 0.0
      %3930 = vmatprep.subr.mxu0 0.0
      %3931 = vmatpush2.msra.mxu0 0.0
      %3932 = vmatprep.subr.mxu0 0.0
      %3933 = vmatpush2.msra.mxu0 0.0
      %3934 = vmatprep.subr.mxu0 0.0
      %3935 = vmatpush2.msra.mxu0 0.0
      %3936 = vmatprep.mubr.f32.mxu0 0.0
      %3937 = vmatmul.mubr.f32.gmra.mxu0 %v3740
      %v3938 = vpop.f32.mrf.mxu0
      %v3939 = vadd.f32 %v3871, %v3938
      %v3940 = vpop.f32.mrf.mxu0
      %3941 = vmatprep.mubr.f32.mxu0 0.0
      %3942 = vmatmul.mubr.f32.gmra.mxu0 %v3741
      %v3943 = vpop.f32.mrf.mxu0
      %v3944 = vadd.f32 %v3871, %v3943
      %v3945 = vpop.f32.mrf.mxu0
      %3946 = vmatprep.mubr.f32.mxu0 0.0
      %3947 = vmatmul.mubr.f32.gmra.mxu0 %v3742
      %v3948 = vpop.f32.mrf.mxu0
      %v3949 = vadd.f32 %v3871, %v3948
      %v3950 = vpop.f32.mrf.mxu0
      %3951 = vmatprep.mubr.f32.mxu0 0.0
      %3952 = vmatmul.mubr.f32.gmra.mxu0 %v3743
      %v3953 = vpop.f32.mrf.mxu0
      %v3954 = vadd.f32 %v3871, %v3953
      %v3955 = vpop.f32.mrf.mxu0
      %3956 = vmatprep.mubr.f32.mxu0 0.0
      %3957 = vmatmul.mubr.f32.gmra.mxu0 %v3744
      %v3958 = vpop.f32.mrf.mxu0
      %v3959 = vadd.f32 %v3871, %v3958
      %v3960 = vpop.f32.mrf.mxu0
      %3961 = vmatprep.mubr.f32.mxu0 0.0
      %3962 = vmatmul.mubr.f32.gmra.mxu0 %v3745
      %v3963 = vpop.f32.mrf.mxu0
      %v3964 = vadd.f32 %v3871, %v3963
      %v3965 = vpop.f32.mrf.mxu0
      %3966 = vmatprep.mubr.f32.mxu0 0.0
      %3967 = vmatmul.mubr.f32.gmra.mxu0 %v3746
      %v3968 = vpop.f32.mrf.mxu0
      %v3969 = vadd.f32 %v3871, %v3968
      %v3970 = vpop.f32.mrf.mxu0
      %3971 = vmatprep.mubr.f32.mxu0 0.0
      %3972 = vmatmul.mubr.f32.gmra.mxu0 %v3747
      %v3973 = vpop.f32.mrf.mxu0
      %v3974 = vadd.f32 %v3871, %v3973
      %v3975 = vpop.f32.mrf.mxu0
      %3976 = vmatprep.mubr.f32.mxu0 0.0
      %3977 = vmatmul.mubr.f32.gmra.mxu0 %v3748
      %v3978 = vpop.f32.mrf.mxu0
      %v3979 = vadd.f32 %v3871, %v3978
      %v3980 = vpop.f32.mrf.mxu0
      %3981 = vmatprep.mubr.f32.mxu0 0.0
      %3982 = vmatmul.mubr.f32.gmra.mxu0 %v3749
      %v3983 = vpop.f32.mrf.mxu0
      %v3984 = vadd.f32 %v3871, %v3983
      %v3985 = vpop.f32.mrf.mxu0
      %3986 = vmatprep.mubr.f32.mxu0 0.0
      %3987 = vmatmul.mubr.f32.gmra.mxu0 %v3750
      %v3988 = vpop.f32.mrf.mxu0
      %v3989 = vadd.f32 %v3871, %v3988
      %v3990 = vpop.f32.mrf.mxu0
      %3991 = vmatprep.mubr.f32.mxu0 0.0
      %3992 = vmatmul.mubr.f32.gmra.mxu0 %v3751
      %v3993 = vpop.f32.mrf.mxu0
      %v3994 = vadd.f32 %v3871, %v3993
      %v3995 = vpop.f32.mrf.mxu0
      %3996 = vmatprep.mubr.f32.mxu0 0.0
      %3997 = vmatmul.mubr.f32.gmra.mxu0 %v3752
      %v3998 = vpop.f32.mrf.mxu0
      %v3999 = vadd.f32 %v3871, %v3998
      %v4000 = vpop.f32.mrf.mxu0
      %4001 = vmatprep.mubr.f32.mxu0 0.0
      %4002 = vmatmul.mubr.f32.gmra.mxu0 %v3753
      %v4003 = vpop.f32.mrf.mxu0
      %v4004 = vadd.f32 %v3871, %v4003
      %v4005 = vpop.f32.mrf.mxu0
      %4006 = vmatprep.mubr.f32.mxu0 0.0
      %4007 = vmatmul.mubr.f32.gmra.mxu0 %v3754
      %v4008 = vpop.f32.mrf.mxu0
      %v4009 = vadd.f32 %v3871, %v4008
      %v4010 = vpop.f32.mrf.mxu0
      %4011 = vmatprep.mubr.f32.mxu0 0.0
      %4012 = vmatmul.mubr.f32.gmra.mxu0 %v3755
      %v4013 = vpop.f32.mrf.mxu0
      %v4014 = vadd.f32 %v3871, %v4013
      %v4015 = vpop.f32.mrf.mxu0
      %4016 = vmatprep.mubr.f32.mxu0 0.0
      %4017 = vmatmul.mubr.f32.gmra.mxu0 %v3756
      %v4018 = vpop.f32.mrf.mxu0
      %v4019 = vadd.f32 %v3871, %v4018
      %v4020 = vpop.f32.mrf.mxu0
      %4021 = vmatprep.mubr.f32.mxu0 0.0
      %4022 = vmatmul.mubr.f32.gmra.mxu0 %v3757
      %v4023 = vpop.f32.mrf.mxu0
      %v4024 = vadd.f32 %v3871, %v4023
      %v4025 = vpop.f32.mrf.mxu0
      %4026 = vmatprep.mubr.f32.mxu0 0.0
      %4027 = vmatmul.mubr.f32.gmra.mxu0 %v3758
      %v4028 = vpop.f32.mrf.mxu0
      %v4029 = vadd.f32 %v3871, %v4028
      %v4030 = vpop.f32.mrf.mxu0
      %4031 = vmatprep.mubr.f32.mxu0 0.0
      %4032 = vmatmul.mubr.f32.gmra.mxu0 %v3759
      %v4033 = vpop.f32.mrf.mxu0
      %v4034 = vadd.f32 %v3871, %v4033
      %v4035 = vpop.f32.mrf.mxu0
      %4036 = vmatprep.mubr.f32.mxu0 0.0
      %4037 = vmatmul.mubr.f32.gmra.mxu0 %v3760
      %v4038 = vpop.f32.mrf.mxu0
      %v4039 = vadd.f32 %v3871, %v4038
      %v4040 = vpop.f32.mrf.mxu0
      %4041 = vmatprep.mubr.f32.mxu0 0.0
      %4042 = vmatmul.mubr.f32.gmra.mxu0 %v3761
      %v4043 = vpop.f32.mrf.mxu0
      %v4044 = vadd.f32 %v3871, %v4043
      %v4045 = vpop.f32.mrf.mxu0
      %4046 = vmatprep.mubr.f32.mxu0 0.0
      %4047 = vmatmul.mubr.f32.gmra.mxu0 %v3762
      %v4048 = vpop.f32.mrf.mxu0
      %v4049 = vadd.f32 %v3871, %v4048
      %v4050 = vpop.f32.mrf.mxu0
      %4051 = vmatprep.mubr.f32.mxu0 0.0
      %4052 = vmatmul.mubr.f32.gmra.mxu0 %v3763
      %v4053 = vpop.f32.mrf.mxu0
      %v4054 = vadd.f32 %v3871, %v4053
      %v4055 = vpop.f32.mrf.mxu0
      %4056 = vmatprep.mubr.f32.mxu0 0.0
      %4057 = vmatmul.mubr.f32.gmra.mxu0 %v3764
      %v4058 = vpop.f32.mrf.mxu0
      %v4059 = vadd.f32 %v3871, %v4058
      %v4060 = vpop.f32.mrf.mxu0
      %4061 = vmatprep.mubr.f32.mxu0 0.0
      %4062 = vmatmul.mubr.f32.gmra.mxu0 %v3765
      %v4063 = vpop.f32.mrf.mxu0
      %v4064 = vadd.f32 %v3871, %v4063
      %v4065 = vpop.f32.mrf.mxu0
      %4066 = vmatprep.mubr.f32.mxu0 0.0
      %4067 = vmatmul.mubr.f32.gmra.mxu0 %v3766
      %v4068 = vpop.f32.mrf.mxu0
      %v4069 = vadd.f32 %v3871, %v4068
      %v4070 = vpop.f32.mrf.mxu0
      %4071 = vmatprep.mubr.f32.mxu0 0.0
      %4072 = vmatmul.mubr.f32.gmra.mxu0 %v3767
      %v4073 = vpop.f32.mrf.mxu0
      %v4074 = vadd.f32 %v3871, %v4073
      %v4075 = vpop.f32.mrf.mxu0
      %4076 = vmatprep.mubr.f32.mxu0 0.0
      %4077 = vmatmul.mubr.f32.gmra.mxu0 %v3768
      %v4078 = vpop.f32.mrf.mxu0
      %v4079 = vadd.f32 %v3871, %v4078
      %v4080 = vpop.f32.mrf.mxu0
      %4081 = vmatprep.mubr.f32.mxu0 0.0
      %4082 = vmatmul.mubr.f32.gmra.mxu0 %v3769
      %v4083 = vpop.f32.mrf.mxu0
      %v4084 = vadd.f32 %v3871, %v4083
      %v4085 = vpop.f32.mrf.mxu0
      %4086 = vmatprep.mubr.f32.mxu0 0.0
      %4087 = vmatmul.mubr.f32.gmra.mxu0 %v3770
      %v4088 = vpop.f32.mrf.mxu0
      %v4089 = vadd.f32 %v3871, %v4088
      %v4090 = vpop.f32.mrf.mxu0
      %4091 = vmatprep.mubr.f32.mxu0 0.0
      %4092 = vmatmul.mubr.f32.gmra.mxu0 %v3771
      %v4093 = vpop.f32.mrf.mxu0
      %v4094 = vadd.f32 %v3871, %v4093
      %v4095 = vpop.f32.mrf.mxu0
      %4096 = vmatprep.mubr.f32.mxu0 0.0
      %4097 = vmatmul.mubr.f32.gmra.mxu0 %v3772
      %v4098 = vpop.f32.mrf.mxu0
      %v4099 = vadd.f32 %v3871, %v4098
      %v4100 = vpop.f32.mrf.mxu0
      %4101 = vmatprep.mubr.f32.mxu0 0.0
      %4102 = vmatmul.mubr.f32.gmra.mxu0 %v3773
      %v4103 = vpop.f32.mrf.mxu0
      %v4104 = vadd.f32 %v3871, %v4103
      %v4105 = vpop.f32.mrf.mxu0
      %4106 = vmatprep.mubr.f32.mxu0 0.0
      %4107 = vmatmul.mubr.f32.gmra.mxu0 %v3774
      %v4108 = vpop.f32.mrf.mxu0
      %v4109 = vadd.f32 %v3871, %v4108
      %v4110 = vpop.f32.mrf.mxu0
      %4111 = vmatprep.mubr.f32.mxu0 0.0
      %4112 = vmatmul.mubr.f32.gmra.mxu0 %v3775
      %v4113 = vpop.f32.mrf.mxu0
      %v4114 = vadd.f32 %v3871, %v4113
      %v4115 = vpop.f32.mrf.mxu0
      %4116 = vmatprep.mubr.f32.mxu0 0.0
      %4117 = vmatmul.mubr.f32.gmra.mxu0 %v3776
      %v4118 = vpop.f32.mrf.mxu0
      %v4119 = vadd.f32 %v3871, %v4118
      %v4120 = vpop.f32.mrf.mxu0
      %4121 = vmatprep.mubr.f32.mxu0 0.0
      %4122 = vmatmul.mubr.f32.gmra.mxu0 %v3777
      %v4123 = vpop.f32.mrf.mxu0
      %v4124 = vadd.f32 %v3871, %v4123
      %v4125 = vpop.f32.mrf.mxu0
      %4126 = vmatprep.mubr.f32.mxu0 0.0
      %4127 = vmatmul.mubr.f32.gmra.mxu0 %v3778
      %v4128 = vpop.f32.mrf.mxu0
      %v4129 = vadd.f32 %v3871, %v4128
      %v4130 = vpop.f32.mrf.mxu0
      %4131 = vmatprep.mubr.f32.mxu0 0.0
      %4132 = vmatmul.mubr.f32.gmra.mxu0 %v3779
      %v4133 = vpop.f32.mrf.mxu0
      %v4134 = vadd.f32 %v3871, %v4133
      %v4135 = vpop.f32.mrf.mxu0
      %4136 = vmatprep.mubr.f32.mxu0 0.0
      %4137 = vmatmul.mubr.f32.gmra.mxu0 %v3780
      %v4138 = vpop.f32.mrf.mxu0
      %v4139 = vadd.f32 %v3871, %v4138
      %v4140 = vpop.f32.mrf.mxu0
      %4141 = vmatprep.mubr.f32.mxu0 0.0
      %4142 = vmatmul.mubr.f32.gmra.mxu0 %v3781
      %v4143 = vpop.f32.mrf.mxu0
      %v4144 = vadd.f32 %v3871, %v4143
      %v4145 = vpop.f32.mrf.mxu0
      %4146 = vmatprep.mubr.f32.mxu0 0.0
      %4147 = vmatmul.mubr.f32.gmra.mxu0 %v3782
      %v4148 = vpop.f32.mrf.mxu0
      %v4149 = vadd.f32 %v3871, %v4148
      %v4150 = vpop.f32.mrf.mxu0
      %4151 = vmatprep.mubr.f32.mxu0 0.0
      %4152 = vmatmul.mubr.f32.gmra.mxu0 %v3783
      %v4153 = vpop.f32.mrf.mxu0
      %v4154 = vadd.f32 %v3871, %v4153
      %v4155 = vpop.f32.mrf.mxu0
      %4156 = vmatprep.mubr.f32.mxu0 0.0
      %4157 = vmatmul.mubr.f32.gmra.mxu0 %v3784
      %v4158 = vpop.f32.mrf.mxu0
      %v4159 = vadd.f32 %v3871, %v4158
      %v4160 = vpop.f32.mrf.mxu0
      %4161 = vmatprep.mubr.f32.mxu0 0.0
      %4162 = vmatmul.mubr.f32.gmra.mxu0 %v3785
      %v4163 = vpop.f32.mrf.mxu0
      %v4164 = vadd.f32 %v3871, %v4163
      %v4165 = vpop.f32.mrf.mxu0
      %4166 = vmatprep.mubr.f32.mxu0 0.0
      %4167 = vmatmul.mubr.f32.gmra.mxu0 %v3786
      %v4168 = vpop.f32.mrf.mxu0
      %v4169 = vadd.f32 %v3871, %v4168
      %v4170 = vpop.f32.mrf.mxu0
      %4171 = vmatprep.mubr.f32.mxu0 0.0
      %4172 = vmatmul.mubr.f32.gmra.mxu0 %v3787
      %v4173 = vpop.f32.mrf.mxu0
      %v4174 = vadd.f32 %v3871, %v4173
      %v4175 = vpop.f32.mrf.mxu0
      %4176 = vmatprep.mubr.f32.mxu0 0.0
      %4177 = vmatmul.mubr.f32.gmra.mxu0 %v3788
      %v4178 = vpop.f32.mrf.mxu0
      %v4179 = vadd.f32 %v3871, %v4178
      %v4180 = vpop.f32.mrf.mxu0
      %4181 = vmatprep.mubr.f32.mxu0 0.0
      %4182 = vmatmul.mubr.f32.gmra.mxu0 %v3789
      %v4183 = vpop.f32.mrf.mxu0
      %v4184 = vadd.f32 %v3871, %v4183
      %v4185 = vpop.f32.mrf.mxu0
      %4186 = vmatprep.mubr.f32.mxu0 0.0
      %4187 = vmatmul.mubr.f32.gmra.mxu0 %v3790
      %v4188 = vpop.f32.mrf.mxu0
      %v4189 = vadd.f32 %v3871, %v4188
      %v4190 = vpop.f32.mrf.mxu0
      %4191 = vmatprep.mubr.f32.mxu0 0.0
      %4192 = vmatmul.mubr.f32.gmra.mxu0 %v3791
      %v4193 = vpop.f32.mrf.mxu0
      %v4194 = vadd.f32 %v3871, %v4193
      %v4195 = vpop.f32.mrf.mxu0
      %4196 = vmatprep.mubr.f32.mxu0 0.0
      %4197 = vmatmul.mubr.f32.gmra.mxu0 %v3792
      %v4198 = vpop.f32.mrf.mxu0
      %v4199 = vadd.f32 %v3871, %v4198
      %v4200 = vpop.f32.mrf.mxu0
      %4201 = vmatprep.mubr.f32.mxu0 0.0
      %4202 = vmatmul.mubr.f32.gmra.mxu0 %v3793
      %v4203 = vpop.f32.mrf.mxu0
      %v4204 = vadd.f32 %v3871, %v4203
      %v4205 = vpop.f32.mrf.mxu0
      %4206 = vmatprep.mubr.f32.mxu0 0.0
      %4207 = vmatmul.mubr.f32.gmra.mxu0 %v3794
      %v4208 = vpop.f32.mrf.mxu0
      %v4209 = vadd.f32 %v3871, %v4208
      %v4210 = vpop.f32.mrf.mxu0
      %4211 = vmatprep.mubr.f32.mxu0 0.0
      %4212 = vmatmul.mubr.f32.gmra.mxu0 %v3795
      %v4213 = vpop.f32.mrf.mxu0
      %v4214 = vadd.f32 %v3871, %v4213
      %v4215 = vpop.f32.mrf.mxu0
      %4216 = vmatprep.mubr.f32.mxu0 0.0
      %4217 = vmatmul.mubr.f32.gmra.mxu0 %v3796
      %v4218 = vpop.f32.mrf.mxu0
      %v4219 = vadd.f32 %v3871, %v4218
      %v4220 = vpop.f32.mrf.mxu0
      %4221 = vmatprep.mubr.f32.mxu0 0.0
      %4222 = vmatmul.mubr.f32.gmra.mxu0 %v3797
      %v4223 = vpop.f32.mrf.mxu0
      %v4224 = vadd.f32 %v3871, %v4223
      %v4225 = vpop.f32.mrf.mxu0
      %4226 = vmatprep.mubr.f32.mxu0 0.0
      %4227 = vmatmul.mubr.f32.gmra.mxu0 %v3798
      %v4228 = vpop.f32.mrf.mxu0
      %v4229 = vadd.f32 %v3871, %v4228
      %v4230 = vpop.f32.mrf.mxu0
      %4231 = vmatprep.mubr.f32.mxu0 0.0
      %4232 = vmatmul.mubr.f32.gmra.mxu0 %v3799
      %v4233 = vpop.f32.mrf.mxu0
      %v4234 = vadd.f32 %v3871, %v4233
      %v4235 = vpop.f32.mrf.mxu0
      %4236 = vmatprep.mubr.f32.mxu0 0.0
      %4237 = vmatmul.mubr.f32.gmra.mxu0 %v3800
      %v4238 = vpop.f32.mrf.mxu0
      %v4239 = vadd.f32 %v3871, %v4238
      %v4240 = vpop.f32.mrf.mxu0
      %4241 = vmatprep.mubr.f32.mxu0 0.0
      %4242 = vmatmul.mubr.f32.gmra.mxu0 %v3801
      %v4243 = vpop.f32.mrf.mxu0
      %v4244 = vadd.f32 %v3871, %v4243
      %v4245 = vpop.f32.mrf.mxu0
      %4246 = vmatprep.mubr.f32.mxu0 0.0
      %4247 = vmatmul.mubr.f32.gmra.mxu0 %v3802
      %v4248 = vpop.f32.mrf.mxu0
      %v4249 = vadd.f32 %v3871, %v4248
      %v4250 = vpop.f32.mrf.mxu0
      %4251 = vmatprep.mubr.f32.mxu0 0.0
      %4252 = vmatmul.mubr.f32.gmra.mxu0 %v3803
      %v4253 = vpop.f32.mrf.mxu0
      %v4254 = vadd.f32 %v3871, %v4253
      %v4255 = vpop.f32.mrf.mxu0
      %4256 = vmatprep.mubr.f32.mxu0 0.0
      %4257 = vmatmul.mubr.f32.gmra.mxu0 %v3804
      %v4258 = vpop.f32.mrf.mxu0
      %v4259 = vadd.f32 %v3871, %v4258
      %v4260 = vpop.f32.mrf.mxu0
      %4261 = vmatprep.mubr.f32.mxu0 0.0
      %4262 = vmatmul.mubr.f32.gmra.mxu0 %v3805
      %v4263 = vpop.f32.mrf.mxu0
      %v4264 = vadd.f32 %v3871, %v4263
      %v4265 = vpop.f32.mrf.mxu0
      %4266 = vmatprep.mubr.f32.mxu0 0.0
      %4267 = vmatmul.mubr.f32.gmra.mxu0 %v3806
      %v4268 = vpop.f32.mrf.mxu0
      %v4269 = vadd.f32 %v3871, %v4268
      %v4270 = vpop.f32.mrf.mxu0
      %4271 = vmatprep.mubr.f32.mxu0 0.0
      %4272 = vmatmul.mubr.f32.gmra.mxu0 %v3807
      %v4273 = vpop.f32.mrf.mxu0
      %v4274 = vadd.f32 %v3871, %v4273
      %v4275 = vpop.f32.mrf.mxu0
      %4276 = vmatprep.mubr.f32.mxu0 0.0
      %4277 = vmatmul.mubr.f32.gmra.mxu0 %v3808
      %v4278 = vpop.f32.mrf.mxu0
      %v4279 = vadd.f32 %v3871, %v4278
      %v4280 = vpop.f32.mrf.mxu0
      %4281 = vmatprep.mubr.f32.mxu0 0.0
      %4282 = vmatmul.mubr.f32.gmra.mxu0 %v3809
      %v4283 = vpop.f32.mrf.mxu0
      %v4284 = vadd.f32 %v3871, %v4283
      %v4285 = vpop.f32.mrf.mxu0
      %4286 = vmatprep.mubr.f32.mxu0 0.0
      %4287 = vmatmul.mubr.f32.gmra.mxu0 %v3810
      %v4288 = vpop.f32.mrf.mxu0
      %v4289 = vadd.f32 %v3871, %v4288
      %v4290 = vpop.f32.mrf.mxu0
      %4291 = vmatprep.mubr.f32.mxu0 0.0
      %4292 = vmatmul.mubr.f32.gmra.mxu0 %v3811
      %v4293 = vpop.f32.mrf.mxu0
      %v4294 = vadd.f32 %v3871, %v4293
      %v4295 = vpop.f32.mrf.mxu0
      %4296 = vmatprep.mubr.f32.mxu0 0.0
      %4297 = vmatmul.mubr.f32.gmra.mxu0 %v3812
      %v4298 = vpop.f32.mrf.mxu0
      %v4299 = vadd.f32 %v3871, %v4298
      %v4300 = vpop.f32.mrf.mxu0
      %4301 = vmatprep.mubr.f32.mxu0 0.0
      %4302 = vmatmul.mubr.f32.gmra.mxu0 %v3813
      %v4303 = vpop.f32.mrf.mxu0
      %v4304 = vadd.f32 %v3871, %v4303
      %v4305 = vpop.f32.mrf.mxu0
      %4306 = vmatprep.mubr.f32.mxu0 0.0
      %4307 = vmatmul.mubr.f32.gmra.mxu0 %v3814
      %v4308 = vpop.f32.mrf.mxu0
      %v4309 = vadd.f32 %v3871, %v4308
      %v4310 = vpop.f32.mrf.mxu0
      %4311 = vmatprep.mubr.f32.mxu0 0.0
      %4312 = vmatmul.mubr.f32.gmra.mxu0 %v3815
      %v4313 = vpop.f32.mrf.mxu0
      %v4314 = vadd.f32 %v3871, %v4313
      %v4315 = vpop.f32.mrf.mxu0
      %4316 = vmatprep.mubr.f32.mxu0 0.0
      %4317 = vmatmul.mubr.f32.gmra.mxu0 %v3816
      %v4318 = vpop.f32.mrf.mxu0
      %v4319 = vadd.f32 %v3871, %v4318
      %v4320 = vpop.f32.mrf.mxu0
      %4321 = vmatprep.mubr.f32.mxu0 0.0
      %4322 = vmatmul.mubr.f32.gmra.mxu0 %v3817
      %v4323 = vpop.f32.mrf.mxu0
      %v4324 = vadd.f32 %v3871, %v4323
      %v4325 = vpop.f32.mrf.mxu0
      %4326 = vmatprep.mubr.f32.mxu0 0.0
      %4327 = vmatmul.mubr.f32.gmra.mxu0 %v3818
      %v4328 = vpop.f32.mrf.mxu0
      %v4329 = vadd.f32 %v3871, %v4328
      %v4330 = vpop.f32.mrf.mxu0
      %4331 = vmatprep.mubr.f32.mxu0 0.0
      %4332 = vmatmul.mubr.f32.gmra.mxu0 %v3819
      %v4333 = vpop.f32.mrf.mxu0
      %v4334 = vadd.f32 %v3871, %v4333
      %v4335 = vpop.f32.mrf.mxu0
      %4336 = vmatprep.mubr.f32.mxu0 0.0
      %4337 = vmatmul.mubr.f32.gmra.mxu0 %v3820
      %v4338 = vpop.f32.mrf.mxu0
      %v4339 = vadd.f32 %v3871, %v4338
      %v4340 = vpop.f32.mrf.mxu0
      %4341 = vmatprep.mubr.f32.mxu0 0.0
      %4342 = vmatmul.mubr.f32.gmra.mxu0 %v3821
      %v4343 = vpop.f32.mrf.mxu0
      %v4344 = vadd.f32 %v3871, %v4343
      %v4345 = vpop.f32.mrf.mxu0
      %4346 = vmatprep.mubr.f32.mxu0 0.0
      %4347 = vmatmul.mubr.f32.gmra.mxu0 %v3822
      %v4348 = vpop.f32.mrf.mxu0
      %v4349 = vadd.f32 %v3871, %v4348
      %v4350 = vpop.f32.mrf.mxu0
      %4351 = vmatprep.mubr.f32.mxu0 0.0
      %4352 = vmatmul.mubr.f32.gmra.mxu0 %v3823
      %v4353 = vpop.f32.mrf.mxu0
      %v4354 = vadd.f32 %v3871, %v4353
      %v4355 = vpop.f32.mrf.mxu0
      %4356 = vmatprep.mubr.f32.mxu0 0.0
      %4357 = vmatmul.mubr.f32.gmra.mxu0 %v3824
      %v4358 = vpop.f32.mrf.mxu0
      %v4359 = vadd.f32 %v3871, %v4358
      %v4360 = vpop.f32.mrf.mxu0
      %4361 = vmatprep.mubr.f32.mxu0 0.0
      %4362 = vmatmul.mubr.f32.gmra.mxu0 %v3825
      %v4363 = vpop.f32.mrf.mxu0
      %v4364 = vadd.f32 %v3871, %v4363
      %v4365 = vpop.f32.mrf.mxu0
      %4366 = vmatprep.mubr.f32.mxu0 0.0
      %4367 = vmatmul.mubr.f32.gmra.mxu0 %v3826
      %v4368 = vpop.f32.mrf.mxu0
      %v4369 = vadd.f32 %v3871, %v4368
      %v4370 = vpop.f32.mrf.mxu0
      %4371 = vmatprep.mubr.f32.mxu0 0.0
      %4372 = vmatmul.mubr.f32.gmra.mxu0 %v3827
      %v4373 = vpop.f32.mrf.mxu0
      %v4374 = vadd.f32 %v3871, %v4373
      %v4375 = vpop.f32.mrf.mxu0
      %4376 = vmatprep.mubr.f32.mxu0 0.0
      %4377 = vmatmul.mubr.f32.gmra.mxu0 %v3828
      %v4378 = vpop.f32.mrf.mxu0
      %v4379 = vadd.f32 %v3871, %v4378
      %v4380 = vpop.f32.mrf.mxu0
      %4381 = vmatprep.mubr.f32.mxu0 0.0
      %4382 = vmatmul.mubr.f32.gmra.mxu0 %v3829
      %v4383 = vpop.f32.mrf.mxu0
      %v4384 = vadd.f32 %v3871, %v4383
      %v4385 = vpop.f32.mrf.mxu0
      %4386 = vmatprep.mubr.f32.mxu0 0.0
      %4387 = vmatmul.mubr.f32.gmra.mxu0 %v3830
      %v4388 = vpop.f32.mrf.mxu0
      %v4389 = vadd.f32 %v3871, %v4388
      %v4390 = vpop.f32.mrf.mxu0
      %4391 = vmatprep.mubr.f32.mxu0 0.0
      %4392 = vmatmul.mubr.f32.gmra.mxu0 %v3831
      %v4393 = vpop.f32.mrf.mxu0
      %v4394 = vadd.f32 %v3871, %v4393
      %v4395 = vpop.f32.mrf.mxu0
      %4396 = vmatprep.mubr.f32.mxu0 0.0
      %4397 = vmatmul.mubr.f32.gmra.mxu0 %v3832
      %v4398 = vpop.f32.mrf.mxu0
      %v4399 = vadd.f32 %v3871, %v4398
      %v4400 = vpop.f32.mrf.mxu0
      %4401 = vmatprep.mubr.f32.mxu0 0.0
      %4402 = vmatmul.mubr.f32.gmra.mxu0 %v3833
      %v4403 = vpop.f32.mrf.mxu0
      %v4404 = vadd.f32 %v3871, %v4403
      %v4405 = vpop.f32.mrf.mxu0
      %4406 = vmatprep.mubr.f32.mxu0 0.0
      %4407 = vmatmul.mubr.f32.gmra.mxu0 %v3834
      %v4408 = vpop.f32.mrf.mxu0
      %v4409 = vadd.f32 %v3871, %v4408
      %v4410 = vpop.f32.mrf.mxu0
      %4411 = vmatprep.mubr.f32.mxu0 0.0
      %4412 = vmatmul.mubr.f32.gmra.mxu0 %v3835
      %v4413 = vpop.f32.mrf.mxu0
      %v4414 = vadd.f32 %v3871, %v4413
      %v4415 = vpop.f32.mrf.mxu0
      %4416 = vmatprep.mubr.f32.mxu0 0.0
      %4417 = vmatmul.mubr.f32.gmra.mxu0 %v3836
      %v4418 = vpop.f32.mrf.mxu0
      %v4419 = vadd.f32 %v3871, %v4418
      %v4420 = vpop.f32.mrf.mxu0
      %4421 = vmatprep.mubr.f32.mxu0 0.0
      %4422 = vmatmul.mubr.f32.gmra.mxu0 %v3837
      %v4423 = vpop.f32.mrf.mxu0
      %v4424 = vadd.f32 %v3871, %v4423
      %v4425 = vpop.f32.mrf.mxu0
      %4426 = vmatprep.mubr.f32.mxu0 0.0
      %4427 = vmatmul.mubr.f32.gmra.mxu0 %v3838
      %v4428 = vpop.f32.mrf.mxu0
      %v4429 = vadd.f32 %v3871, %v4428
      %v4430 = vpop.f32.mrf.mxu0
      %4431 = vmatprep.mubr.f32.mxu0 0.0
      %4432 = vmatmul.mubr.f32.gmra.mxu0 %v3839
      %v4433 = vpop.f32.mrf.mxu0
      %v4434 = vadd.f32 %v3871, %v4433
      %v4435 = vpop.f32.mrf.mxu0
      %4436 = vmatprep.mubr.f32.mxu0 0.0
      %4437 = vmatmul.mubr.f32.gmra.mxu0 %v3840
      %v4438 = vpop.f32.mrf.mxu0
      %v4439 = vadd.f32 %v3871, %v4438
      %v4440 = vpop.f32.mrf.mxu0
      %4441 = vmatprep.mubr.f32.mxu0 0.0
      %4442 = vmatmul.mubr.f32.gmra.mxu0 %v3841
      %v4443 = vpop.f32.mrf.mxu0
      %v4444 = vadd.f32 %v3871, %v4443
      %v4445 = vpop.f32.mrf.mxu0
      %4446 = vmatprep.mubr.f32.mxu0 0.0
      %4447 = vmatmul.mubr.f32.gmra.mxu0 %v3842
      %v4448 = vpop.f32.mrf.mxu0
      %v4449 = vadd.f32 %v3871, %v4448
      %v4450 = vpop.f32.mrf.mxu0
      %4451 = vmatprep.mubr.f32.mxu0 0.0
      %4452 = vmatmul.mubr.f32.gmra.mxu0 %v3843
      %v4453 = vpop.f32.mrf.mxu0
      %v4454 = vadd.f32 %v3871, %v4453
      %v4455 = vpop.f32.mrf.mxu0
      %4456 = vmatprep.mubr.f32.mxu0 0.0
      %4457 = vmatmul.mubr.f32.gmra.mxu0 %v3844
      %v4458 = vpop.f32.mrf.mxu0
      %v4459 = vadd.f32 %v3871, %v4458
      %v4460 = vpop.f32.mrf.mxu0
      %4461 = vmatprep.mubr.f32.mxu0 0.0
      %4462 = vmatmul.mubr.f32.gmra.mxu0 %v3845
      %v4463 = vpop.f32.mrf.mxu0
      %v4464 = vadd.f32 %v3871, %v4463
      %v4465 = vpop.f32.mrf.mxu0
      %4466 = vmatprep.mubr.f32.mxu0 0.0
      %4467 = vmatmul.mubr.f32.gmra.mxu0 %v3846
      %v4468 = vpop.f32.mrf.mxu0
      %v4469 = vadd.f32 %v3871, %v4468
      %v4470 = vpop.f32.mrf.mxu0
      %4471 = vmatprep.mubr.f32.mxu0 0.0
      %4472 = vmatmul.mubr.f32.gmra.mxu0 %v3847
      %v4473 = vpop.f32.mrf.mxu0
      %v4474 = vadd.f32 %v3871, %v4473
      %v4475 = vpop.f32.mrf.mxu0
      %4476 = vmatprep.mubr.f32.mxu0 0.0
      %4477 = vmatmul.mubr.f32.gmra.mxu0 %v3848
      %v4478 = vpop.f32.mrf.mxu0
      %v4479 = vadd.f32 %v3871, %v4478
      %v4480 = vpop.f32.mrf.mxu0
      %4481 = vmatprep.mubr.f32.mxu0 0.0
      %4482 = vmatmul.mubr.f32.gmra.mxu0 %v3849
      %v4483 = vpop.f32.mrf.mxu0
      %v4484 = vadd.f32 %v3871, %v4483
      %v4485 = vpop.f32.mrf.mxu0
      %4486 = vmatprep.mubr.f32.mxu0 0.0
      %4487 = vmatmul.mubr.f32.gmra.mxu0 %v3850
      %v4488 = vpop.f32.mrf.mxu0
      %v4489 = vadd.f32 %v3871, %v4488
      %v4490 = vpop.f32.mrf.mxu0
      %4491 = vmatprep.mubr.f32.mxu0 0.0
      %4492 = vmatmul.mubr.f32.gmra.mxu0 %v3851
      %v4493 = vpop.f32.mrf.mxu0
      %v4494 = vadd.f32 %v3871, %v4493
      %v4495 = vpop.f32.mrf.mxu0
      %4496 = vmatprep.mubr.f32.mxu0 0.0
      %4497 = vmatmul.mubr.f32.gmra.mxu0 %v3852
      %v4498 = vpop.f32.mrf.mxu0
      %v4499 = vadd.f32 %v3871, %v4498
      %v4500 = vpop.f32.mrf.mxu0
      %4501 = vmatprep.mubr.f32.mxu0 0.0
      %4502 = vmatmul.mubr.f32.gmra.mxu0 %v3853
      %v4503 = vpop.f32.mrf.mxu0
      %v4504 = vadd.f32 %v3871, %v4503
      %v4505 = vpop.f32.mrf.mxu0
      %4506 = vmatprep.mubr.f32.mxu0 0.0
      %4507 = vmatmul.mubr.f32.gmra.mxu0 %v3854
      %v4508 = vpop.f32.mrf.mxu0
      %v4509 = vadd.f32 %v3871, %v4508
      %v4510 = vpop.f32.mrf.mxu0
      %4511 = vmatprep.mubr.f32.mxu0 0.0
      %4512 = vmatmul.mubr.f32.gmra.mxu0 %v3855
      %v4513 = vpop.f32.mrf.mxu0
      %v4514 = vadd.f32 %v3871, %v4513
      %v4515 = vpop.f32.mrf.mxu0
      %4516 = vmatprep.mubr.f32.mxu0 0.0
      %4517 = vmatmul.mubr.f32.gmra.mxu0 %v3856
      %v4518 = vpop.f32.mrf.mxu0
      %v4519 = vadd.f32 %v3871, %v4518
      %v4520 = vpop.f32.mrf.mxu0
      %4521 = vmatprep.mubr.f32.mxu0 0.0
      %4522 = vmatmul.mubr.f32.gmra.mxu0 %v3857
      %v4523 = vpop.f32.mrf.mxu0
      %v4524 = vadd.f32 %v3871, %v4523
      %v4525 = vpop.f32.mrf.mxu0
      %4526 = vmatprep.mubr.f32.mxu0 0.0
      %4527 = vmatmul.mubr.f32.gmra.mxu0 %v3858
      %v4528 = vpop.f32.mrf.mxu0
      %v4529 = vadd.f32 %v3871, %v4528
      %v4530 = vpop.f32.mrf.mxu0
      %4531 = vmatprep.mubr.f32.mxu0 0.0
      %4532 = vmatmul.mubr.f32.gmra.mxu0 %v3859
      %v4533 = vpop.f32.mrf.mxu0
      %v4534 = vadd.f32 %v3871, %v4533
      %v4535 = vpop.f32.mrf.mxu0
      %4536 = vmatprep.mubr.f32.mxu0 0.0
      %4537 = vmatmul.mubr.f32.gmra.mxu0 %v3860
      %v4538 = vpop.f32.mrf.mxu0
      %v4539 = vadd.f32 %v3871, %v4538
      %v4540 = vpop.f32.mrf.mxu0
      %4541 = vmatprep.mubr.f32.mxu0 0.0
      %4542 = vmatmul.mubr.f32.gmra.mxu0 %v3861
      %v4543 = vpop.f32.mrf.mxu0
      %v4544 = vadd.f32 %v3871, %v4543
      %v4545 = vpop.f32.mrf.mxu0
      %4546 = vmatprep.mubr.f32.mxu0 0.0
      %4547 = vmatmul.mubr.f32.gmra.mxu0 %v3862
      %v4548 = vpop.f32.mrf.mxu0
      %v4549 = vadd.f32 %v3871, %v4548
      %v4550 = vpop.f32.mrf.mxu0
      %4551 = vmatprep.mubr.f32.mxu0 0.0
      %4552 = vmatmul.mubr.f32.gmra.mxu0 %v3863
      %v4553 = vpop.f32.mrf.mxu0
      %v4554 = vadd.f32 %v3871, %v4553
      %v4555 = vpop.f32.mrf.mxu0
      %4556 = vmatprep.mubr.f32.mxu0 0.0
      %4557 = vmatmul.mubr.f32.gmra.mxu0 %v3864
      %v4558 = vpop.f32.mrf.mxu0
      %v4559 = vadd.f32 %v3871, %v4558
      %v4560 = vpop.f32.mrf.mxu0
      %4561 = vmatprep.mubr.f32.mxu0 0.0
      %4562 = vmatmul.mubr.f32.gmra.mxu0 %v3865
      %v4563 = vpop.f32.mrf.mxu0
      %v4564 = vadd.f32 %v3871, %v4563
      %v4565 = vpop.f32.mrf.mxu0
      %4566 = vmatprep.mubr.f32.mxu0 0.0
      %4567 = vmatmul.mubr.f32.gmra.mxu0 %v3866
      %v4568 = vpop.f32.mrf.mxu0
      %v4569 = vadd.f32 %v3871, %v4568
      %v4570 = vpop.f32.mrf.mxu0
      %4571 = vmatprep.mubr.f32.mxu0 0.0
      %4572 = vmatmul.mubr.f32.gmra.mxu0 %v3867
      %v4573 = vpop.f32.mrf.mxu0
      %v4574 = vadd.f32 %v3871, %v4573
      %v4575 = vpop.f32.mrf.mxu0
      %4576 = vdwg.mxu0
      %4577 = vst [vmem:[%s145] sm:$0xff] %v3939
      %4578 = vst [vmem:[%s145 + $0x8] sm:$0xff] %v3944
      %4579 = vst [vmem:[%s145 + $0x10] sm:$0xff] %v3949
      %4580 = vst [vmem:[%s145 + $0x18] sm:$0xff] %v3954
      %4581 = vst [vmem:[%s145 + $0x20] sm:$0xff] %v3959
      %4582 = vst [vmem:[%s145 + $0x28] sm:$0xff] %v3964
      %4583 = vst [vmem:[%s145 + $0x30] sm:$0xff] %v3969
      %4584 = vst [vmem:[%s145 + $0x38] sm:$0xff] %v3974
      %4585 = vst [vmem:[%s145 + $0x40] sm:$0xff] %v3979
      %4586 = vst [vmem:[%s145 + $0x48] sm:$0xff] %v3984
      %4587 = vst [vmem:[%s145 + $0x50] sm:$0xff] %v3989
      %4588 = vst [vmem:[%s145 + $0x58] sm:$0xff] %v3994
      %4589 = vst [vmem:[%s145 + $0x60] sm:$0xff] %v3999
      %4590 = vst [vmem:[%s145 + $0x68] sm:$0xff] %v4004
      %4591 = vst [vmem:[%s145 + $0x70] sm:$0xff] %v4009
      %4592 = vst [vmem:[%s145 + $0x78] sm:$0xff] %v4014
      %4593 = vst [vmem:[%s145 + $0x80] sm:$0xff] %v4019
      %4594 = vst [vmem:[%s145 + $0x88] sm:$0xff] %v4024
      %4595 = vst [vmem:[%s145 + $0x90] sm:$0xff] %v4029
      %4596 = vst [vmem:[%s145 + $0x98] sm:$0xff] %v4034
      %4597 = vst [vmem:[%s145 + $0xa0] sm:$0xff] %v4039
      %4598 = vst [vmem:[%s145 + $0xa8] sm:$0xff] %v4044
      %4599 = vst [vmem:[%s145 + $0xb0] sm:$0xff] %v4049
      %4600 = vst [vmem:[%s145 + $0xb8] sm:$0xff] %v4054
      %4601 = vst [vmem:[%s145 + $0xc0] sm:$0xff] %v4059
      %4602 = vst [vmem:[%s145 + $0xc8] sm:$0xff] %v4064
      %4603 = vst [vmem:[%s145 + $0xd0] sm:$0xff] %v4069
      %4604 = vst [vmem:[%s145 + $0xd8] sm:$0xff] %v4074
      %4605 = vst [vmem:[%s145 + $0xe0] sm:$0xff] %v4079
      %4606 = vst [vmem:[%s145 + $0xe8] sm:$0xff] %v4084
      %4607 = vst [vmem:[%s145 + $0xf0] sm:$0xff] %v4089
      %4608 = vst [vmem:[%s145 + $0xf8] sm:$0xff] %v4094
      %4609 = vst [vmem:[%s145 + $0x100] sm:$0xff] %v4099
      %4610 = vst [vmem:[%s145 + $0x108] sm:$0xff] %v4104
      %4611 = vst [vmem:[%s145 + $0x110] sm:$0xff] %v4109
      %4612 = vst [vmem:[%s145 + $0x118] sm:$0xff] %v4114
      %4613 = vst [vmem:[%s145 + $0x120] sm:$0xff] %v4119
      %4614 = vst [vmem:[%s145 + $0x128] sm:$0xff] %v4124
      %4615 = vst [vmem:[%s145 + $0x130] sm:$0xff] %v4129
      %4616 = vst [vmem:[%s145 + $0x138] sm:$0xff] %v4134
      %4617 = vst [vmem:[%s145 + $0x140] sm:$0xff] %v4139
      %4618 = vst [vmem:[%s145 + $0x148] sm:$0xff] %v4144
      %4619 = vst [vmem:[%s145 + $0x150] sm:$0xff] %v4149
      %4620 = vst [vmem:[%s145 + $0x158] sm:$0xff] %v4154
      %4621 = vst [vmem:[%s145 + $0x160] sm:$0xff] %v4159
      %4622 = vst [vmem:[%s145 + $0x168] sm:$0xff] %v4164
      %4623 = vst [vmem:[%s145 + $0x170] sm:$0xff] %v4169
      %4624 = vst [vmem:[%s145 + $0x178] sm:$0xff] %v4174
      %4625 = vst [vmem:[%s145 + $0x180] sm:$0xff] %v4179
      %4626 = vst [vmem:[%s145 + $0x188] sm:$0xff] %v4184
      %4627 = vst [vmem:[%s145 + $0x190] sm:$0xff] %v4189
      %4628 = vst [vmem:[%s145 + $0x198] sm:$0xff] %v4194
      %4629 = vst [vmem:[%s145 + $0x1a0] sm:$0xff] %v4199
      %4630 = vst [vmem:[%s145 + $0x1a8] sm:$0xff] %v4204
      %4631 = vst [vmem:[%s145 + $0x1b0] sm:$0xff] %v4209
      %4632 = vst [vmem:[%s145 + $0x1b8] sm:$0xff] %v4214
      %4633 = vst [vmem:[%s145 + $0x1c0] sm:$0xff] %v4219
      %4634 = vst [vmem:[%s145 + $0x1c8] sm:$0xff] %v4224
      %4635 = vst [vmem:[%s145 + $0x1d0] sm:$0xff] %v4229
      %4636 = vst [vmem:[%s145 + $0x1d8] sm:$0xff] %v4234
      %4637 = vst [vmem:[%s145 + $0x1e0] sm:$0xff] %v4239
      %4638 = vst [vmem:[%s145 + $0x1e8] sm:$0xff] %v4244
      %4639 = vst [vmem:[%s145 + $0x1f0] sm:$0xff] %v4249
      %4640 = vst [vmem:[%s145 + $0x1f8] sm:$0xff] %v4254
      %4641 = vst [vmem:[%s145 + $0x200] sm:$0xff] %v4259
      %4642 = vst [vmem:[%s145 + $0x208] sm:$0xff] %v4264
      %4643 = vst [vmem:[%s145 + $0x210] sm:$0xff] %v4269
      %4644 = vst [vmem:[%s145 + $0x218] sm:$0xff] %v4274
      %4645 = vst [vmem:[%s145 + $0x220] sm:$0xff] %v4279
      %4646 = vst [vmem:[%s145 + $0x228] sm:$0xff] %v4284
      %4647 = vst [vmem:[%s145 + $0x230] sm:$0xff] %v4289
      %4648 = vst [vmem:[%s145 + $0x238] sm:$0xff] %v4294
      %4649 = vst [vmem:[%s145 + $0x240] sm:$0xff] %v4299
      %4650 = vst [vmem:[%s145 + $0x248] sm:$0xff] %v4304
      %4651 = vst [vmem:[%s145 + $0x250] sm:$0xff] %v4309
      %4652 = vst [vmem:[%s145 + $0x258] sm:$0xff] %v4314
      %4653 = vst [vmem:[%s145 + $0x260] sm:$0xff] %v4319
      %4654 = vst [vmem:[%s145 + $0x268] sm:$0xff] %v4324
      %4655 = vst [vmem:[%s145 + $0x270] sm:$0xff] %v4329
      %4656 = vst [vmem:[%s145 + $0x278] sm:$0xff] %v4334
      %4657 = vst [vmem:[%s145 + $0x280] sm:$0xff] %v4339
      %4658 = vst [vmem:[%s145 + $0x288] sm:$0xff] %v4344
      %4659 = vst [vmem:[%s145 + $0x290] sm:$0xff] %v4349
      %4660 = vst [vmem:[%s145 + $0x298] sm:$0xff] %v4354
      %4661 = vst [vmem:[%s145 + $0x2a0] sm:$0xff] %v4359
      %4662 = vst [vmem:[%s145 + $0x2a8] sm:$0xff] %v4364
      %4663 = vst [vmem:[%s145 + $0x2b0] sm:$0xff] %v4369
      %4664 = vst [vmem:[%s145 + $0x2b8] sm:$0xff] %v4374
      %4665 = vst [vmem:[%s145 + $0x2c0] sm:$0xff] %v4379
      %4666 = vst [vmem:[%s145 + $0x2c8] sm:$0xff] %v4384
      %4667 = vst [vmem:[%s145 + $0x2d0] sm:$0xff] %v4389
      %4668 = vst [vmem:[%s145 + $0x2d8] sm:$0xff] %v4394
      %4669 = vst [vmem:[%s145 + $0x2e0] sm:$0xff] %v4399
      %4670 = vst [vmem:[%s145 + $0x2e8] sm:$0xff] %v4404
      %4671 = vst [vmem:[%s145 + $0x2f0] sm:$0xff] %v4409
      %4672 = vst [vmem:[%s145 + $0x2f8] sm:$0xff] %v4414
      %4673 = vst [vmem:[%s145 + $0x300] sm:$0xff] %v4419
      %4674 = vst [vmem:[%s145 + $0x308] sm:$0xff] %v4424
      %4675 = vst [vmem:[%s145 + $0x310] sm:$0xff] %v4429
      %4676 = vst [vmem:[%s145 + $0x318] sm:$0xff] %v4434
      %4677 = vst [vmem:[%s145 + $0x320] sm:$0xff] %v4439
      %4678 = vst [vmem:[%s145 + $0x328] sm:$0xff] %v4444
      %4679 = vst [vmem:[%s145 + $0x330] sm:$0xff] %v4449
      %4680 = vst [vmem:[%s145 + $0x338] sm:$0xff] %v4454
      %4681 = vst [vmem:[%s145 + $0x340] sm:$0xff] %v4459
      %4682 = vst [vmem:[%s145 + $0x348] sm:$0xff] %v4464
      %4683 = vst [vmem:[%s145 + $0x350] sm:$0xff] %v4469
      %4684 = vst [vmem:[%s145 + $0x358] sm:$0xff] %v4474
      %4685 = vst [vmem:[%s145 + $0x360] sm:$0xff] %v4479
      %4686 = vst [vmem:[%s145 + $0x368] sm:$0xff] %v4484
      %4687 = vst [vmem:[%s145 + $0x370] sm:$0xff] %v4489
      %4688 = vst [vmem:[%s145 + $0x378] sm:$0xff] %v4494
      %4689 = vst [vmem:[%s145 + $0x380] sm:$0xff] %v4499
      %4690 = vst [vmem:[%s145 + $0x388] sm:$0xff] %v4504
      %4691 = vst [vmem:[%s145 + $0x390] sm:$0xff] %v4509
      %4692 = vst [vmem:[%s145 + $0x398] sm:$0xff] %v4514
      %4693 = vst [vmem:[%s145 + $0x3a0] sm:$0xff] %v4519
      %4694 = vst [vmem:[%s145 + $0x3a8] sm:$0xff] %v4524
      %4695 = vst [vmem:[%s145 + $0x3b0] sm:$0xff] %v4529
      %4696 = vst [vmem:[%s145 + $0x3b8] sm:$0xff] %v4534
      %4697 = vst [vmem:[%s145 + $0x3c0] sm:$0xff] %v4539
      %4698 = vst [vmem:[%s145 + $0x3c8] sm:$0xff] %v4544
      %4699 = vst [vmem:[%s145 + $0x3d0] sm:$0xff] %v4549
      %4700 = vst [vmem:[%s145 + $0x3d8] sm:$0xff] %v4554
      %4701 = vst [vmem:[%s145 + $0x3e0] sm:$0xff] %v4559
      %4702 = vst [vmem:[%s145 + $0x3e8] sm:$0xff] %v4564
      %4703 = vst [vmem:[%s145 + $0x3f0] sm:$0xff] %v4569
      %4704 = vst [vmem:[%s145 + $0x3f8] sm:$0xff] %v4574
      %s4705 = smul.u32 128, %s13
      %p4706 = scmp.lt.s32.totalorder %s4705, 255
      %s4707 = scalar_select %p4706, %s4705, 255
      %s4708 = smul.addr %s4707, 8
      %s4709 = scalar_lea.vmem %s2, %s4708
      // Predicated region
      $region29: #{gnn_inductive_node_head.1} parent=27 // pred_check
        %p4710 = pneg %p78
      $region30: #{gnn_inductive_node_head.1} parent=27 // pred_check_branch
        %4712 = sbr.rel (%p4710) target = $region32
      $region31: #{gnn_inductive_node_head.1} parent=27 // pred_region
        %s4713 = smul.u32 128, %s13
      $region32: #{gnn_inductive_node_head.1} parent=27 // pred_fallthru
        _
    $region28: #{gnn_inductive_node_head.1} parent=5 // pred_fallthru
      _
    %p4714 = scmp.le.s32.totalorder 2, %s8
    // Predicated region
    $region33: #{gnn_inductive_node_head.1} parent=5 // pred_check
      %p4715 = pneg %p4714
    $region34: #{gnn_inductive_node_head.1} parent=5 // pred_check_branch
      %4717 = sbr.rel (%p4715) target = $region36
    $region35: #{gnn_inductive_node_head.1} parent=5 // pred_region
      %s4718 = ssub.s32 %s8, 2
      // Predicated region
      $region37: #{gnn_inductive_node_head.1} parent=35 // pred_check
        %p4719 = pneg %p84
      $region38: #{gnn_inductive_node_head.1} parent=35 // pred_check_branch
        %4721 = sbr.rel (%p4719) target = $region40
      $region39: #{gnn_inductive_node_head.1} parent=35 // pred_region
        %s4722 = smul.u32 128, %s14
        %p4723 = scmp.lt.s32.totalorder %s4722, 255
        %s4724 = scalar_select %p4723, %s4722, 255
        %s4725 = smul.addr %s4724, 8
        %s4726 = scalar_lea.vmem %s2, %s4725
      $region40: #{gnn_inductive_node_head.1} parent=35 // pred_fallthru
        _
    $region36: #{gnn_inductive_node_head.1} parent=5 // pred_fallthru
      _
  $region6: #{gnn_inductive_node_head.1} parent=0 // loop_footer
    %s12 = sadd.s32 1, %s8
  $region7: #{gnn_inductive_node_head.1} parent=0 // loop_footer_branch
    %7 = sbr.rel target = $region3
  $region8: #{gnn_inductive_node_head.1} parent=0 // loop_exit
    _

</llo_original>
